<compile_context>
chip_gen: v6e
topology: v6e:2x2x1
jax: 0.10.0
libtpu: 0.0.40
codegen_flags: <defaults>
</compile_context>

<pallas_src>
import numpy as np

import jax
import jax.numpy as jnp
from jax.experimental import pallas as pl
from jax.experimental.pallas import tpu as pltpu


# ------------------------------ static shapes ------------------------------

N_IN_C, H_IN, W_IN = 3, 16, 16
C1_OUT, K1_H, K1_W = 6, 3, 4
H1, W1 = H_IN - K1_H + 1, W_IN - K1_W + 1          # 14, 13  (conv1 out)
HP1, WP1 = H1 // 2, W1 // 2                        # 7, 6    (pool1 out)
C2_OUT, K2, PAD2 = 16, 5, 1
H2 = HP1 + 2 * PAD2 - K2 + 1                       # 5       (conv2 out)
W2 = WP1 + 2 * PAD2 - K2 + 1                       # 4
HP2, WP2 = H2 // 2, W2 // 2                        # 2, 2    (pool2 out)
FC1, FC2, FC3 = 120, 84, 10

IN_LANES = H_IN * W_IN * N_IN_C                    # 768
P1_LANES = HP1 * WP1 * C1_OUT                      # 252
P2_LANES = HP2 * WP2 * C2_OUT                      # 64
POS = HP2 * WP2                                    # 4 spatial positions after pool2
FC3_PAD = 32                                       # per-position padded fc3 width
OUT_LANES = POS * FC3_PAD                          # 128 -> lane-dense output store

# Samples per grid step (multiple of 8).  128-256 fills the MXU rows on
# v5e/v6e/v7x; clipped to N for tiny batches.  VMEM/step stays < 10 MB.
BATCH_TILE = 256


# ------------------------------ fused kernel -------------------------------

def _cnn_fused_kernel(x_ref, w1_ref, b1_ref, w2_ref, b2_ref,
                      f1_ref, bf1_ref, f2_ref, bf2_ref, f3_ref, bf3_ref,
                      out_ref):
    f32 = jnp.float32
    x = x_ref[...]                                           # (B, 768)

    # conv1 + bias + ReLU + 2x2 maxpool.  The four pooling phases are column
    # subsets of the dense im2col conv1 matrix, so the stage is the max of
    # four deep-K matmuls (M=B, K=768) followed by one bias add + ReLU.
    a = jnp.dot(x, w1_ref[0], preferred_element_type=f32)
    for p in range(1, POS):
        a = jnp.maximum(a, jnp.dot(x, w1_ref[p], preferred_element_type=f32))
    p1 = jnp.maximum(a + b1_ref[...], 0.0)                   # (B, 252)

    # conv2 (pad=1 folded into the matrices) + bias + ReLU + 2x2 maxpool.
    a = jnp.dot(p1, w2_ref[0], preferred_element_type=f32)
    for p in range(1, POS):
        a = jnp.maximum(a, jnp.dot(p1, w2_ref[p], preferred_element_type=f32))
    p2 = jnp.maximum(a + b2_ref[...], 0.0)                   # (B, 64) = 4 pos x 16 ch

    # FC stack with dense shared weights applied per spatial position (M=B).
    # f1[pos] selects that position's 16 channels (zero rows elsewhere);
    # f3[pos] places its 10 outputs into a disjoint 32-lane group, so the
    # final result is a single lane-dense (B, 128) slab written with one store.
    acc = None
    for pos in range(POS):
        r = jnp.maximum(jnp.dot(p2, f1_ref[pos], preferred_element_type=f32)
                        + bf1_ref[...], 0.0)                 # (B, 120)
        r = jnp.maximum(jnp.dot(r, f2_ref[...], preferred_element_type=f32)
                        + bf2_ref[...], 0.0)                 # (B, 84)
        o = jnp.dot(r, f3_ref[pos], preferred_element_type=f32)  # (B, 128)
        acc = o if pos == 0 else acc + o
    out_ref[...] = acc + bf3_ref[...]                        # single dense store


# -------------------- one-time parameter re-layout (init) ------------------

def _conv_relu_pool_phase_mats(w_oihw, h_in, w_in, pad):
    """Fold conv(pad) -> ReLU -> 2x2 floor-maxpool into 4 dense matrices, one
    per pooling phase (dh, dw).  Activations are flat NHWC lanes
    ((h*w_in + w)*cin + ci); outputs are flat ((hp*wp_out + wp)*cout + co).
    The pool is then the elementwise max of the 4 phase matmuls (bias/ReLU
    commute with the max)."""
    cout, cin, kh, kw = w_oihw.shape
    h_conv = h_in + 2 * pad - kh + 1
    w_conv = w_in + 2 * pad - kw + 1
    hp_out, wp_out = h_conv // 2, w_conv // 2
    mats = np.zeros((4, h_in * w_in * cin, hp_out * wp_out * cout), np.float32)
    for ph, (dh, dw) in enumerate(((0, 0), (0, 1), (1, 0), (1, 1))):
        for hp in range(hp_out):
            for wp in range(wp_out):
                hc, wc = 2 * hp + dh, 2 * wp + dw            # conv-output coords
                for i in range(kh):
                    for j in range(kw):
                        hi, wi = hc + i - pad, wc + j - pad  # input coords
                        if not (0 <= hi < h_in and 0 <= wi < w_in):
                            continue                          # zero padding
                        for co in range(cout):
                            col = (hp * wp_out + wp) * cout + co
                            for ci in range(cin):
                                row = (hi * w_in + wi) * cin + ci
                                mats[ph, row, col] = w_oihw[co, ci, i, j]
    return mats


def init_params(key):
    ks = jax.random.split(key, 10)
    s = 0.1
    return {
        "conv1_w": jax.random.normal(ks[0], (6, 3, 3, 4), jnp.float32) * s,
        "conv1_b": jax.random.normal(ks[1], (6,), jnp.float32) * s,
        "conv2_w": jax.random.normal(ks[2], (16, 6, 5, 5), jnp.float32) * s,
        "conv2_b": jax.random.normal(ks[3], (16,), jnp.float32) * s,
        "fc1_w": jax.random.normal(ks[4], (120, 16), jnp.float32) * s,
        "fc1_b": jax.random.normal(ks[5], (120,), jnp.float32) * s,
        "fc2_w": jax.random.normal(ks[6], (84, 120), jnp.float32) * s,
        "fc2_b": jax.random.normal(ks[7], (84,), jnp.float32) * s,
        "fc3_w": jax.random.normal(ks[8], (10, 84), jnp.float32) * s,
        "fc3_b": jax.random.normal(ks[9], (10,), jnp.float32) * s,
    }


def pack_params(params):
    """Repack PyTorch-layout params into the kernel's dense phase matrices.
    Done once at init, outside the jitted forward.  (f32 throughout; on
    v6e/v7x these could be cast to bf16 with preferred_element_type=f32
    kept on the dots.)"""
    g = lambda k: np.asarray(params[k], dtype=np.float32)

    w1 = _conv_relu_pool_phase_mats(g("conv1_w"), H_IN, W_IN, pad=0)   # (4,768,252)
    b1 = np.tile(g("conv1_b"), HP1 * WP1)[None, :]                     # (1,252)
    w2 = _conv_relu_pool_phase_mats(g("conv2_w"), HP1, WP1, pad=PAD2)  # (4,252,64)
    b2 = np.tile(g("conv2_b"), HP2 * WP2)[None, :]                     # (1,64)

    f1 = np.zeros((POS, P2_LANES, FC1), np.float32)                    # (4,64,120)
    for pos in range(POS):
        f1[pos, pos * C2_OUT:(pos + 1) * C2_OUT, :] = g("fc1_w").T
    bf1 = g("fc1_b")[None, :]                                          # (1,120)

    f2 = g("fc2_w").T                                                  # (120,84)
    bf2 = g("fc2_b")[None, :]                                          # (1,84)

    f3 = np.zeros((POS, FC2, OUT_LANES), np.float32)                   # (4,84,128)
    bf3 = np.zeros((1, OUT_LANES), np.float32)
    for pos in range(POS):
        f3[pos, :, pos * FC3_PAD:pos * FC3_PAD + FC3] = g("fc3_w").T
        bf3[0, pos * FC3_PAD:pos * FC3_PAD + FC3] = g("fc3_b")

    packed = {"w1": w1, "b1": b1, "w2": w2, "b2": b2,
              "f1": f1, "bf1": bf1, "f2": f2, "bf2": bf2,
              "f3": f3, "bf3": bf3}
    return {k: jnp.asarray(v) for k, v in packed.items()}


# -------------------------------- forward ----------------------------------

@jax.jit
def cnn_forward(packed, x_nchw):
    n = x_nchw.shape[0]
    bb = n if n < BATCH_TILE else BATCH_TILE           # samples per grid step
    n_pad = pl.cdiv(n, bb) * bb

    # NCHW -> flat NHWC lanes.  Kept in the wrapper for spec parity; feed the
    # (N, 768) slab directly to skip this extra HBM pass at large N.
    x = jnp.transpose(x_nchw, (0, 2, 3, 1)).astype(jnp.float32)
    x = x.reshape(n, IN_LANES)
    if n_pad != n:
        x = jnp.pad(x, ((0, n_pad - n), (0, 0)))

    grid_spec = pltpu.PrefetchScalarGridSpec(
        num_scalar_prefetch=0,
        grid=(n_pad // bb,),
        in_specs=[
            pl.BlockSpec((bb, IN_LANES), lambda i: (i, 0)),
            pl.BlockSpec((POS, IN_LANES, P1_LANES), lambda i: (0, 0, 0)),
            pl.BlockSpec((1, P1_LANES), lambda i: (0, 0)),
            pl.BlockSpec((POS, P1_LANES, P2_LANES), lambda i: (0, 0, 0)),
            pl.BlockSpec((1, P2_LANES), lambda i: (0, 0)),
            pl.BlockSpec((POS, P2_LANES, FC1), lambda i: (0, 0, 0)),
            pl.BlockSpec((1, FC1), lambda i: (0, 0)),
            pl.BlockSpec((FC1, FC2), lambda i: (0, 0)),
            pl.BlockSpec((1, FC2), lambda i: (0, 0)),
            pl.BlockSpec((POS, FC2, OUT_LANES), lambda i: (0, 0, 0)),
            pl.BlockSpec((1, OUT_LANES), lambda i: (0, 0)),
        ],
        out_specs=pl.BlockSpec((bb, OUT_LANES), lambda i: (i, 0)),
    )
    out = pl.pallas_call(
        _cnn_fused_kernel,
        out_shape=jax.ShapeDtypeStruct((n_pad, OUT_LANES), jnp.float32),
        grid_spec=grid_spec,
        compiler_params=pltpu.CompilerParams(
            dimension_semantics=("parallel",)),
    )(x, packed["w1"], packed["b1"], packed["w2"], packed["b2"],
      packed["f1"], packed["bf1"], packed["f2"], packed["bf2"],
      packed["f3"], packed["bf3"])

    # Strip the lane padding: (n, 4, 32)[..., :10] -> (n, 2, 2, 10).
    out = out[:n].reshape(n, POS, FC3_PAD)[:, :, :FC3]
    return out.reshape(n, HP2, WP2, FC3)


# ------------------------------ pure-JAX ref --------------------------------

def _reference_forward(params, x_nchw):
    x = x_nchw.astype(jnp.float32)
    dn = ("NCHW", "OIHW", "NCHW")
    y = jax.lax.conv_general_dilated(x, params["conv1_w"], (1, 1), "VALID",
                                     dimension_numbers=dn)
    y = jnp.maximum(y + params["conv1_b"][None, :, None, None], 0.0)
    y = jax.lax.reduce_window(y, -jnp.inf, jax.lax.max,
                              (1, 1, 2, 2), (1, 1, 2, 2), "VALID")
    y = jax.lax.conv_general_dilated(y, params["conv2_w"], (1, 1),
                                     [(1, 1), (1, 1)], dimension_numbers=dn)
    y = jnp.maximum(y + params["conv2_b"][None, :, None, None], 0.0)
    y = jax.lax.reduce_window(y, -jnp.inf, jax.lax.max,
                              (1, 1, 2, 2), (1, 1, 2, 2), "VALID")
    y = jnp.transpose(y, (0, 2, 3, 1))
    y = jnp.maximum(y @ params["fc1_w"].T + params["fc1_b"], 0.0)
    y = jnp.maximum(y @ params["fc2_w"].T + params["fc2_b"], 0.0)
    return y @ params["fc3_w"].T + params["fc3_b"]


if __name__ == "__main__":
    x = jax.random.normal(jax.random.PRNGKey(0), (2, 3, 16, 16), jnp.float32)
    params = init_params(jax.random.PRNGKey(42))
    packed = pack_params(params)

    out = cnn_forward(packed, x)
    jax.block_until_ready(out)
    # (2,3,16,16) -> conv1 (2,14,13,6) -> pool (2,7,6,6) -> conv2 (2,5,4,16)
    # -> pool (2,2,2,16) -> permute (NHWC) -> fc3 (2,2,2,10)
    assert out.shape == (2, 2, 2, 10), out.shape
    assert out.dtype == jnp.float32

    ref = _reference_forward(params, x)
    assert jnp.allclose(out, ref, atol=2e-3, rtol=2e-3), \
        float(jnp.max(jnp.abs(out - ref)))
    print("KERNEL_OK")
</pallas_src>

<mosaic_0001>
module attributes {stable_mosaic.version = 11 : i64} {
  func.func @_cnn_fused_kernel(%arg0: i32, %arg1: memref<2x768xf32, #tpu.memory_space<vmem>>, %arg2: memref<4x768x252xf32, #tpu.memory_space<vmem>>, %arg3: memref<1x252xf32, #tpu.memory_space<vmem>>, %arg4: memref<4x252x64xf32, #tpu.memory_space<vmem>>, %arg5: memref<1x64xf32, #tpu.memory_space<vmem>>, %arg6: memref<4x64x120xf32, #tpu.memory_space<vmem>>, %arg7: memref<1x120xf32, #tpu.memory_space<vmem>>, %arg8: memref<120x84xf32, #tpu.memory_space<vmem>>, %arg9: memref<1x84xf32, #tpu.memory_space<vmem>>, %arg10: memref<4x84x128xf32, #tpu.memory_space<vmem>>, %arg11: memref<1x128xf32, #tpu.memory_space<vmem>>, %arg12: memref<2x128xf32, #tpu.memory_space<vmem>>) attributes {dimension_semantics = [#tpu.dimension_semantics<parallel>], iteration_bounds = array<i64: 1>, scalar_prefetch = 0 : i64, scratch_operands = 0 : i64, tpu.core_type = #tpu.core_type<tc>, window_params = [{transform_indices = @transform_0, window_bounds = array<i64: 2, 768>}, {pipeline_mode = #tpu.pipeline_mode<synchronous>, transform_indices = @transform_1, window_bounds = array<i64: 4, 768, 252>}, {pipeline_mode = #tpu.pipeline_mode<synchronous>, transform_indices = @transform_2, window_bounds = array<i64: 1, 252>}, {pipeline_mode = #tpu.pipeline_mode<synchronous>, transform_indices = @transform_3, window_bounds = array<i64: 4, 252, 64>}, {pipeline_mode = #tpu.pipeline_mode<synchronous>, transform_indices = @transform_4, window_bounds = array<i64: 1, 64>}, {pipeline_mode = #tpu.pipeline_mode<synchronous>, transform_indices = @transform_5, window_bounds = array<i64: 4, 64, 120>}, {pipeline_mode = #tpu.pipeline_mode<synchronous>, transform_indices = @transform_6, window_bounds = array<i64: 1, 120>}, {pipeline_mode = #tpu.pipeline_mode<synchronous>, transform_indices = @transform_7, window_bounds = array<i64: 120, 84>}, {pipeline_mode = #tpu.pipeline_mode<synchronous>, transform_indices = @transform_8, window_bounds = array<i64: 1, 84>}, {pipeline_mode = #tpu.pipeline_mode<synchronous>, transform_indices = @transform_9, window_bounds = array<i64: 4, 84, 128>}, {pipeline_mode = #tpu.pipeline_mode<synchronous>, transform_indices = @transform_10, window_bounds = array<i64: 1, 128>}, {transform_indices = @transform_11, window_bounds = array<i64: 2, 128>}]} {
    %c0 = arith.constant 0 : index
    %c0_0 = arith.constant 0 : index
    %0 = vector.load %arg1[%c0, %c0_0] : memref<2x768xf32, #tpu.memory_space<vmem>>, vector<2x768xf32>
    %c0_1 = arith.constant 0 : index
    %c0_2 = arith.constant 0 : index
    %c0_3 = arith.constant 0 : index
    %1 = vector.load %arg2[%c0_1, %c0_2, %c0_3] : memref<4x768x252xf32, #tpu.memory_space<vmem>>, vector<1x768x252xf32>
    %2 = vector.shape_cast %1 : vector<1x768x252xf32> to vector<768x252xf32>
    %cst = arith.constant dense<0.000000e+00> : vector<2x252xf32>
    %3 = tpu.matmul %0, %2, %cst {dimension_numbers = #tpu.dot_dimension_numbers<[1], [0], [0], [1], [0, 0, 1, 1], [], []>} : vector<2x768xf32>, vector<768x252xf32>, vector<2x252xf32> -> vector<2x252xf32>
    %c1 = arith.constant 1 : index
    %c0_4 = arith.constant 0 : index
    %c0_5 = arith.constant 0 : index
    %4 = vector.load %arg2[%c1, %c0_4, %c0_5] : memref<4x768x252xf32, #tpu.memory_space<vmem>>, vector<1x768x252xf32>
    %5 = vector.shape_cast %4 : vector<1x768x252xf32> to vector<768x252xf32>
    %cst_6 = arith.constant dense<0.000000e+00> : vector<2x252xf32>
    %6 = tpu.matmul %0, %5, %cst_6 {dimension_numbers = #tpu.dot_dimension_numbers<[1], [0], [0], [1], [0, 0, 1, 1], [], []>} : vector<2x768xf32>, vector<768x252xf32>, vector<2x252xf32> -> vector<2x252xf32>
    %7 = arith.maximumf %3, %6 : vector<2x252xf32>
    %c2 = arith.constant 2 : index
    %c0_7 = arith.constant 0 : index
    %c0_8 = arith.constant 0 : index
    %8 = vector.load %arg2[%c2, %c0_7, %c0_8] : memref<4x768x252xf32, #tpu.memory_space<vmem>>, vector<1x768x252xf32>
    %9 = vector.shape_cast %8 : vector<1x768x252xf32> to vector<768x252xf32>
    %cst_9 = arith.constant dense<0.000000e+00> : vector<2x252xf32>
    %10 = tpu.matmul %0, %9, %cst_9 {dimension_numbers = #tpu.dot_dimension_numbers<[1], [0], [0], [1], [0, 0, 1, 1], [], []>} : vector<2x768xf32>, vector<768x252xf32>, vector<2x252xf32> -> vector<2x252xf32>
    %11 = arith.maximumf %7, %10 : vector<2x252xf32>
    %c3 = arith.constant 3 : index
    %c0_10 = arith.constant 0 : index
    %c0_11 = arith.constant 0 : index
    %12 = vector.load %arg2[%c3, %c0_10, %c0_11] : memref<4x768x252xf32, #tpu.memory_space<vmem>>, vector<1x768x252xf32>
    %13 = vector.shape_cast %12 : vector<1x768x252xf32> to vector<768x252xf32>
    %cst_12 = arith.constant dense<0.000000e+00> : vector<2x252xf32>
    %14 = tpu.matmul %0, %13, %cst_12 {dimension_numbers = #tpu.dot_dimension_numbers<[1], [0], [0], [1], [0, 0, 1, 1], [], []>} : vector<2x768xf32>, vector<768x252xf32>, vector<2x252xf32> -> vector<2x252xf32>
    %15 = arith.maximumf %11, %14 : vector<2x252xf32>
    %c0_13 = arith.constant 0 : index
    %c0_14 = arith.constant 0 : index
    %16 = vector.load %arg3[%c0_13, %c0_14] : memref<1x252xf32, #tpu.memory_space<vmem>>, vector<1x252xf32>
    %17 = vector.broadcast %16 : vector<1x252xf32> to vector<2x252xf32>
    %18 = arith.addf %15, %17 : vector<2x252xf32>
    %cst_15 = arith.constant 0.000000e+00 : f32
    %19 = vector.broadcast %cst_15 : f32 to vector<2x252xf32>
    %20 = arith.maximumf %18, %19 : vector<2x252xf32>
    %c0_16 = arith.constant 0 : index
    %c0_17 = arith.constant 0 : index
    %c0_18 = arith.constant 0 : index
    %21 = vector.load %arg4[%c0_16, %c0_17, %c0_18] : memref<4x252x64xf32, #tpu.memory_space<vmem>>, vector<1x252x64xf32>
    %22 = vector.shape_cast %21 : vector<1x252x64xf32> to vector<252x64xf32>
    %cst_19 = arith.constant dense<0.000000e+00> : vector<2x64xf32>
    %23 = tpu.matmul %20, %22, %cst_19 {dimension_numbers = #tpu.dot_dimension_numbers<[1], [0], [0], [1], [0, 0, 1, 1], [], []>} : vector<2x252xf32>, vector<252x64xf32>, vector<2x64xf32> -> vector<2x64xf32>
    %c1_20 = arith.constant 1 : index
    %c0_21 = arith.constant 0 : index
    %c0_22 = arith.constant 0 : index
    %24 = vector.load %arg4[%c1_20, %c0_21, %c0_22] : memref<4x252x64xf32, #tpu.memory_space<vmem>>, vector<1x252x64xf32>
    %25 = vector.shape_cast %24 : vector<1x252x64xf32> to vector<252x64xf32>
    %cst_23 = arith.constant dense<0.000000e+00> : vector<2x64xf32>
    %26 = tpu.matmul %20, %25, %cst_23 {dimension_numbers = #tpu.dot_dimension_numbers<[1], [0], [0], [1], [0, 0, 1, 1], [], []>} : vector<2x252xf32>, vector<252x64xf32>, vector<2x64xf32> -> vector<2x64xf32>
    %27 = arith.maximumf %23, %26 : vector<2x64xf32>
    %c2_24 = arith.constant 2 : index
    %c0_25 = arith.constant 0 : index
    %c0_26 = arith.constant 0 : index
    %28 = vector.load %arg4[%c2_24, %c0_25, %c0_26] : memref<4x252x64xf32, #tpu.memory_space<vmem>>, vector<1x252x64xf32>
    %29 = vector.shape_cast %28 : vector<1x252x64xf32> to vector<252x64xf32>
    %cst_27 = arith.constant dense<0.000000e+00> : vector<2x64xf32>
    %30 = tpu.matmul %20, %29, %cst_27 {dimension_numbers = #tpu.dot_dimension_numbers<[1], [0], [0], [1], [0, 0, 1, 1], [], []>} : vector<2x252xf32>, vector<252x64xf32>, vector<2x64xf32> -> vector<2x64xf32>
    %31 = arith.maximumf %27, %30 : vector<2x64xf32>
    %c3_28 = arith.constant 3 : index
    %c0_29 = arith.constant 0 : index
    %c0_30 = arith.constant 0 : index
    %32 = vector.load %arg4[%c3_28, %c0_29, %c0_30] : memref<4x252x64xf32, #tpu.memory_space<vmem>>, vector<1x252x64xf32>
    %33 = vector.shape_cast %32 : vector<1x252x64xf32> to vector<252x64xf32>
    %cst_31 = arith.constant dense<0.000000e+00> : vector<2x64xf32>
    %34 = tpu.matmul %20, %33, %cst_31 {dimension_numbers = #tpu.dot_dimension_numbers<[1], [0], [0], [1], [0, 0, 1, 1], [], []>} : vector<2x252xf32>, vector<252x64xf32>, vector<2x64xf32> -> vector<2x64xf32>
    %35 = arith.maximumf %31, %34 : vector<2x64xf32>
    %c0_32 = arith.constant 0 : index
    %c0_33 = arith.constant 0 : index
    %36 = vector.load %arg5[%c0_32, %c0_33] : memref<1x64xf32, #tpu.memory_space<vmem>>, vector<1x64xf32>
    %37 = vector.broadcast %36 : vector<1x64xf32> to vector<2x64xf32>
    %38 = arith.addf %35, %37 : vector<2x64xf32>
    %cst_34 = arith.constant 0.000000e+00 : f32
    %39 = vector.broadcast %cst_34 : f32 to vector<2x64xf32>
    %40 = arith.maximumf %38, %39 : vector<2x64xf32>
    %c0_35 = arith.constant 0 : index
    %c0_36 = arith.constant 0 : index
    %c0_37 = arith.constant 0 : index
    %41 = vector.load %arg6[%c0_35, %c0_36, %c0_37] : memref<4x64x120xf32, #tpu.memory_space<vmem>>, vector<1x64x120xf32>
    %42 = vector.shape_cast %41 : vector<1x64x120xf32> to vector<64x120xf32>
    %cst_38 = arith.constant dense<0.000000e+00> : vector<2x120xf32>
    %43 = tpu.matmul %40, %42, %cst_38 {dimension_numbers = #tpu.dot_dimension_numbers<[1], [0], [0], [1], [0, 0, 1, 1], [], []>} : vector<2x64xf32>, vector<64x120xf32>, vector<2x120xf32> -> vector<2x120xf32>
    %c0_39 = arith.constant 0 : index
    %c0_40 = arith.constant 0 : index
    %44 = vector.load %arg7[%c0_39, %c0_40] : memref<1x120xf32, #tpu.memory_space<vmem>>, vector<1x120xf32>
    %45 = vector.broadcast %44 : vector<1x120xf32> to vector<2x120xf32>
    %46 = arith.addf %43, %45 : vector<2x120xf32>
    %cst_41 = arith.constant 0.000000e+00 : f32
    %47 = vector.broadcast %cst_41 : f32 to vector<2x120xf32>
    %48 = arith.maximumf %46, %47 : vector<2x120xf32>
    %c0_42 = arith.constant 0 : index
    %c0_43 = arith.constant 0 : index
    %49 = vector.load %arg8[%c0_42, %c0_43] : memref<120x84xf32, #tpu.memory_space<vmem>>, vector<120x84xf32>
    %cst_44 = arith.constant dense<0.000000e+00> : vector<2x84xf32>
    %50 = tpu.matmul %48, %49, %cst_44 {dimension_numbers = #tpu.dot_dimension_numbers<[1], [0], [0], [1], [0, 0, 1, 1], [], []>} : vector<2x120xf32>, vector<120x84xf32>, vector<2x84xf32> -> vector<2x84xf32>
    %c0_45 = arith.constant 0 : index
    %c0_46 = arith.constant 0 : index
    %51 = vector.load %arg9[%c0_45, %c0_46] : memref<1x84xf32, #tpu.memory_space<vmem>>, vector<1x84xf32>
    %52 = vector.broadcast %51 : vector<1x84xf32> to vector<2x84xf32>
    %53 = arith.addf %50, %52 : vector<2x84xf32>
    %cst_47 = arith.constant 0.000000e+00 : f32
    %54 = vector.broadcast %cst_47 : f32 to vector<2x84xf32>
    %55 = arith.maximumf %53, %54 : vector<2x84xf32>
    %c0_48 = arith.constant 0 : index
    %c0_49 = arith.constant 0 : index
    %c0_50 = arith.constant 0 : index
    %56 = vector.load %arg10[%c0_48, %c0_49, %c0_50] : memref<4x84x128xf32, #tpu.memory_space<vmem>>, vector<1x84x128xf32>
    %57 = vector.shape_cast %56 : vector<1x84x128xf32> to vector<84x128xf32>
    %cst_51 = arith.constant dense<0.000000e+00> : vector<2x128xf32>
    %58 = tpu.matmul %55, %57, %cst_51 {dimension_numbers = #tpu.dot_dimension_numbers<[1], [0], [0], [1], [0, 0, 1, 1], [], []>} : vector<2x84xf32>, vector<84x128xf32>, vector<2x128xf32> -> vector<2x128xf32>
    %c1_52 = arith.constant 1 : index
    %c0_53 = arith.constant 0 : index
    %c0_54 = arith.constant 0 : index
    %59 = vector.load %arg6[%c1_52, %c0_53, %c0_54] : memref<4x64x120xf32, #tpu.memory_space<vmem>>, vector<1x64x120xf32>
    %60 = vector.shape_cast %59 : vector<1x64x120xf32> to vector<64x120xf32>
    %cst_55 = arith.constant dense<0.000000e+00> : vector<2x120xf32>
    %61 = tpu.matmul %40, %60, %cst_55 {dimension_numbers = #tpu.dot_dimension_numbers<[1], [0], [0], [1], [0, 0, 1, 1], [], []>} : vector<2x64xf32>, vector<64x120xf32>, vector<2x120xf32> -> vector<2x120xf32>
    %c0_56 = arith.constant 0 : index
    %c0_57 = arith.constant 0 : index
    %62 = vector.load %arg7[%c0_56, %c0_57] : memref<1x120xf32, #tpu.memory_space<vmem>>, vector<1x120xf32>
    %63 = vector.broadcast %62 : vector<1x120xf32> to vector<2x120xf32>
    %64 = arith.addf %61, %63 : vector<2x120xf32>
    %cst_58 = arith.constant 0.000000e+00 : f32
    %65 = vector.broadcast %cst_58 : f32 to vector<2x120xf32>
    %66 = arith.maximumf %64, %65 : vector<2x120xf32>
    %c0_59 = arith.constant 0 : index
    %c0_60 = arith.constant 0 : index
    %67 = vector.load %arg8[%c0_59, %c0_60] : memref<120x84xf32, #tpu.memory_space<vmem>>, vector<120x84xf32>
    %cst_61 = arith.constant dense<0.000000e+00> : vector<2x84xf32>
    %68 = tpu.matmul %66, %67, %cst_61 {dimension_numbers = #tpu.dot_dimension_numbers<[1], [0], [0], [1], [0, 0, 1, 1], [], []>} : vector<2x120xf32>, vector<120x84xf32>, vector<2x84xf32> -> vector<2x84xf32>
    %c0_62 = arith.constant 0 : index
    %c0_63 = arith.constant 0 : index
    %69 = vector.load %arg9[%c0_62, %c0_63] : memref<1x84xf32, #tpu.memory_space<vmem>>, vector<1x84xf32>
    %70 = vector.broadcast %69 : vector<1x84xf32> to vector<2x84xf32>
    %71 = arith.addf %68, %70 : vector<2x84xf32>
    %cst_64 = arith.constant 0.000000e+00 : f32
    %72 = vector.broadcast %cst_64 : f32 to vector<2x84xf32>
    %73 = arith.maximumf %71, %72 : vector<2x84xf32>
    %c1_65 = arith.constant 1 : index
    %c0_66 = arith.constant 0 : index
    %c0_67 = arith.constant 0 : index
    %74 = vector.load %arg10[%c1_65, %c0_66, %c0_67] : memref<4x84x128xf32, #tpu.memory_space<vmem>>, vector<1x84x128xf32>
    %75 = vector.shape_cast %74 : vector<1x84x128xf32> to vector<84x128xf32>
    %cst_68 = arith.constant dense<0.000000e+00> : vector<2x128xf32>
    %76 = tpu.matmul %73, %75, %cst_68 {dimension_numbers = #tpu.dot_dimension_numbers<[1], [0], [0], [1], [0, 0, 1, 1], [], []>} : vector<2x84xf32>, vector<84x128xf32>, vector<2x128xf32> -> vector<2x128xf32>
    %77 = arith.addf %58, %76 : vector<2x128xf32>
    %c2_69 = arith.constant 2 : index
    %c0_70 = arith.constant 0 : index
    %c0_71 = arith.constant 0 : index
    %78 = vector.load %arg6[%c2_69, %c0_70, %c0_71] : memref<4x64x120xf32, #tpu.memory_space<vmem>>, vector<1x64x120xf32>
    %79 = vector.shape_cast %78 : vector<1x64x120xf32> to vector<64x120xf32>
    %cst_72 = arith.constant dense<0.000000e+00> : vector<2x120xf32>
    %80 = tpu.matmul %40, %79, %cst_72 {dimension_numbers = #tpu.dot_dimension_numbers<[1], [0], [0], [1], [0, 0, 1, 1], [], []>} : vector<2x64xf32>, vector<64x120xf32>, vector<2x120xf32> -> vector<2x120xf32>
    %c0_73 = arith.constant 0 : index
    %c0_74 = arith.constant 0 : index
    %81 = vector.load %arg7[%c0_73, %c0_74] : memref<1x120xf32, #tpu.memory_space<vmem>>, vector<1x120xf32>
    %82 = vector.broadcast %81 : vector<1x120xf32> to vector<2x120xf32>
    %83 = arith.addf %80, %82 : vector<2x120xf32>
    %cst_75 = arith.constant 0.000000e+00 : f32
    %84 = vector.broadcast %cst_75 : f32 to vector<2x120xf32>
    %85 = arith.maximumf %83, %84 : vector<2x120xf32>
    %c0_76 = arith.constant 0 : index
    %c0_77 = arith.constant 0 : index
    %86 = vector.load %arg8[%c0_76, %c0_77] : memref<120x84xf32, #tpu.memory_space<vmem>>, vector<120x84xf32>
    %cst_78 = arith.constant dense<0.000000e+00> : vector<2x84xf32>
    %87 = tpu.matmul %85, %86, %cst_78 {dimension_numbers = #tpu.dot_dimension_numbers<[1], [0], [0], [1], [0, 0, 1, 1], [], []>} : vector<2x120xf32>, vector<120x84xf32>, vector<2x84xf32> -> vector<2x84xf32>
    %c0_79 = arith.constant 0 : index
    %c0_80 = arith.constant 0 : index
    %88 = vector.load %arg9[%c0_79, %c0_80] : memref<1x84xf32, #tpu.memory_space<vmem>>, vector<1x84xf32>
    %89 = vector.broadcast %88 : vector<1x84xf32> to vector<2x84xf32>
    %90 = arith.addf %87, %89 : vector<2x84xf32>
    %cst_81 = arith.constant 0.000000e+00 : f32
    %91 = vector.broadcast %cst_81 : f32 to vector<2x84xf32>
    %92 = arith.maximumf %90, %91 : vector<2x84xf32>
    %c2_82 = arith.constant 2 : index
    %c0_83 = arith.constant 0 : index
    %c0_84 = arith.constant 0 : index
    %93 = vector.load %arg10[%c2_82, %c0_83, %c0_84] : memref<4x84x128xf32, #tpu.memory_space<vmem>>, vector<1x84x128xf32>
    %94 = vector.shape_cast %93 : vector<1x84x128xf32> to vector<84x128xf32>
    %cst_85 = arith.constant dense<0.000000e+00> : vector<2x128xf32>
    %95 = tpu.matmul %92, %94, %cst_85 {dimension_numbers = #tpu.dot_dimension_numbers<[1], [0], [0], [1], [0, 0, 1, 1], [], []>} : vector<2x84xf32>, vector<84x128xf32>, vector<2x128xf32> -> vector<2x128xf32>
    %96 = arith.addf %77, %95 : vector<2x128xf32>
    %c3_86 = arith.constant 3 : index
    %c0_87 = arith.constant 0 : index
    %c0_88 = arith.constant 0 : index
    %97 = vector.load %arg6[%c3_86, %c0_87, %c0_88] : memref<4x64x120xf32, #tpu.memory_space<vmem>>, vector<1x64x120xf32>
    %98 = vector.shape_cast %97 : vector<1x64x120xf32> to vector<64x120xf32>
    %cst_89 = arith.constant dense<0.000000e+00> : vector<2x120xf32>
    %99 = tpu.matmul %40, %98, %cst_89 {dimension_numbers = #tpu.dot_dimension_numbers<[1], [0], [0], [1], [0, 0, 1, 1], [], []>} : vector<2x64xf32>, vector<64x120xf32>, vector<2x120xf32> -> vector<2x120xf32>
    %c0_90 = arith.constant 0 : index
    %c0_91 = arith.constant 0 : index
    %100 = vector.load %arg7[%c0_90, %c0_91] : memref<1x120xf32, #tpu.memory_space<vmem>>, vector<1x120xf32>
    %101 = vector.broadcast %100 : vector<1x120xf32> to vector<2x120xf32>
    %102 = arith.addf %99, %101 : vector<2x120xf32>
    %cst_92 = arith.constant 0.000000e+00 : f32
    %103 = vector.broadcast %cst_92 : f32 to vector<2x120xf32>
    %104 = arith.maximumf %102, %103 : vector<2x120xf32>
    %c0_93 = arith.constant 0 : index
    %c0_94 = arith.constant 0 : index
    %105 = vector.load %arg8[%c0_93, %c0_94] : memref<120x84xf32, #tpu.memory_space<vmem>>, vector<120x84xf32>
    %cst_95 = arith.constant dense<0.000000e+00> : vector<2x84xf32>
    %106 = tpu.matmul %104, %105, %cst_95 {dimension_numbers = #tpu.dot_dimension_numbers<[1], [0], [0], [1], [0, 0, 1, 1], [], []>} : vector<2x120xf32>, vector<120x84xf32>, vector<2x84xf32> -> vector<2x84xf32>
    %c0_96 = arith.constant 0 : index
    %c0_97 = arith.constant 0 : index
    %107 = vector.load %arg9[%c0_96, %c0_97] : memref<1x84xf32, #tpu.memory_space<vmem>>, vector<1x84xf32>
    %108 = vector.broadcast %107 : vector<1x84xf32> to vector<2x84xf32>
    %109 = arith.addf %106, %108 : vector<2x84xf32>
    %cst_98 = arith.constant 0.000000e+00 : f32
    %110 = vector.broadcast %cst_98 : f32 to vector<2x84xf32>
    %111 = arith.maximumf %109, %110 : vector<2x84xf32>
    %c3_99 = arith.constant 3 : index
    %c0_100 = arith.constant 0 : index
    %c0_101 = arith.constant 0 : index
    %112 = vector.load %arg10[%c3_99, %c0_100, %c0_101] : memref<4x84x128xf32, #tpu.memory_space<vmem>>, vector<1x84x128xf32>
    %113 = vector.shape_cast %112 : vector<1x84x128xf32> to vector<84x128xf32>
    %cst_102 = arith.constant dense<0.000000e+00> : vector<2x128xf32>
    %114 = tpu.matmul %111, %113, %cst_102 {dimension_numbers = #tpu.dot_dimension_numbers<[1], [0], [0], [1], [0, 0, 1, 1], [], []>} : vector<2x84xf32>, vector<84x128xf32>, vector<2x128xf32> -> vector<2x128xf32>
    %115 = arith.addf %96, %114 : vector<2x128xf32>
    %c0_103 = arith.constant 0 : index
    %c0_104 = arith.constant 0 : index
    %116 = vector.load %arg11[%c0_103, %c0_104] : memref<1x128xf32, #tpu.memory_space<vmem>>, vector<1x128xf32>
    %117 = vector.broadcast %116 : vector<1x128xf32> to vector<2x128xf32>
    %118 = arith.addf %115, %117 : vector<2x128xf32>
    %c0_105 = arith.constant 0 : index
    %c0_106 = arith.constant 0 : index
    %119 = vector.load %arg12[%c0_105, %c0_106] : memref<2x128xf32, #tpu.memory_space<vmem>>, vector<2x128xf32>
    tpu.vector_store %arg12[%c0_105, %c0_106], %118 {strides = array<i32>} : memref<2x128xf32, #tpu.memory_space<vmem>>, vector<2x128xf32>,
    return
  }
  func.func @transform_0(%arg0: i32) -> (i32, i32) {
    %c0_i32 = arith.constant 0 : i32
    %c0_i32_0 = arith.constant 0 : i32
    return %arg0, %c0_i32 : i32, i32
  }
  func.func @transform_1(%arg0: i32) -> (i32, i32, i32) {
    %c0_i32 = arith.constant 0 : i32
    %c0_i32_0 = arith.constant 0 : i32
    %c0_i32_1 = arith.constant 0 : i32
    %c0_i32_2 = arith.constant 0 : i32
    return %c0_i32, %c0_i32_0, %c0_i32_1 : i32, i32, i32
  }
  func.func @transform_2(%arg0: i32) -> (i32, i32) {
    %c0_i32 = arith.constant 0 : i32
    %c0_i32_0 = arith.constant 0 : i32
    %c0_i32_1 = arith.constant 0 : i32
    return %c0_i32, %c0_i32_0 : i32, i32
  }
  func.func @transform_3(%arg0: i32) -> (i32, i32, i32) {
    %c0_i32 = arith.constant 0 : i32
    %c0_i32_0 = arith.constant 0 : i32
    %c0_i32_1 = arith.constant 0 : i32
    %c0_i32_2 = arith.constant 0 : i32
    return %c0_i32, %c0_i32_0, %c0_i32_1 : i32, i32, i32
  }
  func.func @transform_4(%arg0: i32) -> (i32, i32) {
    %c0_i32 = arith.constant 0 : i32
    %c0_i32_0 = arith.constant 0 : i32
    %c0_i32_1 = arith.constant 0 : i32
    return %c0_i32, %c0_i32_0 : i32, i32
  }
  func.func @transform_5(%arg0: i32) -> (i32, i32, i32) {
    %c0_i32 = arith.constant 0 : i32
    %c0_i32_0 = arith.constant 0 : i32
    %c0_i32_1 = arith.constant 0 : i32
    %c0_i32_2 = arith.constant 0 : i32
    return %c0_i32, %c0_i32_0, %c0_i32_1 : i32, i32, i32
  }
  func.func @transform_6(%arg0: i32) -> (i32, i32) {
    %c0_i32 = arith.constant 0 : i32
    %c0_i32_0 = arith.constant 0 : i32
    %c0_i32_1 = arith.constant 0 : i32
    return %c0_i32, %c0_i32_0 : i32, i32
  }
  func.func @transform_7(%arg0: i32) -> (i32, i32) {
    %c0_i32 = arith.constant 0 : i32
    %c0_i32_0 = arith.constant 0 : i32
    %c0_i32_1 = arith.constant 0 : i32
    return %c0_i32, %c0_i32_0 : i32, i32
  }
  func.func @transform_8(%arg0: i32) -> (i32, i32) {
    %c0_i32 = arith.constant 0 : i32
    %c0_i32_0 = arith.constant 0 : i32
    %c0_i32_1 = arith.constant 0 : i32
    return %c0_i32, %c0_i32_0 : i32, i32
  }
  func.func @transform_9(%arg0: i32) -> (i32, i32, i32) {
    %c0_i32 = arith.constant 0 : i32
    %c0_i32_0 = arith.constant 0 : i32
    %c0_i32_1 = arith.constant 0 : i32
    %c0_i32_2 = arith.constant 0 : i32
    return %c0_i32, %c0_i32_0, %c0_i32_1 : i32, i32, i32
  }
  func.func @transform_10(%arg0: i32) -> (i32, i32) {
    %c0_i32 = arith.constant 0 : i32
    %c0_i32_0 = arith.constant 0 : i32
    %c0_i32_1 = arith.constant 0 : i32
    return %c0_i32, %c0_i32_0 : i32, i32
  }
  func.func @transform_11(%arg0: i32) -> (i32, i32) {
    %c0_i32 = arith.constant 0 : i32
    %c0_i32_0 = arith.constant 0 : i32
    return %arg0, %c0_i32 : i32, i32
  }
}

</mosaic_0001>

<llo_original>
// kernel: cnn_forward.1
$region0: #{cnn_forward.1}
  #allocation0 [shape = 'u32[]', space=smem, size = 0x4, offset = 0x4, fixed_abs, tag = 'smem constant byte address 0x4 - core index']
  #allocation1 [shape = 'u32[144,128]{1,0:T(1,128)}', space=vmem, size = 0x12000, scoped, tag = 'internal scratch']
  %s0 = inlined_call_operand.vmem [shape: f32[2,768], index: 0, kind: input, shape index: {}]
  %s1 = inlined_call_operand.vmem [shape: f32[4,768,252], index: 1, kind: input, shape index: {}]
  %s2 = inlined_call_operand.vmem [shape: f32[1,252], index: 2, kind: input, shape index: {}]
  %s3 = inlined_call_operand.vmem [shape: f32[4,252,64], index: 3, kind: input, shape index: {}]
  %s4 = inlined_call_operand.vmem [shape: f32[1,64], index: 4, kind: input, shape index: {}]
  %s5 = inlined_call_operand.vmem [shape: f32[4,64,120], index: 5, kind: input, shape index: {}]
  %s6 = inlined_call_operand.vmem [shape: f32[1,120], index: 6, kind: input, shape index: {}]
  %s7 = inlined_call_operand.vmem [shape: f32[120,84], index: 7, kind: input, shape index: {}]
  %s8 = inlined_call_operand.vmem [shape: f32[1,84], index: 8, kind: input, shape index: {}]
  %s9 = inlined_call_operand.vmem [shape: f32[4,84,128], index: 9, kind: input, shape index: {}]
  %s10 = inlined_call_operand.vmem [shape: f32[1,128], index: 10, kind: input, shape index: {}]
  %s11 = inlined_call_operand.vmem [shape: f32[2,128], index: 11, kind: output, shape index: {}]
  %s12 = sld [smem:[#allocation0]]
  $region54: #{cnn_forward.1} parent=0
    _
  %s14 = ssub.s32 1, %s12
  %s15 = scalar_select 0, %s14, %s12
  // Predicated region
  $region2: #{cnn_forward.1} parent=0 // pred_check
    _
  $region3: #{cnn_forward.1} parent=0 // pred_check_branch
    %17 = sbr.rel (0) target = $region5
  $region4: #{cnn_forward.1} parent=0 // pred_region
    _
  $region5: #{cnn_forward.1} parent=0 // pred_fallthru
    _
  // Predicated region
  $region6: #{cnn_forward.1} parent=0 // pred_check
    _
  $region7: #{cnn_forward.1} parent=0 // pred_check_branch
    %19 = sbr.rel (0) target = $region9
  $region8: #{cnn_forward.1} parent=0 // pred_region
    _
  $region9: #{cnn_forward.1} parent=0 // pred_fallthru
    _
  // Predicated region
  $region10: #{cnn_forward.1} parent=0 // pred_check
    _
  $region11: #{cnn_forward.1} parent=0 // pred_check_branch
    %21 = sbr.rel (0) target = $region13
  $region12: #{cnn_forward.1} parent=0 // pred_region
    _
  $region13: #{cnn_forward.1} parent=0 // pred_fallthru
    _
  // Predicated region
  $region14: #{cnn_forward.1} parent=0 // pred_check
    _
  $region15: #{cnn_forward.1} parent=0 // pred_check_branch
    %23 = sbr.rel (0) target = $region17
  $region16: #{cnn_forward.1} parent=0 // pred_region
    _
  $region17: #{cnn_forward.1} parent=0 // pred_fallthru
    _
  // Predicated region
  $region18: #{cnn_forward.1} parent=0 // pred_check
    _
  $region19: #{cnn_forward.1} parent=0 // pred_check_branch
    %25 = sbr.rel (0) target = $region21
  $region20: #{cnn_forward.1} parent=0 // pred_region
    _
  $region21: #{cnn_forward.1} parent=0 // pred_fallthru
    _
  // Predicated region
  $region22: #{cnn_forward.1} parent=0 // pred_check
    _
  $region23: #{cnn_forward.1} parent=0 // pred_check_branch
    %27 = sbr.rel (0) target = $region25
  $region24: #{cnn_forward.1} parent=0 // pred_region
    _
  $region25: #{cnn_forward.1} parent=0 // pred_fallthru
    _
  // Predicated region
  $region26: #{cnn_forward.1} parent=0 // pred_check
    _
  $region27: #{cnn_forward.1} parent=0 // pred_check_branch
    %29 = sbr.rel (0) target = $region29
  $region28: #{cnn_forward.1} parent=0 // pred_region
    _
  $region29: #{cnn_forward.1} parent=0 // pred_fallthru
    _
  // Predicated region
  $region30: #{cnn_forward.1} parent=0 // pred_check
    _
  $region31: #{cnn_forward.1} parent=0 // pred_check_branch
    %31 = sbr.rel (0) target = $region33
  $region32: #{cnn_forward.1} parent=0 // pred_region
    _
  $region33: #{cnn_forward.1} parent=0 // pred_fallthru
    _
  // Predicated region
  $region34: #{cnn_forward.1} parent=0 // pred_check
    _
  $region35: #{cnn_forward.1} parent=0 // pred_check_branch
    %33 = sbr.rel (0) target = $region37
  $region36: #{cnn_forward.1} parent=0 // pred_region
    _
  $region37: #{cnn_forward.1} parent=0 // pred_fallthru
    _
  // Predicated region
  $region38: #{cnn_forward.1} parent=0 // pred_check
    _
  $region39: #{cnn_forward.1} parent=0 // pred_check_branch
    %35 = sbr.rel (0) target = $region41
  $region40: #{cnn_forward.1} parent=0 // pred_region
    _
  $region41: #{cnn_forward.1} parent=0 // pred_fallthru
    _
  // Predicated region
  $region42: #{cnn_forward.1} parent=0 // pred_check
    _
  $region43: #{cnn_forward.1} parent=0 // pred_check_branch
    %37 = sbr.rel (0) target = $region45
  $region44: #{cnn_forward.1} parent=0 // pred_region
    _
  $region45: #{cnn_forward.1} parent=0 // pred_fallthru
    _
  %v38 = vld [vmem:[%s0] sm:$0xff]
  %v39 = vld [vmem:[%s0 + $0x8] sm:$0xf]
  %v40 = vld [vmem:[%s1] sm:$0xff]
  %v41 = vld [vmem:[%s1 + $0x8] sm:$0xff]
  %v42 = vld [vmem:[%s1 + $0x10] sm:$0xff]
  %v43 = vld [vmem:[%s1 + $0x18] sm:$0xff]
  %v44 = vld [vmem:[%s1 + $0x20] sm:$0xff]
  %v45 = vld [vmem:[%s1 + $0x28] sm:$0xff]
  %v46 = vld [vmem:[%s1 + $0x30] sm:$0xff]
  %v47 = vld [vmem:[%s1 + $0x38] sm:$0xff]
  %v48 = vld [vmem:[%s1 + $0x40] sm:$0xff]
  %v49 = vld [vmem:[%s1 + $0x48] sm:$0xff]
  %v50 = vld [vmem:[%s1 + $0x50] sm:$0xff]
  %v51 = vld [vmem:[%s1 + $0x58] sm:$0xff]
  %v52 = vld [vmem:[%s1 + $0x60] sm:$0xff]
  %v53 = vld [vmem:[%s1 + $0x68] sm:$0xff]
  %v54 = vld [vmem:[%s1 + $0x70] sm:$0xff]
  %v55 = vld [vmem:[%s1 + $0x78] sm:$0xff]
  %v56 = vld [vmem:[%s1 + $0x80] sm:$0xff]
  %v57 = vld [vmem:[%s1 + $0x88] sm:$0xff]
  %v58 = vld [vmem:[%s1 + $0x90] sm:$0xff]
  %v59 = vld [vmem:[%s1 + $0x98] sm:$0xff]
  %v60 = vld [vmem:[%s1 + $0xa0] sm:$0xff]
  %v61 = vld [vmem:[%s1 + $0xa8] sm:$0xff]
  %v62 = vld [vmem:[%s1 + $0xb0] sm:$0xff]
  %v63 = vld [vmem:[%s1 + $0xb8] sm:$0xff]
  %v64 = vld [vmem:[%s1 + $0xc0] sm:$0xff]
  %v65 = vld [vmem:[%s1 + $0xc8] sm:$0xff]
  %v66 = vld [vmem:[%s1 + $0xd0] sm:$0xff]
  %v67 = vld [vmem:[%s1 + $0xd8] sm:$0xff]
  %v68 = vld [vmem:[%s1 + $0xe0] sm:$0xff]
  %v69 = vld [vmem:[%s1 + $0xe8] sm:$0xff]
  %v70 = vld [vmem:[%s1 + $0xf0] sm:$0xff]
  %v71 = vld [vmem:[%s1 + $0xf8] sm:$0xff]
  %v72 = vld [vmem:[%s1 + $0x100] sm:$0xff]
  %v73 = vld [vmem:[%s1 + $0x108] sm:$0xff]
  %v74 = vld [vmem:[%s1 + $0x110] sm:$0xff]
  %v75 = vld [vmem:[%s1 + $0x118] sm:$0xff]
  %v76 = vld [vmem:[%s1 + $0x120] sm:$0xff]
  %v77 = vld [vmem:[%s1 + $0x128] sm:$0xff]
  %v78 = vld [vmem:[%s1 + $0x130] sm:$0xff]
  %v79 = vld [vmem:[%s1 + $0x138] sm:$0xff]
  %v80 = vld [vmem:[%s1 + $0x140] sm:$0xff]
  %v81 = vld [vmem:[%s1 + $0x148] sm:$0xff]
  %v82 = vld [vmem:[%s1 + $0x150] sm:$0xff]
  %v83 = vld [vmem:[%s1 + $0x158] sm:$0xff]
  %v84 = vld [vmem:[%s1 + $0x160] sm:$0xff]
  %v85 = vld [vmem:[%s1 + $0x168] sm:$0xff]
  %v86 = vld [vmem:[%s1 + $0x170] sm:$0xff]
  %v87 = vld [vmem:[%s1 + $0x178] sm:$0xff]
  %v88 = vld [vmem:[%s1 + $0x180] sm:$0xff]
  %v89 = vld [vmem:[%s1 + $0x188] sm:$0xff]
  %v90 = vld [vmem:[%s1 + $0x190] sm:$0xff]
  %v91 = vld [vmem:[%s1 + $0x198] sm:$0xff]
  %v92 = vld [vmem:[%s1 + $0x1a0] sm:$0xff]
  %v93 = vld [vmem:[%s1 + $0x1a8] sm:$0xff]
  %v94 = vld [vmem:[%s1 + $0x1b0] sm:$0xff]
  %v95 = vld [vmem:[%s1 + $0x1b8] sm:$0xff]
  %v96 = vld [vmem:[%s1 + $0x1c0] sm:$0xff]
  %v97 = vld [vmem:[%s1 + $0x1c8] sm:$0xff]
  %v98 = vld [vmem:[%s1 + $0x1d0] sm:$0xff]
  %v99 = vld [vmem:[%s1 + $0x1d8] sm:$0xff]
  %v100 = vld [vmem:[%s1 + $0x1e0] sm:$0xff]
  %v101 = vld [vmem:[%s1 + $0x1e8] sm:$0xff]
  %v102 = vld [vmem:[%s1 + $0x1f0] sm:$0xff]
  %v103 = vld [vmem:[%s1 + $0x1f8] sm:$0xff]
  %v104 = vld [vmem:[%s1 + $0x200] sm:$0xff]
  %v105 = vld [vmem:[%s1 + $0x208] sm:$0xff]
  %v106 = vld [vmem:[%s1 + $0x210] sm:$0xff]
  %v107 = vld [vmem:[%s1 + $0x218] sm:$0xff]
  %v108 = vld [vmem:[%s1 + $0x220] sm:$0xff]
  %v109 = vld [vmem:[%s1 + $0x228] sm:$0xff]
  %v110 = vld [vmem:[%s1 + $0x230] sm:$0xff]
  %v111 = vld [vmem:[%s1 + $0x238] sm:$0xff]
  %v112 = vld [vmem:[%s1 + $0x240] sm:$0xff]
  %v113 = vld [vmem:[%s1 + $0x248] sm:$0xff]
  %v114 = vld [vmem:[%s1 + $0x250] sm:$0xff]
  %v115 = vld [vmem:[%s1 + $0x258] sm:$0xff]
  %v116 = vld [vmem:[%s1 + $0x260] sm:$0xff]
  %v117 = vld [vmem:[%s1 + $0x268] sm:$0xff]
  %v118 = vld [vmem:[%s1 + $0x270] sm:$0xff]
  %v119 = vld [vmem:[%s1 + $0x278] sm:$0xff]
  %v120 = vld [vmem:[%s1 + $0x280] sm:$0xff]
  %v121 = vld [vmem:[%s1 + $0x288] sm:$0xff]
  %v122 = vld [vmem:[%s1 + $0x290] sm:$0xff]
  %v123 = vld [vmem:[%s1 + $0x298] sm:$0xff]
  %v124 = vld [vmem:[%s1 + $0x2a0] sm:$0xff]
  %v125 = vld [vmem:[%s1 + $0x2a8] sm:$0xff]
  %v126 = vld [vmem:[%s1 + $0x2b0] sm:$0xff]
  %v127 = vld [vmem:[%s1 + $0x2b8] sm:$0xff]
  %v128 = vld [vmem:[%s1 + $0x2c0] sm:$0xff]
  %v129 = vld [vmem:[%s1 + $0x2c8] sm:$0xff]
  %v130 = vld [vmem:[%s1 + $0x2d0] sm:$0xff]
  %v131 = vld [vmem:[%s1 + $0x2d8] sm:$0xff]
  %v132 = vld [vmem:[%s1 + $0x2e0] sm:$0xff]
  %v133 = vld [vmem:[%s1 + $0x2e8] sm:$0xff]
  %v134 = vld [vmem:[%s1 + $0x2f0] sm:$0xff]
  %v135 = vld [vmem:[%s1 + $0x2f8] sm:$0xff]
  %v136 = vld [vmem:[%s1 + $0x300] sm:$0xff]
  %v137 = vld [vmem:[%s1 + $0x308] sm:$0xff]
  %v138 = vld [vmem:[%s1 + $0x310] sm:$0xff]
  %v139 = vld [vmem:[%s1 + $0x318] sm:$0xff]
  %v140 = vld [vmem:[%s1 + $0x320] sm:$0xff]
  %v141 = vld [vmem:[%s1 + $0x328] sm:$0xff]
  %v142 = vld [vmem:[%s1 + $0x330] sm:$0xff]
  %v143 = vld [vmem:[%s1 + $0x338] sm:$0xff]
  %v144 = vld [vmem:[%s1 + $0x340] sm:$0xff]
  %v145 = vld [vmem:[%s1 + $0x348] sm:$0xff]
  %v146 = vld [vmem:[%s1 + $0x350] sm:$0xff]
  %v147 = vld [vmem:[%s1 + $0x358] sm:$0xff]
  %v148 = vld [vmem:[%s1 + $0x360] sm:$0xff]
  %v149 = vld [vmem:[%s1 + $0x368] sm:$0xff]
  %v150 = vld [vmem:[%s1 + $0x370] sm:$0xff]
  %v151 = vld [vmem:[%s1 + $0x378] sm:$0xff]
  %v152 = vld [vmem:[%s1 + $0x380] sm:$0xff]
  %v153 = vld [vmem:[%s1 + $0x388] sm:$0xff]
  %v154 = vld [vmem:[%s1 + $0x390] sm:$0xff]
  %v155 = vld [vmem:[%s1 + $0x398] sm:$0xff]
  %v156 = vld [vmem:[%s1 + $0x3a0] sm:$0xff]
  %v157 = vld [vmem:[%s1 + $0x3a8] sm:$0xff]
  %v158 = vld [vmem:[%s1 + $0x3b0] sm:$0xff]
  %v159 = vld [vmem:[%s1 + $0x3b8] sm:$0xff]
  %v160 = vld [vmem:[%s1 + $0x3c0] sm:$0xff]
  %v161 = vld [vmem:[%s1 + $0x3c8] sm:$0xff]
  %v162 = vld [vmem:[%s1 + $0x3d0] sm:$0xff]
  %v163 = vld [vmem:[%s1 + $0x3d8] sm:$0xff]
  %v164 = vld [vmem:[%s1 + $0x3e0] sm:$0xff]
  %v165 = vld [vmem:[%s1 + $0x3e8] sm:$0xff]
  %v166 = vld [vmem:[%s1 + $0x3f0] sm:$0xff]
  %v167 = vld [vmem:[%s1 + $0x3f8] sm:$0xff]
  %v168 = vld [vmem:[%s1 + $0x400] sm:$0xff]
  %v169 = vld [vmem:[%s1 + $0x408] sm:$0xff]
  %v170 = vld [vmem:[%s1 + $0x410] sm:$0xff]
  %v171 = vld [vmem:[%s1 + $0x418] sm:$0xff]
  %v172 = vld [vmem:[%s1 + $0x420] sm:$0xff]
  %v173 = vld [vmem:[%s1 + $0x428] sm:$0xff]
  %v174 = vld [vmem:[%s1 + $0x430] sm:$0xff]
  %v175 = vld [vmem:[%s1 + $0x438] sm:$0xff]
  %v176 = vld [vmem:[%s1 + $0x440] sm:$0xff]
  %v177 = vld [vmem:[%s1 + $0x448] sm:$0xff]
  %v178 = vld [vmem:[%s1 + $0x450] sm:$0xff]
  %v179 = vld [vmem:[%s1 + $0x458] sm:$0xff]
  %v180 = vld [vmem:[%s1 + $0x460] sm:$0xff]
  %v181 = vld [vmem:[%s1 + $0x468] sm:$0xff]
  %v182 = vld [vmem:[%s1 + $0x470] sm:$0xff]
  %v183 = vld [vmem:[%s1 + $0x478] sm:$0xff]
  %v184 = vld [vmem:[%s1 + $0x480] sm:$0xff]
  %v185 = vld [vmem:[%s1 + $0x488] sm:$0xff]
  %v186 = vld [vmem:[%s1 + $0x490] sm:$0xff]
  %v187 = vld [vmem:[%s1 + $0x498] sm:$0xff]
  %v188 = vld [vmem:[%s1 + $0x4a0] sm:$0xff]
  %v189 = vld [vmem:[%s1 + $0x4a8] sm:$0xff]
  %v190 = vld [vmem:[%s1 + $0x4b0] sm:$0xff]
  %v191 = vld [vmem:[%s1 + $0x4b8] sm:$0xff]
  %v192 = vld [vmem:[%s1 + $0x4c0] sm:$0xff]
  %v193 = vld [vmem:[%s1 + $0x4c8] sm:$0xff]
  %v194 = vld [vmem:[%s1 + $0x4d0] sm:$0xff]
  %v195 = vld [vmem:[%s1 + $0x4d8] sm:$0xff]
  %v196 = vld [vmem:[%s1 + $0x4e0] sm:$0xff]
  %v197 = vld [vmem:[%s1 + $0x4e8] sm:$0xff]
  %v198 = vld [vmem:[%s1 + $0x4f0] sm:$0xff]
  %v199 = vld [vmem:[%s1 + $0x4f8] sm:$0xff]
  %v200 = vld [vmem:[%s1 + $0x500] sm:$0xff]
  %v201 = vld [vmem:[%s1 + $0x508] sm:$0xff]
  %v202 = vld [vmem:[%s1 + $0x510] sm:$0xff]
  %v203 = vld [vmem:[%s1 + $0x518] sm:$0xff]
  %v204 = vld [vmem:[%s1 + $0x520] sm:$0xff]
  %v205 = vld [vmem:[%s1 + $0x528] sm:$0xff]
  %v206 = vld [vmem:[%s1 + $0x530] sm:$0xff]
  %v207 = vld [vmem:[%s1 + $0x538] sm:$0xff]
  %v208 = vld [vmem:[%s1 + $0x540] sm:$0xff]
  %v209 = vld [vmem:[%s1 + $0x548] sm:$0xff]
  %v210 = vld [vmem:[%s1 + $0x550] sm:$0xff]
  %v211 = vld [vmem:[%s1 + $0x558] sm:$0xff]
  %v212 = vld [vmem:[%s1 + $0x560] sm:$0xff]
  %v213 = vld [vmem:[%s1 + $0x568] sm:$0xff]
  %v214 = vld [vmem:[%s1 + $0x570] sm:$0xff]
  %v215 = vld [vmem:[%s1 + $0x578] sm:$0xff]
  %v216 = vld [vmem:[%s1 + $0x580] sm:$0xff]
  %v217 = vld [vmem:[%s1 + $0x588] sm:$0xff]
  %v218 = vld [vmem:[%s1 + $0x590] sm:$0xff]
  %v219 = vld [vmem:[%s1 + $0x598] sm:$0xff]
  %v220 = vld [vmem:[%s1 + $0x5a0] sm:$0xff]
  %v221 = vld [vmem:[%s1 + $0x5a8] sm:$0xff]
  %v222 = vld [vmem:[%s1 + $0x5b0] sm:$0xff]
  %v223 = vld [vmem:[%s1 + $0x5b8] sm:$0xff]
  %v224 = vld [vmem:[%s1 + $0x5c0] sm:$0xff]
  %v225 = vld [vmem:[%s1 + $0x5c8] sm:$0xff]
  %v226 = vld [vmem:[%s1 + $0x5d0] sm:$0xff]
  %v227 = vld [vmem:[%s1 + $0x5d8] sm:$0xff]
  %v228 = vld [vmem:[%s1 + $0x5e0] sm:$0xff]
  %v229 = vld [vmem:[%s1 + $0x5e8] sm:$0xff]
  %v230 = vld [vmem:[%s1 + $0x5f0] sm:$0xff]
  %v231 = vld [vmem:[%s1 + $0x5f8] sm:$0xff]
  %v234 = vcombine.high %v38, %v38
  %v236 = vunpack.c.l.s4 1983009808
  %v237 = vunpack.c.0.s8 %v236
  %v238 = vlaneseq
  %v239 = vshrl.u32 %v238, 7
  %v240 = vsub.s32 %v237, %v239
  %v241 = vrot.slane %v38, %v240
  %v243 = vunpack.c.l.s4 1983009808
  %v244 = vunpack.c.0.s8 %v243
  %v245 = vlaneseq
  %v246 = vshrl.u32 %v245, 7
  %v247 = vsub.s32 %v244, %v246
  %v248 = vrot.slane %v234, %v247
  %v249 = vcombine.high %v241, %v241
  %v250 = vcombine.high %v248, %v248
  %v252 = vunpack.c.l.s4 1983009808
  %v253 = vunpack.c.0.s8 %v252
  %v254 = vlaneseq
  %v255 = vshrl.u32 %v254, 7
  %v256 = vsub.s32 %v253, %v255
  %v257 = vrot.slane %v39, %v256
  %v258 = vcombine.high %v257, %v257
  %265 = vmatprep.subr.mxu0 %v71
  %266 = vmatpush1.msra.mxu0 %v70
  %267 = vmatprep.subr.mxu0 %v69
  %268 = vmatpush1.msra.mxu0 %v68
  %269 = vmatprep.subr.mxu0 %v67
  %270 = vmatpush1.msra.mxu0 %v66
  %271 = vmatprep.subr.mxu0 %v65
  %272 = vmatpush1.msra.mxu0 %v64
  %273 = vmatprep.subr.mxu0 %v63
  %274 = vmatpush1.msra.mxu0 %v62
  %275 = vmatprep.subr.mxu0 %v61
  %276 = vmatpush1.msra.mxu0 %v60
  %277 = vmatprep.subr.mxu0 %v59
  %278 = vmatpush1.msra.mxu0 %v58
  %279 = vmatprep.subr.mxu0 %v57
  %280 = vmatpush1.msra.mxu0 %v56
  %281 = vmatprep.subr.mxu0 %v55
  %282 = vmatpush1.msra.mxu0 %v54
  %283 = vmatprep.subr.mxu0 %v53
  %284 = vmatpush1.msra.mxu0 %v52
  %285 = vmatprep.subr.mxu0 %v51
  %286 = vmatpush1.msra.mxu0 %v50
  %287 = vmatprep.subr.mxu0 %v49
  %288 = vmatpush1.msra.mxu0 %v48
  %289 = vmatprep.subr.mxu0 %v47
  %290 = vmatpush1.msra.mxu0 %v46
  %291 = vmatprep.subr.mxu0 %v45
  %292 = vmatpush1.msra.mxu0 %v44
  %293 = vmatprep.subr.mxu0 %v43
  %294 = vmatpush1.msra.mxu0 %v42
  %295 = vmatprep.subr.mxu0 %v41
  %296 = vmatpush1.msra.mxu0 %v40
  %297 = vmatprep.subr.mxu0 %v103
  %298 = vmatpush2.msra.mxu0 %v102
  %299 = vmatprep.subr.mxu0 %v101
  %300 = vmatpush2.msra.mxu0 %v100
  %301 = vmatprep.subr.mxu0 %v99
  %302 = vmatpush2.msra.mxu0 %v98
  %303 = vmatprep.subr.mxu0 %v97
  %304 = vmatpush2.msra.mxu0 %v96
  %305 = vmatprep.subr.mxu0 %v95
  %306 = vmatpush2.msra.mxu0 %v94
  %307 = vmatprep.subr.mxu0 %v93
  %308 = vmatpush2.msra.mxu0 %v92
  %309 = vmatprep.subr.mxu0 %v91
  %310 = vmatpush2.msra.mxu0 %v90
  %311 = vmatprep.subr.mxu0 %v89
  %312 = vmatpush2.msra.mxu0 %v88
  %313 = vmatprep.subr.mxu0 %v87
  %314 = vmatpush2.msra.mxu0 %v86
  %315 = vmatprep.subr.mxu0 %v85
  %316 = vmatpush2.msra.mxu0 %v84
  %317 = vmatprep.subr.mxu0 %v83
  %318 = vmatpush2.msra.mxu0 %v82
  %319 = vmatprep.subr.mxu0 %v81
  %320 = vmatpush2.msra.mxu0 %v80
  %321 = vmatprep.subr.mxu0 %v79
  %322 = vmatpush2.msra.mxu0 %v78
  %323 = vmatprep.subr.mxu0 %v77
  %324 = vmatpush2.msra.mxu0 %v76
  %325 = vmatprep.subr.mxu0 %v75
  %326 = vmatpush2.msra.mxu0 %v74
  %327 = vmatprep.subr.mxu0 %v73
  %328 = vmatpush2.msra.mxu0 %v72
  %329 = vmatprep.mubr.f32.mxu0 %v249
  %330 = vmatmul.mubr.f32.gmra.mxu0 %v241
  %v331 = vpop.f32.mrf.mxu0
  %v332 = vadd.f32 0.0, %v331
  %v333 = vpop.f32.mrf.mxu0
  %v334 = vadd.f32 0.0, %v333
  %335 = vdwg.mxu0
  %336 = vmatprep.subr.mxu0 %v135
  %337 = vmatpush1.msra.mxu0 %v134
  %338 = vmatprep.subr.mxu0 %v133
  %339 = vmatpush1.msra.mxu0 %v132
  %340 = vmatprep.subr.mxu0 %v131
  %341 = vmatpush1.msra.mxu0 %v130
  %342 = vmatprep.subr.mxu0 %v129
  %343 = vmatpush1.msra.mxu0 %v128
  %344 = vmatprep.subr.mxu0 %v127
  %345 = vmatpush1.msra.mxu0 %v126
  %346 = vmatprep.subr.mxu0 %v125
  %347 = vmatpush1.msra.mxu0 %v124
  %348 = vmatprep.subr.mxu0 %v123
  %349 = vmatpush1.msra.mxu0 %v122
  %350 = vmatprep.subr.mxu0 %v121
  %351 = vmatpush1.msra.mxu0 %v120
  %352 = vmatprep.subr.mxu0 %v119
  %353 = vmatpush1.msra.mxu0 %v118
  %354 = vmatprep.subr.mxu0 %v117
  %355 = vmatpush1.msra.mxu0 %v116
  %356 = vmatprep.subr.mxu0 %v115
  %357 = vmatpush1.msra.mxu0 %v114
  %358 = vmatprep.subr.mxu0 %v113
  %359 = vmatpush1.msra.mxu0 %v112
  %360 = vmatprep.subr.mxu0 %v111
  %361 = vmatpush1.msra.mxu0 %v110
  %362 = vmatprep.subr.mxu0 %v109
  %363 = vmatpush1.msra.mxu0 %v108
  %364 = vmatprep.subr.mxu0 %v107
  %365 = vmatpush1.msra.mxu0 %v106
  %366 = vmatprep.subr.mxu0 %v105
  %367 = vmatpush1.msra.mxu0 %v104
  %368 = vmatprep.subr.mxu0 %v167
  %369 = vmatpush2.msra.mxu0 %v166
  %370 = vmatprep.subr.mxu0 %v165
  %371 = vmatpush2.msra.mxu0 %v164
  %372 = vmatprep.subr.mxu0 %v163
  %373 = vmatpush2.msra.mxu0 %v162
  %374 = vmatprep.subr.mxu0 %v161
  %375 = vmatpush2.msra.mxu0 %v160
  %376 = vmatprep.subr.mxu0 %v159
  %377 = vmatpush2.msra.mxu0 %v158
  %378 = vmatprep.subr.mxu0 %v157
  %379 = vmatpush2.msra.mxu0 %v156
  %380 = vmatprep.subr.mxu0 %v155
  %381 = vmatpush2.msra.mxu0 %v154
  %382 = vmatprep.subr.mxu0 %v153
  %383 = vmatpush2.msra.mxu0 %v152
  %384 = vmatprep.subr.mxu0 %v151
  %385 = vmatpush2.msra.mxu0 %v150
  %386 = vmatprep.subr.mxu0 %v149
  %387 = vmatpush2.msra.mxu0 %v148
  %388 = vmatprep.subr.mxu0 %v147
  %389 = vmatpush2.msra.mxu0 %v146
  %390 = vmatprep.subr.mxu0 %v145
  %391 = vmatpush2.msra.mxu0 %v144
  %392 = vmatprep.subr.mxu0 %v143
  %393 = vmatpush2.msra.mxu0 %v142
  %394 = vmatprep.subr.mxu0 %v141
  %395 = vmatpush2.msra.mxu0 %v140
  %396 = vmatprep.subr.mxu0 %v139
  %397 = vmatpush2.msra.mxu0 %v138
  %398 = vmatprep.subr.mxu0 %v137
  %399 = vmatpush2.msra.mxu0 %v136
  %400 = vmatprep.mubr.f32.mxu0 %v250
  %401 = vmatmul.mubr.f32.gmra.mxu0 %v248
  %v402 = vpop.f32.mrf.mxu0
  %v403 = vadd.f32 %v332, %v402
  %v404 = vpop.f32.mrf.mxu0
  %v405 = vadd.f32 %v334, %v404
  %406 = vdwg.mxu0
  %407 = vmatprep.subr.mxu0 %v199
  %408 = vmatpush1.msra.mxu0 %v198
  %409 = vmatprep.subr.mxu0 %v197
  %410 = vmatpush1.msra.mxu0 %v196
  %411 = vmatprep.subr.mxu0 %v195
  %412 = vmatpush1.msra.mxu0 %v194
  %413 = vmatprep.subr.mxu0 %v193
  %414 = vmatpush1.msra.mxu0 %v192
  %415 = vmatprep.subr.mxu0 %v191
  %416 = vmatpush1.msra.mxu0 %v190
  %417 = vmatprep.subr.mxu0 %v189
  %418 = vmatpush1.msra.mxu0 %v188
  %419 = vmatprep.subr.mxu0 %v187
  %420 = vmatpush1.msra.mxu0 %v186
  %421 = vmatprep.subr.mxu0 %v185
  %422 = vmatpush1.msra.mxu0 %v184
  %423 = vmatprep.subr.mxu0 %v183
  %424 = vmatpush1.msra.mxu0 %v182
  %425 = vmatprep.subr.mxu0 %v181
  %426 = vmatpush1.msra.mxu0 %v180
  %427 = vmatprep.subr.mxu0 %v179
  %428 = vmatpush1.msra.mxu0 %v178
  %429 = vmatprep.subr.mxu0 %v177
  %430 = vmatpush1.msra.mxu0 %v176
  %431 = vmatprep.subr.mxu0 %v175
  %432 = vmatpush1.msra.mxu0 %v174
  %433 = vmatprep.subr.mxu0 %v173
  %434 = vmatpush1.msra.mxu0 %v172
  %435 = vmatprep.subr.mxu0 %v171
  %436 = vmatpush1.msra.mxu0 %v170
  %437 = vmatprep.subr.mxu0 %v169
  %438 = vmatpush1.msra.mxu0 %v168
  %439 = vmatprep.subr.mxu0 %v231
  %440 = vmatpush2.msra.mxu0 %v230
  %441 = vmatprep.subr.mxu0 %v229
  %442 = vmatpush2.msra.mxu0 %v228
  %443 = vmatprep.subr.mxu0 %v227
  %444 = vmatpush2.msra.mxu0 %v226
  %445 = vmatprep.subr.mxu0 %v225
  %446 = vmatpush2.msra.mxu0 %v224
  %447 = vmatprep.subr.mxu0 %v223
  %448 = vmatpush2.msra.mxu0 %v222
  %449 = vmatprep.subr.mxu0 %v221
  %450 = vmatpush2.msra.mxu0 %v220
  %451 = vmatprep.subr.mxu0 %v219
  %452 = vmatpush2.msra.mxu0 %v218
  %453 = vmatprep.subr.mxu0 %v217
  %454 = vmatpush2.msra.mxu0 %v216
  %455 = vmatprep.subr.mxu0 %v215
  %456 = vmatpush2.msra.mxu0 %v214
  %457 = vmatprep.subr.mxu0 %v213
  %458 = vmatpush2.msra.mxu0 %v212
  %459 = vmatprep.subr.mxu0 %v211
  %460 = vmatpush2.msra.mxu0 %v210
  %461 = vmatprep.subr.mxu0 %v209
  %462 = vmatpush2.msra.mxu0 %v208
  %463 = vmatprep.subr.mxu0 %v207
  %464 = vmatpush2.msra.mxu0 %v206
  %465 = vmatprep.subr.mxu0 %v205
  %466 = vmatpush2.msra.mxu0 %v204
  %467 = vmatprep.subr.mxu0 %v203
  %468 = vmatpush2.msra.mxu0 %v202
  %469 = vmatprep.subr.mxu0 %v201
  %470 = vmatpush2.msra.mxu0 %v200
  %471 = vmatprep.mubr.f32.mxu0 %v258
  %472 = vmatmul.mubr.f32.gmra.mxu0 %v257
  %v473 = vpop.f32.mrf.mxu0
  %v474 = vadd.f32 %v403, %v473
  %v475 = vpop.f32.mrf.mxu0
  %v476 = vadd.f32 %v405, %v475
  %477 = vdwg.mxu0
  %s478 = scalar_lea.vmem %s1, 1536
  %v479 = vld [vmem:[%s478] sm:$0xff]
  %v480 = vld [vmem:[%s478 + $0x8] sm:$0xff]
  %v481 = vld [vmem:[%s478 + $0x10] sm:$0xff]
  %v482 = vld [vmem:[%s478 + $0x18] sm:$0xff]
  %v483 = vld [vmem:[%s478 + $0x20] sm:$0xff]
  %v484 = vld [vmem:[%s478 + $0x28] sm:$0xff]
  %v485 = vld [vmem:[%s478 + $0x30] sm:$0xff]
  %v486 = vld [vmem:[%s478 + $0x38] sm:$0xff]
  %v487 = vld [vmem:[%s478 + $0x40] sm:$0xff]
  %v488 = vld [vmem:[%s478 + $0x48] sm:$0xff]
  %v489 = vld [vmem:[%s478 + $0x50] sm:$0xff]
  %v490 = vld [vmem:[%s478 + $0x58] sm:$0xff]
  %v491 = vld [vmem:[%s478 + $0x60] sm:$0xff]
  %v492 = vld [vmem:[%s478 + $0x68] sm:$0xff]
  %v493 = vld [vmem:[%s478 + $0x70] sm:$0xff]
  %v494 = vld [vmem:[%s478 + $0x78] sm:$0xff]
  %v495 = vld [vmem:[%s478 + $0x80] sm:$0xff]
  %v496 = vld [vmem:[%s478 + $0x88] sm:$0xff]
  %v497 = vld [vmem:[%s478 + $0x90] sm:$0xff]
  %v498 = vld [vmem:[%s478 + $0x98] sm:$0xff]
  %v499 = vld [vmem:[%s478 + $0xa0] sm:$0xff]
  %v500 = vld [vmem:[%s478 + $0xa8] sm:$0xff]
  %v501 = vld [vmem:[%s478 + $0xb0] sm:$0xff]
  %v502 = vld [vmem:[%s478 + $0xb8] sm:$0xff]
  %v503 = vld [vmem:[%s478 + $0xc0] sm:$0xff]
  %v504 = vld [vmem:[%s478 + $0xc8] sm:$0xff]
  %v505 = vld [vmem:[%s478 + $0xd0] sm:$0xff]
  %v506 = vld [vmem:[%s478 + $0xd8] sm:$0xff]
  %v507 = vld [vmem:[%s478 + $0xe0] sm:$0xff]
  %v508 = vld [vmem:[%s478 + $0xe8] sm:$0xff]
  %v509 = vld [vmem:[%s478 + $0xf0] sm:$0xff]
  %v510 = vld [vmem:[%s478 + $0xf8] sm:$0xff]
  %v511 = vld [vmem:[%s478 + $0x100] sm:$0xff]
  %v512 = vld [vmem:[%s478 + $0x108] sm:$0xff]
  %v513 = vld [vmem:[%s478 + $0x110] sm:$0xff]
  %v514 = vld [vmem:[%s478 + $0x118] sm:$0xff]
  %v515 = vld [vmem:[%s478 + $0x120] sm:$0xff]
  %v516 = vld [vmem:[%s478 + $0x128] sm:$0xff]
  %v517 = vld [vmem:[%s478 + $0x130] sm:$0xff]
  %v518 = vld [vmem:[%s478 + $0x138] sm:$0xff]
  %v519 = vld [vmem:[%s478 + $0x140] sm:$0xff]
  %v520 = vld [vmem:[%s478 + $0x148] sm:$0xff]
  %v521 = vld [vmem:[%s478 + $0x150] sm:$0xff]
  %v522 = vld [vmem:[%s478 + $0x158] sm:$0xff]
  %v523 = vld [vmem:[%s478 + $0x160] sm:$0xff]
  %v524 = vld [vmem:[%s478 + $0x168] sm:$0xff]
  %v525 = vld [vmem:[%s478 + $0x170] sm:$0xff]
  %v526 = vld [vmem:[%s478 + $0x178] sm:$0xff]
  %v527 = vld [vmem:[%s478 + $0x180] sm:$0xff]
  %v528 = vld [vmem:[%s478 + $0x188] sm:$0xff]
  %v529 = vld [vmem:[%s478 + $0x190] sm:$0xff]
  %v530 = vld [vmem:[%s478 + $0x198] sm:$0xff]
  %v531 = vld [vmem:[%s478 + $0x1a0] sm:$0xff]
  %v532 = vld [vmem:[%s478 + $0x1a8] sm:$0xff]
  %v533 = vld [vmem:[%s478 + $0x1b0] sm:$0xff]
  %v534 = vld [vmem:[%s478 + $0x1b8] sm:$0xff]
  %v535 = vld [vmem:[%s478 + $0x1c0] sm:$0xff]
  %v536 = vld [vmem:[%s478 + $0x1c8] sm:$0xff]
  %v537 = vld [vmem:[%s478 + $0x1d0] sm:$0xff]
  %v538 = vld [vmem:[%s478 + $0x1d8] sm:$0xff]
  %v539 = vld [vmem:[%s478 + $0x1e0] sm:$0xff]
  %v540 = vld [vmem:[%s478 + $0x1e8] sm:$0xff]
  %v541 = vld [vmem:[%s478 + $0x1f0] sm:$0xff]
  %v542 = vld [vmem:[%s478 + $0x1f8] sm:$0xff]
  %v543 = vld [vmem:[%s478 + $0x200] sm:$0xff]
  %v544 = vld [vmem:[%s478 + $0x208] sm:$0xff]
  %v545 = vld [vmem:[%s478 + $0x210] sm:$0xff]
  %v546 = vld [vmem:[%s478 + $0x218] sm:$0xff]
  %v547 = vld [vmem:[%s478 + $0x220] sm:$0xff]
  %v548 = vld [vmem:[%s478 + $0x228] sm:$0xff]
  %v549 = vld [vmem:[%s478 + $0x230] sm:$0xff]
  %v550 = vld [vmem:[%s478 + $0x238] sm:$0xff]
  %v551 = vld [vmem:[%s478 + $0x240] sm:$0xff]
  %v552 = vld [vmem:[%s478 + $0x248] sm:$0xff]
  %v553 = vld [vmem:[%s478 + $0x250] sm:$0xff]
  %v554 = vld [vmem:[%s478 + $0x258] sm:$0xff]
  %v555 = vld [vmem:[%s478 + $0x260] sm:$0xff]
  %v556 = vld [vmem:[%s478 + $0x268] sm:$0xff]
  %v557 = vld [vmem:[%s478 + $0x270] sm:$0xff]
  %v558 = vld [vmem:[%s478 + $0x278] sm:$0xff]
  %v559 = vld [vmem:[%s478 + $0x280] sm:$0xff]
  %v560 = vld [vmem:[%s478 + $0x288] sm:$0xff]
  %v561 = vld [vmem:[%s478 + $0x290] sm:$0xff]
  %v562 = vld [vmem:[%s478 + $0x298] sm:$0xff]
  %v563 = vld [vmem:[%s478 + $0x2a0] sm:$0xff]
  %v564 = vld [vmem:[%s478 + $0x2a8] sm:$0xff]
  %v565 = vld [vmem:[%s478 + $0x2b0] sm:$0xff]
  %v566 = vld [vmem:[%s478 + $0x2b8] sm:$0xff]
  %v567 = vld [vmem:[%s478 + $0x2c0] sm:$0xff]
  %v568 = vld [vmem:[%s478 + $0x2c8] sm:$0xff]
  %v569 = vld [vmem:[%s478 + $0x2d0] sm:$0xff]
  %v570 = vld [vmem:[%s478 + $0x2d8] sm:$0xff]
  %v571 = vld [vmem:[%s478 + $0x2e0] sm:$0xff]
  %v572 = vld [vmem:[%s478 + $0x2e8] sm:$0xff]
  %v573 = vld [vmem:[%s478 + $0x2f0] sm:$0xff]
  %v574 = vld [vmem:[%s478 + $0x2f8] sm:$0xff]
  %v575 = vld [vmem:[%s478 + $0x300] sm:$0xff]
  %v576 = vld [vmem:[%s478 + $0x308] sm:$0xff]
  %v577 = vld [vmem:[%s478 + $0x310] sm:$0xff]
  %v578 = vld [vmem:[%s478 + $0x318] sm:$0xff]
  %v579 = vld [vmem:[%s478 + $0x320] sm:$0xff]
  %v580 = vld [vmem:[%s478 + $0x328] sm:$0xff]
  %v581 = vld [vmem:[%s478 + $0x330] sm:$0xff]
  %v582 = vld [vmem:[%s478 + $0x338] sm:$0xff]
  %v583 = vld [vmem:[%s478 + $0x340] sm:$0xff]
  %v584 = vld [vmem:[%s478 + $0x348] sm:$0xff]
  %v585 = vld [vmem:[%s478 + $0x350] sm:$0xff]
  %v586 = vld [vmem:[%s478 + $0x358] sm:$0xff]
  %v587 = vld [vmem:[%s478 + $0x360] sm:$0xff]
  %v588 = vld [vmem:[%s478 + $0x368] sm:$0xff]
  %v589 = vld [vmem:[%s478 + $0x370] sm:$0xff]
  %v590 = vld [vmem:[%s478 + $0x378] sm:$0xff]
  %v591 = vld [vmem:[%s478 + $0x380] sm:$0xff]
  %v592 = vld [vmem:[%s478 + $0x388] sm:$0xff]
  %v593 = vld [vmem:[%s478 + $0x390] sm:$0xff]
  %v594 = vld [vmem:[%s478 + $0x398] sm:$0xff]
  %v595 = vld [vmem:[%s478 + $0x3a0] sm:$0xff]
  %v596 = vld [vmem:[%s478 + $0x3a8] sm:$0xff]
  %v597 = vld [vmem:[%s478 + $0x3b0] sm:$0xff]
  %v598 = vld [vmem:[%s478 + $0x3b8] sm:$0xff]
  %v599 = vld [vmem:[%s478 + $0x3c0] sm:$0xff]
  %v600 = vld [vmem:[%s478 + $0x3c8] sm:$0xff]
  %v601 = vld [vmem:[%s478 + $0x3d0] sm:$0xff]
  %v602 = vld [vmem:[%s478 + $0x3d8] sm:$0xff]
  %v603 = vld [vmem:[%s478 + $0x3e0] sm:$0xff]
  %v604 = vld [vmem:[%s478 + $0x3e8] sm:$0xff]
  %v605 = vld [vmem:[%s478 + $0x3f0] sm:$0xff]
  %v606 = vld [vmem:[%s478 + $0x3f8] sm:$0xff]
  %v607 = vld [vmem:[%s478 + $0x400] sm:$0xff]
  %v608 = vld [vmem:[%s478 + $0x408] sm:$0xff]
  %v609 = vld [vmem:[%s478 + $0x410] sm:$0xff]
  %v610 = vld [vmem:[%s478 + $0x418] sm:$0xff]
  %v611 = vld [vmem:[%s478 + $0x420] sm:$0xff]
  %v612 = vld [vmem:[%s478 + $0x428] sm:$0xff]
  %v613 = vld [vmem:[%s478 + $0x430] sm:$0xff]
  %v614 = vld [vmem:[%s478 + $0x438] sm:$0xff]
  %v615 = vld [vmem:[%s478 + $0x440] sm:$0xff]
  %v616 = vld [vmem:[%s478 + $0x448] sm:$0xff]
  %v617 = vld [vmem:[%s478 + $0x450] sm:$0xff]
  %v618 = vld [vmem:[%s478 + $0x458] sm:$0xff]
  %v619 = vld [vmem:[%s478 + $0x460] sm:$0xff]
  %v620 = vld [vmem:[%s478 + $0x468] sm:$0xff]
  %v621 = vld [vmem:[%s478 + $0x470] sm:$0xff]
  %v622 = vld [vmem:[%s478 + $0x478] sm:$0xff]
  %v623 = vld [vmem:[%s478 + $0x480] sm:$0xff]
  %v624 = vld [vmem:[%s478 + $0x488] sm:$0xff]
  %v625 = vld [vmem:[%s478 + $0x490] sm:$0xff]
  %v626 = vld [vmem:[%s478 + $0x498] sm:$0xff]
  %v627 = vld [vmem:[%s478 + $0x4a0] sm:$0xff]
  %v628 = vld [vmem:[%s478 + $0x4a8] sm:$0xff]
  %v629 = vld [vmem:[%s478 + $0x4b0] sm:$0xff]
  %v630 = vld [vmem:[%s478 + $0x4b8] sm:$0xff]
  %v631 = vld [vmem:[%s478 + $0x4c0] sm:$0xff]
  %v632 = vld [vmem:[%s478 + $0x4c8] sm:$0xff]
  %v633 = vld [vmem:[%s478 + $0x4d0] sm:$0xff]
  %v634 = vld [vmem:[%s478 + $0x4d8] sm:$0xff]
  %v635 = vld [vmem:[%s478 + $0x4e0] sm:$0xff]
  %v636 = vld [vmem:[%s478 + $0x4e8] sm:$0xff]
  %v637 = vld [vmem:[%s478 + $0x4f0] sm:$0xff]
  %v638 = vld [vmem:[%s478 + $0x4f8] sm:$0xff]
  %v639 = vld [vmem:[%s478 + $0x500] sm:$0xff]
  %v640 = vld [vmem:[%s478 + $0x508] sm:$0xff]
  %v641 = vld [vmem:[%s478 + $0x510] sm:$0xff]
  %v642 = vld [vmem:[%s478 + $0x518] sm:$0xff]
  %v643 = vld [vmem:[%s478 + $0x520] sm:$0xff]
  %v644 = vld [vmem:[%s478 + $0x528] sm:$0xff]
  %v645 = vld [vmem:[%s478 + $0x530] sm:$0xff]
  %v646 = vld [vmem:[%s478 + $0x538] sm:$0xff]
  %v647 = vld [vmem:[%s478 + $0x540] sm:$0xff]
  %v648 = vld [vmem:[%s478 + $0x548] sm:$0xff]
  %v649 = vld [vmem:[%s478 + $0x550] sm:$0xff]
  %v650 = vld [vmem:[%s478 + $0x558] sm:$0xff]
  %v651 = vld [vmem:[%s478 + $0x560] sm:$0xff]
  %v652 = vld [vmem:[%s478 + $0x568] sm:$0xff]
  %v653 = vld [vmem:[%s478 + $0x570] sm:$0xff]
  %v654 = vld [vmem:[%s478 + $0x578] sm:$0xff]
  %v655 = vld [vmem:[%s478 + $0x580] sm:$0xff]
  %v656 = vld [vmem:[%s478 + $0x588] sm:$0xff]
  %v657 = vld [vmem:[%s478 + $0x590] sm:$0xff]
  %v658 = vld [vmem:[%s478 + $0x598] sm:$0xff]
  %v659 = vld [vmem:[%s478 + $0x5a0] sm:$0xff]
  %v660 = vld [vmem:[%s478 + $0x5a8] sm:$0xff]
  %v661 = vld [vmem:[%s478 + $0x5b0] sm:$0xff]
  %v662 = vld [vmem:[%s478 + $0x5b8] sm:$0xff]
  %v663 = vld [vmem:[%s478 + $0x5c0] sm:$0xff]
  %v664 = vld [vmem:[%s478 + $0x5c8] sm:$0xff]
  %v665 = vld [vmem:[%s478 + $0x5d0] sm:$0xff]
  %v666 = vld [vmem:[%s478 + $0x5d8] sm:$0xff]
  %v667 = vld [vmem:[%s478 + $0x5e0] sm:$0xff]
  %v668 = vld [vmem:[%s478 + $0x5e8] sm:$0xff]
  %v669 = vld [vmem:[%s478 + $0x5f0] sm:$0xff]
  %v670 = vld [vmem:[%s478 + $0x5f8] sm:$0xff]
  %671 = vmatprep.subr.mxu0 %v510
  %672 = vmatpush1.msra.mxu0 %v509
  %673 = vmatprep.subr.mxu0 %v508
  %674 = vmatpush1.msra.mxu0 %v507
  %675 = vmatprep.subr.mxu0 %v506
  %676 = vmatpush1.msra.mxu0 %v505
  %677 = vmatprep.subr.mxu0 %v504
  %678 = vmatpush1.msra.mxu0 %v503
  %679 = vmatprep.subr.mxu0 %v502
  %680 = vmatpush1.msra.mxu0 %v501
  %681 = vmatprep.subr.mxu0 %v500
  %682 = vmatpush1.msra.mxu0 %v499
  %683 = vmatprep.subr.mxu0 %v498
  %684 = vmatpush1.msra.mxu0 %v497
  %685 = vmatprep.subr.mxu0 %v496
  %686 = vmatpush1.msra.mxu0 %v495
  %687 = vmatprep.subr.mxu0 %v494
  %688 = vmatpush1.msra.mxu0 %v493
  %689 = vmatprep.subr.mxu0 %v492
  %690 = vmatpush1.msra.mxu0 %v491
  %691 = vmatprep.subr.mxu0 %v490
  %692 = vmatpush1.msra.mxu0 %v489
  %693 = vmatprep.subr.mxu0 %v488
  %694 = vmatpush1.msra.mxu0 %v487
  %695 = vmatprep.subr.mxu0 %v486
  %696 = vmatpush1.msra.mxu0 %v485
  %697 = vmatprep.subr.mxu0 %v484
  %698 = vmatpush1.msra.mxu0 %v483
  %699 = vmatprep.subr.mxu0 %v482
  %700 = vmatpush1.msra.mxu0 %v481
  %701 = vmatprep.subr.mxu0 %v480
  %702 = vmatpush1.msra.mxu0 %v479
  %703 = vmatprep.subr.mxu0 %v542
  %704 = vmatpush2.msra.mxu0 %v541
  %705 = vmatprep.subr.mxu0 %v540
  %706 = vmatpush2.msra.mxu0 %v539
  %707 = vmatprep.subr.mxu0 %v538
  %708 = vmatpush2.msra.mxu0 %v537
  %709 = vmatprep.subr.mxu0 %v536
  %710 = vmatpush2.msra.mxu0 %v535
  %711 = vmatprep.subr.mxu0 %v534
  %712 = vmatpush2.msra.mxu0 %v533
  %713 = vmatprep.subr.mxu0 %v532
  %714 = vmatpush2.msra.mxu0 %v531
  %715 = vmatprep.subr.mxu0 %v530
  %716 = vmatpush2.msra.mxu0 %v529
  %717 = vmatprep.subr.mxu0 %v528
  %718 = vmatpush2.msra.mxu0 %v527
  %719 = vmatprep.subr.mxu0 %v526
  %720 = vmatpush2.msra.mxu0 %v525
  %721 = vmatprep.subr.mxu0 %v524
  %722 = vmatpush2.msra.mxu0 %v523
  %723 = vmatprep.subr.mxu0 %v522
  %724 = vmatpush2.msra.mxu0 %v521
  %725 = vmatprep.subr.mxu0 %v520
  %726 = vmatpush2.msra.mxu0 %v519
  %727 = vmatprep.subr.mxu0 %v518
  %728 = vmatpush2.msra.mxu0 %v517
  %729 = vmatprep.subr.mxu0 %v516
  %730 = vmatpush2.msra.mxu0 %v515
  %731 = vmatprep.subr.mxu0 %v514
  %732 = vmatpush2.msra.mxu0 %v513
  %733 = vmatprep.subr.mxu0 %v512
  %734 = vmatpush2.msra.mxu0 %v511
  %735 = vmatprep.mubr.f32.mxu0 %v249
  %736 = vmatmul.mubr.f32.gmra.mxu0 %v241
  %v737 = vpop.f32.mrf.mxu0
  %v738 = vadd.f32 0.0, %v737
  %v739 = vpop.f32.mrf.mxu0
  %v740 = vadd.f32 0.0, %v739
  %741 = vdwg.mxu0
  %742 = vmatprep.subr.mxu0 %v574
  %743 = vmatpush1.msra.mxu0 %v573
  %744 = vmatprep.subr.mxu0 %v572
  %745 = vmatpush1.msra.mxu0 %v571
  %746 = vmatprep.subr.mxu0 %v570
  %747 = vmatpush1.msra.mxu0 %v569
  %748 = vmatprep.subr.mxu0 %v568
  %749 = vmatpush1.msra.mxu0 %v567
  %750 = vmatprep.subr.mxu0 %v566
  %751 = vmatpush1.msra.mxu0 %v565
  %752 = vmatprep.subr.mxu0 %v564
  %753 = vmatpush1.msra.mxu0 %v563
  %754 = vmatprep.subr.mxu0 %v562
  %755 = vmatpush1.msra.mxu0 %v561
  %756 = vmatprep.subr.mxu0 %v560
  %757 = vmatpush1.msra.mxu0 %v559
  %758 = vmatprep.subr.mxu0 %v558
  %759 = vmatpush1.msra.mxu0 %v557
  %760 = vmatprep.subr.mxu0 %v556
  %761 = vmatpush1.msra.mxu0 %v555
  %762 = vmatprep.subr.mxu0 %v554
  %763 = vmatpush1.msra.mxu0 %v553
  %764 = vmatprep.subr.mxu0 %v552
  %765 = vmatpush1.msra.mxu0 %v551
  %766 = vmatprep.subr.mxu0 %v550
  %767 = vmatpush1.msra.mxu0 %v549
  %768 = vmatprep.subr.mxu0 %v548
  %769 = vmatpush1.msra.mxu0 %v547
  %770 = vmatprep.subr.mxu0 %v546
  %771 = vmatpush1.msra.mxu0 %v545
  %772 = vmatprep.subr.mxu0 %v544
  %773 = vmatpush1.msra.mxu0 %v543
  %774 = vmatprep.subr.mxu0 %v606
  %775 = vmatpush2.msra.mxu0 %v605
  %776 = vmatprep.subr.mxu0 %v604
  %777 = vmatpush2.msra.mxu0 %v603
  %778 = vmatprep.subr.mxu0 %v602
  %779 = vmatpush2.msra.mxu0 %v601
  %780 = vmatprep.subr.mxu0 %v600
  %781 = vmatpush2.msra.mxu0 %v599
  %782 = vmatprep.subr.mxu0 %v598
  %783 = vmatpush2.msra.mxu0 %v597
  %784 = vmatprep.subr.mxu0 %v596
  %785 = vmatpush2.msra.mxu0 %v595
  %786 = vmatprep.subr.mxu0 %v594
  %787 = vmatpush2.msra.mxu0 %v593
  %788 = vmatprep.subr.mxu0 %v592
  %789 = vmatpush2.msra.mxu0 %v591
  %790 = vmatprep.subr.mxu0 %v590
  %791 = vmatpush2.msra.mxu0 %v589
  %792 = vmatprep.subr.mxu0 %v588
  %793 = vmatpush2.msra.mxu0 %v587
  %794 = vmatprep.subr.mxu0 %v586
  %795 = vmatpush2.msra.mxu0 %v585
  %796 = vmatprep.subr.mxu0 %v584
  %797 = vmatpush2.msra.mxu0 %v583
  %798 = vmatprep.subr.mxu0 %v582
  %799 = vmatpush2.msra.mxu0 %v581
  %800 = vmatprep.subr.mxu0 %v580
  %801 = vmatpush2.msra.mxu0 %v579
  %802 = vmatprep.subr.mxu0 %v578
  %803 = vmatpush2.msra.mxu0 %v577
  %804 = vmatprep.subr.mxu0 %v576
  %805 = vmatpush2.msra.mxu0 %v575
  %806 = vmatprep.mubr.f32.mxu0 %v250
  %807 = vmatmul.mubr.f32.gmra.mxu0 %v248
  %v808 = vpop.f32.mrf.mxu0
  %v809 = vadd.f32 %v738, %v808
  %v810 = vpop.f32.mrf.mxu0
  %v811 = vadd.f32 %v740, %v810
  %812 = vdwg.mxu0
  %813 = vmatprep.subr.mxu0 %v638
  %814 = vmatpush1.msra.mxu0 %v637
  %815 = vmatprep.subr.mxu0 %v636
  %816 = vmatpush1.msra.mxu0 %v635
  %817 = vmatprep.subr.mxu0 %v634
  %818 = vmatpush1.msra.mxu0 %v633
  %819 = vmatprep.subr.mxu0 %v632
  %820 = vmatpush1.msra.mxu0 %v631
  %821 = vmatprep.subr.mxu0 %v630
  %822 = vmatpush1.msra.mxu0 %v629
  %823 = vmatprep.subr.mxu0 %v628
  %824 = vmatpush1.msra.mxu0 %v627
  %825 = vmatprep.subr.mxu0 %v626
  %826 = vmatpush1.msra.mxu0 %v625
  %827 = vmatprep.subr.mxu0 %v624
  %828 = vmatpush1.msra.mxu0 %v623
  %829 = vmatprep.subr.mxu0 %v622
  %830 = vmatpush1.msra.mxu0 %v621
  %831 = vmatprep.subr.mxu0 %v620
  %832 = vmatpush1.msra.mxu0 %v619
  %833 = vmatprep.subr.mxu0 %v618
  %834 = vmatpush1.msra.mxu0 %v617
  %835 = vmatprep.subr.mxu0 %v616
  %836 = vmatpush1.msra.mxu0 %v615
  %837 = vmatprep.subr.mxu0 %v614
  %838 = vmatpush1.msra.mxu0 %v613
  %839 = vmatprep.subr.mxu0 %v612
  %840 = vmatpush1.msra.mxu0 %v611
  %841 = vmatprep.subr.mxu0 %v610
  %842 = vmatpush1.msra.mxu0 %v609
  %843 = vmatprep.subr.mxu0 %v608
  %844 = vmatpush1.msra.mxu0 %v607
  %845 = vmatprep.subr.mxu0 %v670
  %846 = vmatpush2.msra.mxu0 %v669
  %847 = vmatprep.subr.mxu0 %v668
  %848 = vmatpush2.msra.mxu0 %v667
  %849 = vmatprep.subr.mxu0 %v666
  %850 = vmatpush2.msra.mxu0 %v665
  %851 = vmatprep.subr.mxu0 %v664
  %852 = vmatpush2.msra.mxu0 %v663
  %853 = vmatprep.subr.mxu0 %v662
  %854 = vmatpush2.msra.mxu0 %v661
  %855 = vmatprep.subr.mxu0 %v660
  %856 = vmatpush2.msra.mxu0 %v659
  %857 = vmatprep.subr.mxu0 %v658
  %858 = vmatpush2.msra.mxu0 %v657
  %859 = vmatprep.subr.mxu0 %v656
  %860 = vmatpush2.msra.mxu0 %v655
  %861 = vmatprep.subr.mxu0 %v654
  %862 = vmatpush2.msra.mxu0 %v653
  %863 = vmatprep.subr.mxu0 %v652
  %864 = vmatpush2.msra.mxu0 %v651
  %865 = vmatprep.subr.mxu0 %v650
  %866 = vmatpush2.msra.mxu0 %v649
  %867 = vmatprep.subr.mxu0 %v648
  %868 = vmatpush2.msra.mxu0 %v647
  %869 = vmatprep.subr.mxu0 %v646
  %870 = vmatpush2.msra.mxu0 %v645
  %871 = vmatprep.subr.mxu0 %v644
  %872 = vmatpush2.msra.mxu0 %v643
  %873 = vmatprep.subr.mxu0 %v642
  %874 = vmatpush2.msra.mxu0 %v641
  %875 = vmatprep.subr.mxu0 %v640
  %876 = vmatpush2.msra.mxu0 %v639
  %877 = vmatprep.mubr.f32.mxu0 %v258
  %878 = vmatmul.mubr.f32.gmra.mxu0 %v257
  %v879 = vpop.f32.mrf.mxu0
  %v880 = vadd.f32 %v809, %v879
  %v881 = vpop.f32.mrf.mxu0
  %v882 = vadd.f32 %v811, %v881
  %883 = vdwg.mxu0
  %v884 = vmax.f32 %v474, %v880
  %v885 = vmax.f32 %v476, %v882
  %s886 = scalar_lea.vmem %s1, 3072
  %v887 = vld [vmem:[%s886] sm:$0xff]
  %v888 = vld [vmem:[%s886 + $0x8] sm:$0xff]
  %v889 = vld [vmem:[%s886 + $0x10] sm:$0xff]
  %v890 = vld [vmem:[%s886 + $0x18] sm:$0xff]
  %v891 = vld [vmem:[%s886 + $0x20] sm:$0xff]
  %v892 = vld [vmem:[%s886 + $0x28] sm:$0xff]
  %v893 = vld [vmem:[%s886 + $0x30] sm:$0xff]
  %v894 = vld [vmem:[%s886 + $0x38] sm:$0xff]
  %v895 = vld [vmem:[%s886 + $0x40] sm:$0xff]
  %v896 = vld [vmem:[%s886 + $0x48] sm:$0xff]
  %v897 = vld [vmem:[%s886 + $0x50] sm:$0xff]
  %v898 = vld [vmem:[%s886 + $0x58] sm:$0xff]
  %v899 = vld [vmem:[%s886 + $0x60] sm:$0xff]
  %v900 = vld [vmem:[%s886 + $0x68] sm:$0xff]
  %v901 = vld [vmem:[%s886 + $0x70] sm:$0xff]
  %v902 = vld [vmem:[%s886 + $0x78] sm:$0xff]
  %v903 = vld [vmem:[%s886 + $0x80] sm:$0xff]
  %v904 = vld [vmem:[%s886 + $0x88] sm:$0xff]
  %v905 = vld [vmem:[%s886 + $0x90] sm:$0xff]
  %v906 = vld [vmem:[%s886 + $0x98] sm:$0xff]
  %v907 = vld [vmem:[%s886 + $0xa0] sm:$0xff]
  %v908 = vld [vmem:[%s886 + $0xa8] sm:$0xff]
  %v909 = vld [vmem:[%s886 + $0xb0] sm:$0xff]
  %v910 = vld [vmem:[%s886 + $0xb8] sm:$0xff]
  %v911 = vld [vmem:[%s886 + $0xc0] sm:$0xff]
  %v912 = vld [vmem:[%s886 + $0xc8] sm:$0xff]
  %v913 = vld [vmem:[%s886 + $0xd0] sm:$0xff]
  %v914 = vld [vmem:[%s886 + $0xd8] sm:$0xff]
  %v915 = vld [vmem:[%s886 + $0xe0] sm:$0xff]
  %v916 = vld [vmem:[%s886 + $0xe8] sm:$0xff]
  %v917 = vld [vmem:[%s886 + $0xf0] sm:$0xff]
  %v918 = vld [vmem:[%s886 + $0xf8] sm:$0xff]
  %v919 = vld [vmem:[%s886 + $0x100] sm:$0xff]
  %v920 = vld [vmem:[%s886 + $0x108] sm:$0xff]
  %v921 = vld [vmem:[%s886 + $0x110] sm:$0xff]
  %v922 = vld [vmem:[%s886 + $0x118] sm:$0xff]
  %v923 = vld [vmem:[%s886 + $0x120] sm:$0xff]
  %v924 = vld [vmem:[%s886 + $0x128] sm:$0xff]
  %v925 = vld [vmem:[%s886 + $0x130] sm:$0xff]
  %v926 = vld [vmem:[%s886 + $0x138] sm:$0xff]
  %v927 = vld [vmem:[%s886 + $0x140] sm:$0xff]
  %v928 = vld [vmem:[%s886 + $0x148] sm:$0xff]
  %v929 = vld [vmem:[%s886 + $0x150] sm:$0xff]
  %v930 = vld [vmem:[%s886 + $0x158] sm:$0xff]
  %v931 = vld [vmem:[%s886 + $0x160] sm:$0xff]
  %v932 = vld [vmem:[%s886 + $0x168] sm:$0xff]
  %v933 = vld [vmem:[%s886 + $0x170] sm:$0xff]
  %v934 = vld [vmem:[%s886 + $0x178] sm:$0xff]
  %v935 = vld [vmem:[%s886 + $0x180] sm:$0xff]
  %v936 = vld [vmem:[%s886 + $0x188] sm:$0xff]
  %v937 = vld [vmem:[%s886 + $0x190] sm:$0xff]
  %v938 = vld [vmem:[%s886 + $0x198] sm:$0xff]
  %v939 = vld [vmem:[%s886 + $0x1a0] sm:$0xff]
  %v940 = vld [vmem:[%s886 + $0x1a8] sm:$0xff]
  %v941 = vld [vmem:[%s886 + $0x1b0] sm:$0xff]
  %v942 = vld [vmem:[%s886 + $0x1b8] sm:$0xff]
  %v943 = vld [vmem:[%s886 + $0x1c0] sm:$0xff]
  %v944 = vld [vmem:[%s886 + $0x1c8] sm:$0xff]
  %v945 = vld [vmem:[%s886 + $0x1d0] sm:$0xff]
  %v946 = vld [vmem:[%s886 + $0x1d8] sm:$0xff]
  %v947 = vld [vmem:[%s886 + $0x1e0] sm:$0xff]
  %v948 = vld [vmem:[%s886 + $0x1e8] sm:$0xff]
  %v949 = vld [vmem:[%s886 + $0x1f0] sm:$0xff]
  %v950 = vld [vmem:[%s886 + $0x1f8] sm:$0xff]
  %v951 = vld [vmem:[%s886 + $0x200] sm:$0xff]
  %v952 = vld [vmem:[%s886 + $0x208] sm:$0xff]
  %v953 = vld [vmem:[%s886 + $0x210] sm:$0xff]
  %v954 = vld [vmem:[%s886 + $0x218] sm:$0xff]
  %v955 = vld [vmem:[%s886 + $0x220] sm:$0xff]
  %v956 = vld [vmem:[%s886 + $0x228] sm:$0xff]
  %v957 = vld [vmem:[%s886 + $0x230] sm:$0xff]
  %v958 = vld [vmem:[%s886 + $0x238] sm:$0xff]
  %v959 = vld [vmem:[%s886 + $0x240] sm:$0xff]
  %v960 = vld [vmem:[%s886 + $0x248] sm:$0xff]
  %v961 = vld [vmem:[%s886 + $0x250] sm:$0xff]
  %v962 = vld [vmem:[%s886 + $0x258] sm:$0xff]
  %v963 = vld [vmem:[%s886 + $0x260] sm:$0xff]
  %v964 = vld [vmem:[%s886 + $0x268] sm:$0xff]
  %v965 = vld [vmem:[%s886 + $0x270] sm:$0xff]
  %v966 = vld [vmem:[%s886 + $0x278] sm:$0xff]
  %v967 = vld [vmem:[%s886 + $0x280] sm:$0xff]
  %v968 = vld [vmem:[%s886 + $0x288] sm:$0xff]
  %v969 = vld [vmem:[%s886 + $0x290] sm:$0xff]
  %v970 = vld [vmem:[%s886 + $0x298] sm:$0xff]
  %v971 = vld [vmem:[%s886 + $0x2a0] sm:$0xff]
  %v972 = vld [vmem:[%s886 + $0x2a8] sm:$0xff]
  %v973 = vld [vmem:[%s886 + $0x2b0] sm:$0xff]
  %v974 = vld [vmem:[%s886 + $0x2b8] sm:$0xff]
  %v975 = vld [vmem:[%s886 + $0x2c0] sm:$0xff]
  %v976 = vld [vmem:[%s886 + $0x2c8] sm:$0xff]
  %v977 = vld [vmem:[%s886 + $0x2d0] sm:$0xff]
  %v978 = vld [vmem:[%s886 + $0x2d8] sm:$0xff]
  %v979 = vld [vmem:[%s886 + $0x2e0] sm:$0xff]
  %v980 = vld [vmem:[%s886 + $0x2e8] sm:$0xff]
  %v981 = vld [vmem:[%s886 + $0x2f0] sm:$0xff]
  %v982 = vld [vmem:[%s886 + $0x2f8] sm:$0xff]
  %v983 = vld [vmem:[%s886 + $0x300] sm:$0xff]
  %v984 = vld [vmem:[%s886 + $0x308] sm:$0xff]
  %v985 = vld [vmem:[%s886 + $0x310] sm:$0xff]
  %v986 = vld [vmem:[%s886 + $0x318] sm:$0xff]
  %v987 = vld [vmem:[%s886 + $0x320] sm:$0xff]
  %v988 = vld [vmem:[%s886 + $0x328] sm:$0xff]
  %v989 = vld [vmem:[%s886 + $0x330] sm:$0xff]
  %v990 = vld [vmem:[%s886 + $0x338] sm:$0xff]
  %v991 = vld [vmem:[%s886 + $0x340] sm:$0xff]
  %v992 = vld [vmem:[%s886 + $0x348] sm:$0xff]
  %v993 = vld [vmem:[%s886 + $0x350] sm:$0xff]
  %v994 = vld [vmem:[%s886 + $0x358] sm:$0xff]
  %v995 = vld [vmem:[%s886 + $0x360] sm:$0xff]
  %v996 = vld [vmem:[%s886 + $0x368] sm:$0xff]
  %v997 = vld [vmem:[%s886 + $0x370] sm:$0xff]
  %v998 = vld [vmem:[%s886 + $0x378] sm:$0xff]
  %v999 = vld [vmem:[%s886 + $0x380] sm:$0xff]
  %v1000 = vld [vmem:[%s886 + $0x388] sm:$0xff]
  %v1001 = vld [vmem:[%s886 + $0x390] sm:$0xff]
  %v1002 = vld [vmem:[%s886 + $0x398] sm:$0xff]
  %v1003 = vld [vmem:[%s886 + $0x3a0] sm:$0xff]
  %v1004 = vld [vmem:[%s886 + $0x3a8] sm:$0xff]
  %v1005 = vld [vmem:[%s886 + $0x3b0] sm:$0xff]
  %v1006 = vld [vmem:[%s886 + $0x3b8] sm:$0xff]
  %v1007 = vld [vmem:[%s886 + $0x3c0] sm:$0xff]
  %v1008 = vld [vmem:[%s886 + $0x3c8] sm:$0xff]
  %v1009 = vld [vmem:[%s886 + $0x3d0] sm:$0xff]
  %v1010 = vld [vmem:[%s886 + $0x3d8] sm:$0xff]
  %v1011 = vld [vmem:[%s886 + $0x3e0] sm:$0xff]
  %v1012 = vld [vmem:[%s886 + $0x3e8] sm:$0xff]
  %v1013 = vld [vmem:[%s886 + $0x3f0] sm:$0xff]
  %v1014 = vld [vmem:[%s886 + $0x3f8] sm:$0xff]
  %v1015 = vld [vmem:[%s886 + $0x400] sm:$0xff]
  %v1016 = vld [vmem:[%s886 + $0x408] sm:$0xff]
  %v1017 = vld [vmem:[%s886 + $0x410] sm:$0xff]
  %v1018 = vld [vmem:[%s886 + $0x418] sm:$0xff]
  %v1019 = vld [vmem:[%s886 + $0x420] sm:$0xff]
  %v1020 = vld [vmem:[%s886 + $0x428] sm:$0xff]
  %v1021 = vld [vmem:[%s886 + $0x430] sm:$0xff]
  %v1022 = vld [vmem:[%s886 + $0x438] sm:$0xff]
  %v1023 = vld [vmem:[%s886 + $0x440] sm:$0xff]
  %v1024 = vld [vmem:[%s886 + $0x448] sm:$0xff]
  %v1025 = vld [vmem:[%s886 + $0x450] sm:$0xff]
  %v1026 = vld [vmem:[%s886 + $0x458] sm:$0xff]
  %v1027 = vld [vmem:[%s886 + $0x460] sm:$0xff]
  %v1028 = vld [vmem:[%s886 + $0x468] sm:$0xff]
  %v1029 = vld [vmem:[%s886 + $0x470] sm:$0xff]
  %v1030 = vld [vmem:[%s886 + $0x478] sm:$0xff]
  %v1031 = vld [vmem:[%s886 + $0x480] sm:$0xff]
  %v1032 = vld [vmem:[%s886 + $0x488] sm:$0xff]
  %v1033 = vld [vmem:[%s886 + $0x490] sm:$0xff]
  %v1034 = vld [vmem:[%s886 + $0x498] sm:$0xff]
  %v1035 = vld [vmem:[%s886 + $0x4a0] sm:$0xff]
  %v1036 = vld [vmem:[%s886 + $0x4a8] sm:$0xff]
  %v1037 = vld [vmem:[%s886 + $0x4b0] sm:$0xff]
  %v1038 = vld [vmem:[%s886 + $0x4b8] sm:$0xff]
  %v1039 = vld [vmem:[%s886 + $0x4c0] sm:$0xff]
  %v1040 = vld [vmem:[%s886 + $0x4c8] sm:$0xff]
  %v1041 = vld [vmem:[%s886 + $0x4d0] sm:$0xff]
  %v1042 = vld [vmem:[%s886 + $0x4d8] sm:$0xff]
  %v1043 = vld [vmem:[%s886 + $0x4e0] sm:$0xff]
  %v1044 = vld [vmem:[%s886 + $0x4e8] sm:$0xff]
  %v1045 = vld [vmem:[%s886 + $0x4f0] sm:$0xff]
  %v1046 = vld [vmem:[%s886 + $0x4f8] sm:$0xff]
  %v1047 = vld [vmem:[%s886 + $0x500] sm:$0xff]
  %v1048 = vld [vmem:[%s886 + $0x508] sm:$0xff]
  %v1049 = vld [vmem:[%s886 + $0x510] sm:$0xff]
  %v1050 = vld [vmem:[%s886 + $0x518] sm:$0xff]
  %v1051 = vld [vmem:[%s886 + $0x520] sm:$0xff]
  %v1052 = vld [vmem:[%s886 + $0x528] sm:$0xff]
  %v1053 = vld [vmem:[%s886 + $0x530] sm:$0xff]
  %v1054 = vld [vmem:[%s886 + $0x538] sm:$0xff]
  %v1055 = vld [vmem:[%s886 + $0x540] sm:$0xff]
  %v1056 = vld [vmem:[%s886 + $0x548] sm:$0xff]
  %v1057 = vld [vmem:[%s886 + $0x550] sm:$0xff]
  %v1058 = vld [vmem:[%s886 + $0x558] sm:$0xff]
  %v1059 = vld [vmem:[%s886 + $0x560] sm:$0xff]
  %v1060 = vld [vmem:[%s886 + $0x568] sm:$0xff]
  %v1061 = vld [vmem:[%s886 + $0x570] sm:$0xff]
  %v1062 = vld [vmem:[%s886 + $0x578] sm:$0xff]
  %v1063 = vld [vmem:[%s886 + $0x580] sm:$0xff]
  %v1064 = vld [vmem:[%s886 + $0x588] sm:$0xff]
  %v1065 = vld [vmem:[%s886 + $0x590] sm:$0xff]
  %v1066 = vld [vmem:[%s886 + $0x598] sm:$0xff]
  %v1067 = vld [vmem:[%s886 + $0x5a0] sm:$0xff]
  %v1068 = vld [vmem:[%s886 + $0x5a8] sm:$0xff]
  %v1069 = vld [vmem:[%s886 + $0x5b0] sm:$0xff]
  %v1070 = vld [vmem:[%s886 + $0x5b8] sm:$0xff]
  %v1071 = vld [vmem:[%s886 + $0x5c0] sm:$0xff]
  %v1072 = vld [vmem:[%s886 + $0x5c8] sm:$0xff]
  %v1073 = vld [vmem:[%s886 + $0x5d0] sm:$0xff]
  %v1074 = vld [vmem:[%s886 + $0x5d8] sm:$0xff]
  %v1075 = vld [vmem:[%s886 + $0x5e0] sm:$0xff]
  %v1076 = vld [vmem:[%s886 + $0x5e8] sm:$0xff]
  %v1077 = vld [vmem:[%s886 + $0x5f0] sm:$0xff]
  %v1078 = vld [vmem:[%s886 + $0x5f8] sm:$0xff]
  %1079 = vmatprep.subr.mxu0 %v918
  %1080 = vmatpush1.msra.mxu0 %v917
  %1081 = vmatprep.subr.mxu0 %v916
  %1082 = vmatpush1.msra.mxu0 %v915
  %1083 = vmatprep.subr.mxu0 %v914
  %1084 = vmatpush1.msra.mxu0 %v913
  %1085 = vmatprep.subr.mxu0 %v912
  %1086 = vmatpush1.msra.mxu0 %v911
  %1087 = vmatprep.subr.mxu0 %v910
  %1088 = vmatpush1.msra.mxu0 %v909
  %1089 = vmatprep.subr.mxu0 %v908
  %1090 = vmatpush1.msra.mxu0 %v907
  %1091 = vmatprep.subr.mxu0 %v906
  %1092 = vmatpush1.msra.mxu0 %v905
  %1093 = vmatprep.subr.mxu0 %v904
  %1094 = vmatpush1.msra.mxu0 %v903
  %1095 = vmatprep.subr.mxu0 %v902
  %1096 = vmatpush1.msra.mxu0 %v901
  %1097 = vmatprep.subr.mxu0 %v900
  %1098 = vmatpush1.msra.mxu0 %v899
  %1099 = vmatprep.subr.mxu0 %v898
  %1100 = vmatpush1.msra.mxu0 %v897
  %1101 = vmatprep.subr.mxu0 %v896
  %1102 = vmatpush1.msra.mxu0 %v895
  %1103 = vmatprep.subr.mxu0 %v894
  %1104 = vmatpush1.msra.mxu0 %v893
  %1105 = vmatprep.subr.mxu0 %v892
  %1106 = vmatpush1.msra.mxu0 %v891
  %1107 = vmatprep.subr.mxu0 %v890
  %1108 = vmatpush1.msra.mxu0 %v889
  %1109 = vmatprep.subr.mxu0 %v888
  %1110 = vmatpush1.msra.mxu0 %v887
  %1111 = vmatprep.subr.mxu0 %v950
  %1112 = vmatpush2.msra.mxu0 %v949
  %1113 = vmatprep.subr.mxu0 %v948
  %1114 = vmatpush2.msra.mxu0 %v947
  %1115 = vmatprep.subr.mxu0 %v946
  %1116 = vmatpush2.msra.mxu0 %v945
  %1117 = vmatprep.subr.mxu0 %v944
  %1118 = vmatpush2.msra.mxu0 %v943
  %1119 = vmatprep.subr.mxu0 %v942
  %1120 = vmatpush2.msra.mxu0 %v941
  %1121 = vmatprep.subr.mxu0 %v940
  %1122 = vmatpush2.msra.mxu0 %v939
  %1123 = vmatprep.subr.mxu0 %v938
  %1124 = vmatpush2.msra.mxu0 %v937
  %1125 = vmatprep.subr.mxu0 %v936
  %1126 = vmatpush2.msra.mxu0 %v935
  %1127 = vmatprep.subr.mxu0 %v934
  %1128 = vmatpush2.msra.mxu0 %v933
  %1129 = vmatprep.subr.mxu0 %v932
  %1130 = vmatpush2.msra.mxu0 %v931
  %1131 = vmatprep.subr.mxu0 %v930
  %1132 = vmatpush2.msra.mxu0 %v929
  %1133 = vmatprep.subr.mxu0 %v928
  %1134 = vmatpush2.msra.mxu0 %v927
  %1135 = vmatprep.subr.mxu0 %v926
  %1136 = vmatpush2.msra.mxu0 %v925
  %1137 = vmatprep.subr.mxu0 %v924
  %1138 = vmatpush2.msra.mxu0 %v923
  %1139 = vmatprep.subr.mxu0 %v922
  %1140 = vmatpush2.msra.mxu0 %v921
  %1141 = vmatprep.subr.mxu0 %v920
  %1142 = vmatpush2.msra.mxu0 %v919
  %1143 = vmatprep.mubr.f32.mxu0 %v249
  %1144 = vmatmul.mubr.f32.gmra.mxu0 %v241
  %v1145 = vpop.f32.mrf.mxu0
  %v1146 = vadd.f32 0.0, %v1145
  %v1147 = vpop.f32.mrf.mxu0
  %v1148 = vadd.f32 0.0, %v1147
  %1149 = vdwg.mxu0
  %1150 = vmatprep.subr.mxu0 %v982
  %1151 = vmatpush1.msra.mxu0 %v981
  %1152 = vmatprep.subr.mxu0 %v980
  %1153 = vmatpush1.msra.mxu0 %v979
  %1154 = vmatprep.subr.mxu0 %v978
  %1155 = vmatpush1.msra.mxu0 %v977
  %1156 = vmatprep.subr.mxu0 %v976
  %1157 = vmatpush1.msra.mxu0 %v975
  %1158 = vmatprep.subr.mxu0 %v974
  %1159 = vmatpush1.msra.mxu0 %v973
  %1160 = vmatprep.subr.mxu0 %v972
  %1161 = vmatpush1.msra.mxu0 %v971
  %1162 = vmatprep.subr.mxu0 %v970
  %1163 = vmatpush1.msra.mxu0 %v969
  %1164 = vmatprep.subr.mxu0 %v968
  %1165 = vmatpush1.msra.mxu0 %v967
  %1166 = vmatprep.subr.mxu0 %v966
  %1167 = vmatpush1.msra.mxu0 %v965
  %1168 = vmatprep.subr.mxu0 %v964
  %1169 = vmatpush1.msra.mxu0 %v963
  %1170 = vmatprep.subr.mxu0 %v962
  %1171 = vmatpush1.msra.mxu0 %v961
  %1172 = vmatprep.subr.mxu0 %v960
  %1173 = vmatpush1.msra.mxu0 %v959
  %1174 = vmatprep.subr.mxu0 %v958
  %1175 = vmatpush1.msra.mxu0 %v957
  %1176 = vmatprep.subr.mxu0 %v956
  %1177 = vmatpush1.msra.mxu0 %v955
  %1178 = vmatprep.subr.mxu0 %v954
  %1179 = vmatpush1.msra.mxu0 %v953
  %1180 = vmatprep.subr.mxu0 %v952
  %1181 = vmatpush1.msra.mxu0 %v951
  %1182 = vmatprep.subr.mxu0 %v1014
  %1183 = vmatpush2.msra.mxu0 %v1013
  %1184 = vmatprep.subr.mxu0 %v1012
  %1185 = vmatpush2.msra.mxu0 %v1011
  %1186 = vmatprep.subr.mxu0 %v1010
  %1187 = vmatpush2.msra.mxu0 %v1009
  %1188 = vmatprep.subr.mxu0 %v1008
  %1189 = vmatpush2.msra.mxu0 %v1007
  %1190 = vmatprep.subr.mxu0 %v1006
  %1191 = vmatpush2.msra.mxu0 %v1005
  %1192 = vmatprep.subr.mxu0 %v1004
  %1193 = vmatpush2.msra.mxu0 %v1003
  %1194 = vmatprep.subr.mxu0 %v1002
  %1195 = vmatpush2.msra.mxu0 %v1001
  %1196 = vmatprep.subr.mxu0 %v1000
  %1197 = vmatpush2.msra.mxu0 %v999
  %1198 = vmatprep.subr.mxu0 %v998
  %1199 = vmatpush2.msra.mxu0 %v997
  %1200 = vmatprep.subr.mxu0 %v996
  %1201 = vmatpush2.msra.mxu0 %v995
  %1202 = vmatprep.subr.mxu0 %v994
  %1203 = vmatpush2.msra.mxu0 %v993
  %1204 = vmatprep.subr.mxu0 %v992
  %1205 = vmatpush2.msra.mxu0 %v991
  %1206 = vmatprep.subr.mxu0 %v990
  %1207 = vmatpush2.msra.mxu0 %v989
  %1208 = vmatprep.subr.mxu0 %v988
  %1209 = vmatpush2.msra.mxu0 %v987
  %1210 = vmatprep.subr.mxu0 %v986
  %1211 = vmatpush2.msra.mxu0 %v985
  %1212 = vmatprep.subr.mxu0 %v984
  %1213 = vmatpush2.msra.mxu0 %v983
  %1214 = vmatprep.mubr.f32.mxu0 %v250
  %1215 = vmatmul.mubr.f32.gmra.mxu0 %v248
  %v1216 = vpop.f32.mrf.mxu0
  %v1217 = vadd.f32 %v1146, %v1216
  %v1218 = vpop.f32.mrf.mxu0
  %v1219 = vadd.f32 %v1148, %v1218
  %1220 = vdwg.mxu0
  %1221 = vmatprep.subr.mxu0 %v1046
  %1222 = vmatpush1.msra.mxu0 %v1045
  %1223 = vmatprep.subr.mxu0 %v1044
  %1224 = vmatpush1.msra.mxu0 %v1043
  %1225 = vmatprep.subr.mxu0 %v1042
  %1226 = vmatpush1.msra.mxu0 %v1041
  %1227 = vmatprep.subr.mxu0 %v1040
  %1228 = vmatpush1.msra.mxu0 %v1039
  %1229 = vmatprep.subr.mxu0 %v1038
  %1230 = vmatpush1.msra.mxu0 %v1037
  %1231 = vmatprep.subr.mxu0 %v1036
  %1232 = vmatpush1.msra.mxu0 %v1035
  %1233 = vmatprep.subr.mxu0 %v1034
  %1234 = vmatpush1.msra.mxu0 %v1033
  %1235 = vmatprep.subr.mxu0 %v1032
  %1236 = vmatpush1.msra.mxu0 %v1031
  %1237 = vmatprep.subr.mxu0 %v1030
  %1238 = vmatpush1.msra.mxu0 %v1029
  %1239 = vmatprep.subr.mxu0 %v1028
  %1240 = vmatpush1.msra.mxu0 %v1027
  %1241 = vmatprep.subr.mxu0 %v1026
  %1242 = vmatpush1.msra.mxu0 %v1025
  %1243 = vmatprep.subr.mxu0 %v1024
  %1244 = vmatpush1.msra.mxu0 %v1023
  %1245 = vmatprep.subr.mxu0 %v1022
  %1246 = vmatpush1.msra.mxu0 %v1021
  %1247 = vmatprep.subr.mxu0 %v1020
  %1248 = vmatpush1.msra.mxu0 %v1019
  %1249 = vmatprep.subr.mxu0 %v1018
  %1250 = vmatpush1.msra.mxu0 %v1017
  %1251 = vmatprep.subr.mxu0 %v1016
  %1252 = vmatpush1.msra.mxu0 %v1015
  %1253 = vmatprep.subr.mxu0 %v1078
  %1254 = vmatpush2.msra.mxu0 %v1077
  %1255 = vmatprep.subr.mxu0 %v1076
  %1256 = vmatpush2.msra.mxu0 %v1075
  %1257 = vmatprep.subr.mxu0 %v1074
  %1258 = vmatpush2.msra.mxu0 %v1073
  %1259 = vmatprep.subr.mxu0 %v1072
  %1260 = vmatpush2.msra.mxu0 %v1071
  %1261 = vmatprep.subr.mxu0 %v1070
  %1262 = vmatpush2.msra.mxu0 %v1069
  %1263 = vmatprep.subr.mxu0 %v1068
  %1264 = vmatpush2.msra.mxu0 %v1067
  %1265 = vmatprep.subr.mxu0 %v1066
  %1266 = vmatpush2.msra.mxu0 %v1065
  %1267 = vmatprep.subr.mxu0 %v1064
  %1268 = vmatpush2.msra.mxu0 %v1063
  %1269 = vmatprep.subr.mxu0 %v1062
  %1270 = vmatpush2.msra.mxu0 %v1061
  %1271 = vmatprep.subr.mxu0 %v1060
  %1272 = vmatpush2.msra.mxu0 %v1059
  %1273 = vmatprep.subr.mxu0 %v1058
  %1274 = vmatpush2.msra.mxu0 %v1057
  %1275 = vmatprep.subr.mxu0 %v1056
  %1276 = vmatpush2.msra.mxu0 %v1055
  %1277 = vmatprep.subr.mxu0 %v1054
  %1278 = vmatpush2.msra.mxu0 %v1053
  %1279 = vmatprep.subr.mxu0 %v1052
  %1280 = vmatpush2.msra.mxu0 %v1051
  %1281 = vmatprep.subr.mxu0 %v1050
  %1282 = vmatpush2.msra.mxu0 %v1049
  %1283 = vmatprep.subr.mxu0 %v1048
  %1284 = vmatpush2.msra.mxu0 %v1047
  %1285 = vmatprep.mubr.f32.mxu0 %v258
  %1286 = vmatmul.mubr.f32.gmra.mxu0 %v257
  %v1287 = vpop.f32.mrf.mxu0
  %v1288 = vadd.f32 %v1217, %v1287
  %v1289 = vpop.f32.mrf.mxu0
  %v1290 = vadd.f32 %v1219, %v1289
  %1291 = vdwg.mxu0
  %v1292 = vmax.f32 %v884, %v1288
  %v1293 = vmax.f32 %v885, %v1290
  %s1294 = scalar_lea.vmem %s1, 4608
  %v1295 = vld [vmem:[%s1294] sm:$0xff]
  %v1296 = vld [vmem:[%s1294 + $0x8] sm:$0xff]
  %v1297 = vld [vmem:[%s1294 + $0x10] sm:$0xff]
  %v1298 = vld [vmem:[%s1294 + $0x18] sm:$0xff]
  %v1299 = vld [vmem:[%s1294 + $0x20] sm:$0xff]
  %v1300 = vld [vmem:[%s1294 + $0x28] sm:$0xff]
  %v1301 = vld [vmem:[%s1294 + $0x30] sm:$0xff]
  %v1302 = vld [vmem:[%s1294 + $0x38] sm:$0xff]
  %v1303 = vld [vmem:[%s1294 + $0x40] sm:$0xff]
  %v1304 = vld [vmem:[%s1294 + $0x48] sm:$0xff]
  %v1305 = vld [vmem:[%s1294 + $0x50] sm:$0xff]
  %v1306 = vld [vmem:[%s1294 + $0x58] sm:$0xff]
  %v1307 = vld [vmem:[%s1294 + $0x60] sm:$0xff]
  %v1308 = vld [vmem:[%s1294 + $0x68] sm:$0xff]
  %v1309 = vld [vmem:[%s1294 + $0x70] sm:$0xff]
  %v1310 = vld [vmem:[%s1294 + $0x78] sm:$0xff]
  %v1311 = vld [vmem:[%s1294 + $0x80] sm:$0xff]
  %v1312 = vld [vmem:[%s1294 + $0x88] sm:$0xff]
  %v1313 = vld [vmem:[%s1294 + $0x90] sm:$0xff]
  %v1314 = vld [vmem:[%s1294 + $0x98] sm:$0xff]
  %v1315 = vld [vmem:[%s1294 + $0xa0] sm:$0xff]
  %v1316 = vld [vmem:[%s1294 + $0xa8] sm:$0xff]
  %v1317 = vld [vmem:[%s1294 + $0xb0] sm:$0xff]
  %v1318 = vld [vmem:[%s1294 + $0xb8] sm:$0xff]
  %v1319 = vld [vmem:[%s1294 + $0xc0] sm:$0xff]
  %v1320 = vld [vmem:[%s1294 + $0xc8] sm:$0xff]
  %v1321 = vld [vmem:[%s1294 + $0xd0] sm:$0xff]
  %v1322 = vld [vmem:[%s1294 + $0xd8] sm:$0xff]
  %v1323 = vld [vmem:[%s1294 + $0xe0] sm:$0xff]
  %v1324 = vld [vmem:[%s1294 + $0xe8] sm:$0xff]
  %v1325 = vld [vmem:[%s1294 + $0xf0] sm:$0xff]
  %v1326 = vld [vmem:[%s1294 + $0xf8] sm:$0xff]
  %v1327 = vld [vmem:[%s1294 + $0x100] sm:$0xff]
  %v1328 = vld [vmem:[%s1294 + $0x108] sm:$0xff]
  %v1329 = vld [vmem:[%s1294 + $0x110] sm:$0xff]
  %v1330 = vld [vmem:[%s1294 + $0x118] sm:$0xff]
  %v1331 = vld [vmem:[%s1294 + $0x120] sm:$0xff]
  %v1332 = vld [vmem:[%s1294 + $0x128] sm:$0xff]
  %v1333 = vld [vmem:[%s1294 + $0x130] sm:$0xff]
  %v1334 = vld [vmem:[%s1294 + $0x138] sm:$0xff]
  %v1335 = vld [vmem:[%s1294 + $0x140] sm:$0xff]
  %v1336 = vld [vmem:[%s1294 + $0x148] sm:$0xff]
  %v1337 = vld [vmem:[%s1294 + $0x150] sm:$0xff]
  %v1338 = vld [vmem:[%s1294 + $0x158] sm:$0xff]
  %v1339 = vld [vmem:[%s1294 + $0x160] sm:$0xff]
  %v1340 = vld [vmem:[%s1294 + $0x168] sm:$0xff]
  %v1341 = vld [vmem:[%s1294 + $0x170] sm:$0xff]
  %v1342 = vld [vmem:[%s1294 + $0x178] sm:$0xff]
  %v1343 = vld [vmem:[%s1294 + $0x180] sm:$0xff]
  %v1344 = vld [vmem:[%s1294 + $0x188] sm:$0xff]
  %v1345 = vld [vmem:[%s1294 + $0x190] sm:$0xff]
  %v1346 = vld [vmem:[%s1294 + $0x198] sm:$0xff]
  %v1347 = vld [vmem:[%s1294 + $0x1a0] sm:$0xff]
  %v1348 = vld [vmem:[%s1294 + $0x1a8] sm:$0xff]
  %v1349 = vld [vmem:[%s1294 + $0x1b0] sm:$0xff]
  %v1350 = vld [vmem:[%s1294 + $0x1b8] sm:$0xff]
  %v1351 = vld [vmem:[%s1294 + $0x1c0] sm:$0xff]
  %v1352 = vld [vmem:[%s1294 + $0x1c8] sm:$0xff]
  %v1353 = vld [vmem:[%s1294 + $0x1d0] sm:$0xff]
  %v1354 = vld [vmem:[%s1294 + $0x1d8] sm:$0xff]
  %v1355 = vld [vmem:[%s1294 + $0x1e0] sm:$0xff]
  %v1356 = vld [vmem:[%s1294 + $0x1e8] sm:$0xff]
  %v1357 = vld [vmem:[%s1294 + $0x1f0] sm:$0xff]
  %v1358 = vld [vmem:[%s1294 + $0x1f8] sm:$0xff]
  %v1359 = vld [vmem:[%s1294 + $0x200] sm:$0xff]
  %v1360 = vld [vmem:[%s1294 + $0x208] sm:$0xff]
  %v1361 = vld [vmem:[%s1294 + $0x210] sm:$0xff]
  %v1362 = vld [vmem:[%s1294 + $0x218] sm:$0xff]
  %v1363 = vld [vmem:[%s1294 + $0x220] sm:$0xff]
  %v1364 = vld [vmem:[%s1294 + $0x228] sm:$0xff]
  %v1365 = vld [vmem:[%s1294 + $0x230] sm:$0xff]
  %v1366 = vld [vmem:[%s1294 + $0x238] sm:$0xff]
  %v1367 = vld [vmem:[%s1294 + $0x240] sm:$0xff]
  %v1368 = vld [vmem:[%s1294 + $0x248] sm:$0xff]
  %v1369 = vld [vmem:[%s1294 + $0x250] sm:$0xff]
  %v1370 = vld [vmem:[%s1294 + $0x258] sm:$0xff]
  %v1371 = vld [vmem:[%s1294 + $0x260] sm:$0xff]
  %v1372 = vld [vmem:[%s1294 + $0x268] sm:$0xff]
  %v1373 = vld [vmem:[%s1294 + $0x270] sm:$0xff]
  %v1374 = vld [vmem:[%s1294 + $0x278] sm:$0xff]
  %v1375 = vld [vmem:[%s1294 + $0x280] sm:$0xff]
  %v1376 = vld [vmem:[%s1294 + $0x288] sm:$0xff]
  %v1377 = vld [vmem:[%s1294 + $0x290] sm:$0xff]
  %v1378 = vld [vmem:[%s1294 + $0x298] sm:$0xff]
  %v1379 = vld [vmem:[%s1294 + $0x2a0] sm:$0xff]
  %v1380 = vld [vmem:[%s1294 + $0x2a8] sm:$0xff]
  %v1381 = vld [vmem:[%s1294 + $0x2b0] sm:$0xff]
  %v1382 = vld [vmem:[%s1294 + $0x2b8] sm:$0xff]
  %v1383 = vld [vmem:[%s1294 + $0x2c0] sm:$0xff]
  %v1384 = vld [vmem:[%s1294 + $0x2c8] sm:$0xff]
  %v1385 = vld [vmem:[%s1294 + $0x2d0] sm:$0xff]
  %v1386 = vld [vmem:[%s1294 + $0x2d8] sm:$0xff]
  %v1387 = vld [vmem:[%s1294 + $0x2e0] sm:$0xff]
  %v1388 = vld [vmem:[%s1294 + $0x2e8] sm:$0xff]
  %v1389 = vld [vmem:[%s1294 + $0x2f0] sm:$0xff]
  %v1390 = vld [vmem:[%s1294 + $0x2f8] sm:$0xff]
  %v1391 = vld [vmem:[%s1294 + $0x300] sm:$0xff]
  %v1392 = vld [vmem:[%s1294 + $0x308] sm:$0xff]
  %v1393 = vld [vmem:[%s1294 + $0x310] sm:$0xff]
  %v1394 = vld [vmem:[%s1294 + $0x318] sm:$0xff]
  %v1395 = vld [vmem:[%s1294 + $0x320] sm:$0xff]
  %v1396 = vld [vmem:[%s1294 + $0x328] sm:$0xff]
  %v1397 = vld [vmem:[%s1294 + $0x330] sm:$0xff]
  %v1398 = vld [vmem:[%s1294 + $0x338] sm:$0xff]
  %v1399 = vld [vmem:[%s1294 + $0x340] sm:$0xff]
  %v1400 = vld [vmem:[%s1294 + $0x348] sm:$0xff]
  %v1401 = vld [vmem:[%s1294 + $0x350] sm:$0xff]
  %v1402 = vld [vmem:[%s1294 + $0x358] sm:$0xff]
  %v1403 = vld [vmem:[%s1294 + $0x360] sm:$0xff]
  %v1404 = vld [vmem:[%s1294 + $0x368] sm:$0xff]
  %v1405 = vld [vmem:[%s1294 + $0x370] sm:$0xff]
  %v1406 = vld [vmem:[%s1294 + $0x378] sm:$0xff]
  %v1407 = vld [vmem:[%s1294 + $0x380] sm:$0xff]
  %v1408 = vld [vmem:[%s1294 + $0x388] sm:$0xff]
  %v1409 = vld [vmem:[%s1294 + $0x390] sm:$0xff]
  %v1410 = vld [vmem:[%s1294 + $0x398] sm:$0xff]
  %v1411 = vld [vmem:[%s1294 + $0x3a0] sm:$0xff]
  %v1412 = vld [vmem:[%s1294 + $0x3a8] sm:$0xff]
  %v1413 = vld [vmem:[%s1294 + $0x3b0] sm:$0xff]
  %v1414 = vld [vmem:[%s1294 + $0x3b8] sm:$0xff]
  %v1415 = vld [vmem:[%s1294 + $0x3c0] sm:$0xff]
  %v1416 = vld [vmem:[%s1294 + $0x3c8] sm:$0xff]
  %v1417 = vld [vmem:[%s1294 + $0x3d0] sm:$0xff]
  %v1418 = vld [vmem:[%s1294 + $0x3d8] sm:$0xff]
  %v1419 = vld [vmem:[%s1294 + $0x3e0] sm:$0xff]
  %v1420 = vld [vmem:[%s1294 + $0x3e8] sm:$0xff]
  %v1421 = vld [vmem:[%s1294 + $0x3f0] sm:$0xff]
  %v1422 = vld [vmem:[%s1294 + $0x3f8] sm:$0xff]
  %v1423 = vld [vmem:[%s1294 + $0x400] sm:$0xff]
  %v1424 = vld [vmem:[%s1294 + $0x408] sm:$0xff]
  %v1425 = vld [vmem:[%s1294 + $0x410] sm:$0xff]
  %v1426 = vld [vmem:[%s1294 + $0x418] sm:$0xff]
  %v1427 = vld [vmem:[%s1294 + $0x420] sm:$0xff]
  %v1428 = vld [vmem:[%s1294 + $0x428] sm:$0xff]
  %v1429 = vld [vmem:[%s1294 + $0x430] sm:$0xff]
  %v1430 = vld [vmem:[%s1294 + $0x438] sm:$0xff]
  %v1431 = vld [vmem:[%s1294 + $0x440] sm:$0xff]
  %v1432 = vld [vmem:[%s1294 + $0x448] sm:$0xff]
  %v1433 = vld [vmem:[%s1294 + $0x450] sm:$0xff]
  %v1434 = vld [vmem:[%s1294 + $0x458] sm:$0xff]
  %v1435 = vld [vmem:[%s1294 + $0x460] sm:$0xff]
  %v1436 = vld [vmem:[%s1294 + $0x468] sm:$0xff]
  %v1437 = vld [vmem:[%s1294 + $0x470] sm:$0xff]
  %v1438 = vld [vmem:[%s1294 + $0x478] sm:$0xff]
  %v1439 = vld [vmem:[%s1294 + $0x480] sm:$0xff]
  %v1440 = vld [vmem:[%s1294 + $0x488] sm:$0xff]
  %v1441 = vld [vmem:[%s1294 + $0x490] sm:$0xff]
  %v1442 = vld [vmem:[%s1294 + $0x498] sm:$0xff]
  %v1443 = vld [vmem:[%s1294 + $0x4a0] sm:$0xff]
  %v1444 = vld [vmem:[%s1294 + $0x4a8] sm:$0xff]
  %v1445 = vld [vmem:[%s1294 + $0x4b0] sm:$0xff]
  %v1446 = vld [vmem:[%s1294 + $0x4b8] sm:$0xff]
  %v1447 = vld [vmem:[%s1294 + $0x4c0] sm:$0xff]
  %v1448 = vld [vmem:[%s1294 + $0x4c8] sm:$0xff]
  %v1449 = vld [vmem:[%s1294 + $0x4d0] sm:$0xff]
  %v1450 = vld [vmem:[%s1294 + $0x4d8] sm:$0xff]
  %v1451 = vld [vmem:[%s1294 + $0x4e0] sm:$0xff]
  %v1452 = vld [vmem:[%s1294 + $0x4e8] sm:$0xff]
  %v1453 = vld [vmem:[%s1294 + $0x4f0] sm:$0xff]
  %v1454 = vld [vmem:[%s1294 + $0x4f8] sm:$0xff]
  %v1455 = vld [vmem:[%s1294 + $0x500] sm:$0xff]
  %v1456 = vld [vmem:[%s1294 + $0x508] sm:$0xff]
  %v1457 = vld [vmem:[%s1294 + $0x510] sm:$0xff]
  %v1458 = vld [vmem:[%s1294 + $0x518] sm:$0xff]
  %v1459 = vld [vmem:[%s1294 + $0x520] sm:$0xff]
  %v1460 = vld [vmem:[%s1294 + $0x528] sm:$0xff]
  %v1461 = vld [vmem:[%s1294 + $0x530] sm:$0xff]
  %v1462 = vld [vmem:[%s1294 + $0x538] sm:$0xff]
  %v1463 = vld [vmem:[%s1294 + $0x540] sm:$0xff]
  %v1464 = vld [vmem:[%s1294 + $0x548] sm:$0xff]
  %v1465 = vld [vmem:[%s1294 + $0x550] sm:$0xff]
  %v1466 = vld [vmem:[%s1294 + $0x558] sm:$0xff]
  %v1467 = vld [vmem:[%s1294 + $0x560] sm:$0xff]
  %v1468 = vld [vmem:[%s1294 + $0x568] sm:$0xff]
  %v1469 = vld [vmem:[%s1294 + $0x570] sm:$0xff]
  %v1470 = vld [vmem:[%s1294 + $0x578] sm:$0xff]
  %v1471 = vld [vmem:[%s1294 + $0x580] sm:$0xff]
  %v1472 = vld [vmem:[%s1294 + $0x588] sm:$0xff]
  %v1473 = vld [vmem:[%s1294 + $0x590] sm:$0xff]
  %v1474 = vld [vmem:[%s1294 + $0x598] sm:$0xff]
  %v1475 = vld [vmem:[%s1294 + $0x5a0] sm:$0xff]
  %v1476 = vld [vmem:[%s1294 + $0x5a8] sm:$0xff]
  %v1477 = vld [vmem:[%s1294 + $0x5b0] sm:$0xff]
  %v1478 = vld [vmem:[%s1294 + $0x5b8] sm:$0xff]
  %v1479 = vld [vmem:[%s1294 + $0x5c0] sm:$0xff]
  %v1480 = vld [vmem:[%s1294 + $0x5c8] sm:$0xff]
  %v1481 = vld [vmem:[%s1294 + $0x5d0] sm:$0xff]
  %v1482 = vld [vmem:[%s1294 + $0x5d8] sm:$0xff]
  %v1483 = vld [vmem:[%s1294 + $0x5e0] sm:$0xff]
  %v1484 = vld [vmem:[%s1294 + $0x5e8] sm:$0xff]
  %v1485 = vld [vmem:[%s1294 + $0x5f0] sm:$0xff]
  %v1486 = vld [vmem:[%s1294 + $0x5f8] sm:$0xff]
  %1487 = vmatprep.subr.mxu0 %v1326
  %1488 = vmatpush1.msra.mxu0 %v1325
  %1489 = vmatprep.subr.mxu0 %v1324
  %1490 = vmatpush1.msra.mxu0 %v1323
  %1491 = vmatprep.subr.mxu0 %v1322
  %1492 = vmatpush1.msra.mxu0 %v1321
  %1493 = vmatprep.subr.mxu0 %v1320
  %1494 = vmatpush1.msra.mxu0 %v1319
  %1495 = vmatprep.subr.mxu0 %v1318
  %1496 = vmatpush1.msra.mxu0 %v1317
  %1497 = vmatprep.subr.mxu0 %v1316
  %1498 = vmatpush1.msra.mxu0 %v1315
  %1499 = vmatprep.subr.mxu0 %v1314
  %1500 = vmatpush1.msra.mxu0 %v1313
  %1501 = vmatprep.subr.mxu0 %v1312
  %1502 = vmatpush1.msra.mxu0 %v1311
  %1503 = vmatprep.subr.mxu0 %v1310
  %1504 = vmatpush1.msra.mxu0 %v1309
  %1505 = vmatprep.subr.mxu0 %v1308
  %1506 = vmatpush1.msra.mxu0 %v1307
  %1507 = vmatprep.subr.mxu0 %v1306
  %1508 = vmatpush1.msra.mxu0 %v1305
  %1509 = vmatprep.subr.mxu0 %v1304
  %1510 = vmatpush1.msra.mxu0 %v1303
  %1511 = vmatprep.subr.mxu0 %v1302
  %1512 = vmatpush1.msra.mxu0 %v1301
  %1513 = vmatprep.subr.mxu0 %v1300
  %1514 = vmatpush1.msra.mxu0 %v1299
  %1515 = vmatprep.subr.mxu0 %v1298
  %1516 = vmatpush1.msra.mxu0 %v1297
  %1517 = vmatprep.subr.mxu0 %v1296
  %1518 = vmatpush1.msra.mxu0 %v1295
  %1519 = vmatprep.subr.mxu0 %v1358
  %1520 = vmatpush2.msra.mxu0 %v1357
  %1521 = vmatprep.subr.mxu0 %v1356
  %1522 = vmatpush2.msra.mxu0 %v1355
  %1523 = vmatprep.subr.mxu0 %v1354
  %1524 = vmatpush2.msra.mxu0 %v1353
  %1525 = vmatprep.subr.mxu0 %v1352
  %1526 = vmatpush2.msra.mxu0 %v1351
  %1527 = vmatprep.subr.mxu0 %v1350
  %1528 = vmatpush2.msra.mxu0 %v1349
  %1529 = vmatprep.subr.mxu0 %v1348
  %1530 = vmatpush2.msra.mxu0 %v1347
  %1531 = vmatprep.subr.mxu0 %v1346
  %1532 = vmatpush2.msra.mxu0 %v1345
  %1533 = vmatprep.subr.mxu0 %v1344
  %1534 = vmatpush2.msra.mxu0 %v1343
  %1535 = vmatprep.subr.mxu0 %v1342
  %1536 = vmatpush2.msra.mxu0 %v1341
  %1537 = vmatprep.subr.mxu0 %v1340
  %1538 = vmatpush2.msra.mxu0 %v1339
  %1539 = vmatprep.subr.mxu0 %v1338
  %1540 = vmatpush2.msra.mxu0 %v1337
  %1541 = vmatprep.subr.mxu0 %v1336
  %1542 = vmatpush2.msra.mxu0 %v1335
  %1543 = vmatprep.subr.mxu0 %v1334
  %1544 = vmatpush2.msra.mxu0 %v1333
  %1545 = vmatprep.subr.mxu0 %v1332
  %1546 = vmatpush2.msra.mxu0 %v1331
  %1547 = vmatprep.subr.mxu0 %v1330
  %1548 = vmatpush2.msra.mxu0 %v1329
  %1549 = vmatprep.subr.mxu0 %v1328
  %1550 = vmatpush2.msra.mxu0 %v1327
  %1551 = vmatprep.mubr.f32.mxu0 %v249
  %1552 = vmatmul.mubr.f32.gmra.mxu0 %v241
  %v1553 = vpop.f32.mrf.mxu0
  %v1554 = vadd.f32 0.0, %v1553
  %v1555 = vpop.f32.mrf.mxu0
  %v1556 = vadd.f32 0.0, %v1555
  %1557 = vdwg.mxu0
  %1558 = vmatprep.subr.mxu0 %v1390
  %1559 = vmatpush1.msra.mxu0 %v1389
  %1560 = vmatprep.subr.mxu0 %v1388
  %1561 = vmatpush1.msra.mxu0 %v1387
  %1562 = vmatprep.subr.mxu0 %v1386
  %1563 = vmatpush1.msra.mxu0 %v1385
  %1564 = vmatprep.subr.mxu0 %v1384
  %1565 = vmatpush1.msra.mxu0 %v1383
  %1566 = vmatprep.subr.mxu0 %v1382
  %1567 = vmatpush1.msra.mxu0 %v1381
  %1568 = vmatprep.subr.mxu0 %v1380
  %1569 = vmatpush1.msra.mxu0 %v1379
  %1570 = vmatprep.subr.mxu0 %v1378
  %1571 = vmatpush1.msra.mxu0 %v1377
  %1572 = vmatprep.subr.mxu0 %v1376
  %1573 = vmatpush1.msra.mxu0 %v1375
  %1574 = vmatprep.subr.mxu0 %v1374
  %1575 = vmatpush1.msra.mxu0 %v1373
  %1576 = vmatprep.subr.mxu0 %v1372
  %1577 = vmatpush1.msra.mxu0 %v1371
  %1578 = vmatprep.subr.mxu0 %v1370
  %1579 = vmatpush1.msra.mxu0 %v1369
  %1580 = vmatprep.subr.mxu0 %v1368
  %1581 = vmatpush1.msra.mxu0 %v1367
  %1582 = vmatprep.subr.mxu0 %v1366
  %1583 = vmatpush1.msra.mxu0 %v1365
  %1584 = vmatprep.subr.mxu0 %v1364
  %1585 = vmatpush1.msra.mxu0 %v1363
  %1586 = vmatprep.subr.mxu0 %v1362
  %1587 = vmatpush1.msra.mxu0 %v1361
  %1588 = vmatprep.subr.mxu0 %v1360
  %1589 = vmatpush1.msra.mxu0 %v1359
  %1590 = vmatprep.subr.mxu0 %v1422
  %1591 = vmatpush2.msra.mxu0 %v1421
  %1592 = vmatprep.subr.mxu0 %v1420
  %1593 = vmatpush2.msra.mxu0 %v1419
  %1594 = vmatprep.subr.mxu0 %v1418
  %1595 = vmatpush2.msra.mxu0 %v1417
  %1596 = vmatprep.subr.mxu0 %v1416
  %1597 = vmatpush2.msra.mxu0 %v1415
  %1598 = vmatprep.subr.mxu0 %v1414
  %1599 = vmatpush2.msra.mxu0 %v1413
  %1600 = vmatprep.subr.mxu0 %v1412
  %1601 = vmatpush2.msra.mxu0 %v1411
  %1602 = vmatprep.subr.mxu0 %v1410
  %1603 = vmatpush2.msra.mxu0 %v1409
  %1604 = vmatprep.subr.mxu0 %v1408
  %1605 = vmatpush2.msra.mxu0 %v1407
  %1606 = vmatprep.subr.mxu0 %v1406
  %1607 = vmatpush2.msra.mxu0 %v1405
  %1608 = vmatprep.subr.mxu0 %v1404
  %1609 = vmatpush2.msra.mxu0 %v1403
  %1610 = vmatprep.subr.mxu0 %v1402
  %1611 = vmatpush2.msra.mxu0 %v1401
  %1612 = vmatprep.subr.mxu0 %v1400
  %1613 = vmatpush2.msra.mxu0 %v1399
  %1614 = vmatprep.subr.mxu0 %v1398
  %1615 = vmatpush2.msra.mxu0 %v1397
  %1616 = vmatprep.subr.mxu0 %v1396
  %1617 = vmatpush2.msra.mxu0 %v1395
  %1618 = vmatprep.subr.mxu0 %v1394
  %1619 = vmatpush2.msra.mxu0 %v1393
  %1620 = vmatprep.subr.mxu0 %v1392
  %1621 = vmatpush2.msra.mxu0 %v1391
  %1622 = vmatprep.mubr.f32.mxu0 %v250
  %1623 = vmatmul.mubr.f32.gmra.mxu0 %v248
  %v1624 = vpop.f32.mrf.mxu0
  %v1625 = vadd.f32 %v1554, %v1624
  %v1626 = vpop.f32.mrf.mxu0
  %v1627 = vadd.f32 %v1556, %v1626
  %1628 = vdwg.mxu0
  %1629 = vmatprep.subr.mxu0 %v1454
  %1630 = vmatpush1.msra.mxu0 %v1453
  %1631 = vmatprep.subr.mxu0 %v1452
  %1632 = vmatpush1.msra.mxu0 %v1451
  %1633 = vmatprep.subr.mxu0 %v1450
  %1634 = vmatpush1.msra.mxu0 %v1449
  %1635 = vmatprep.subr.mxu0 %v1448
  %1636 = vmatpush1.msra.mxu0 %v1447
  %1637 = vmatprep.subr.mxu0 %v1446
  %1638 = vmatpush1.msra.mxu0 %v1445
  %1639 = vmatprep.subr.mxu0 %v1444
  %1640 = vmatpush1.msra.mxu0 %v1443
  %1641 = vmatprep.subr.mxu0 %v1442
  %1642 = vmatpush1.msra.mxu0 %v1441
  %1643 = vmatprep.subr.mxu0 %v1440
  %1644 = vmatpush1.msra.mxu0 %v1439
  %1645 = vmatprep.subr.mxu0 %v1438
  %1646 = vmatpush1.msra.mxu0 %v1437
  %1647 = vmatprep.subr.mxu0 %v1436
  %1648 = vmatpush1.msra.mxu0 %v1435
  %1649 = vmatprep.subr.mxu0 %v1434
  %1650 = vmatpush1.msra.mxu0 %v1433
  %1651 = vmatprep.subr.mxu0 %v1432
  %1652 = vmatpush1.msra.mxu0 %v1431
  %1653 = vmatprep.subr.mxu0 %v1430
  %1654 = vmatpush1.msra.mxu0 %v1429
  %1655 = vmatprep.subr.mxu0 %v1428
  %1656 = vmatpush1.msra.mxu0 %v1427
  %1657 = vmatprep.subr.mxu0 %v1426
  %1658 = vmatpush1.msra.mxu0 %v1425
  %1659 = vmatprep.subr.mxu0 %v1424
  %1660 = vmatpush1.msra.mxu0 %v1423
  %1661 = vmatprep.subr.mxu0 %v1486
  %1662 = vmatpush2.msra.mxu0 %v1485
  %1663 = vmatprep.subr.mxu0 %v1484
  %1664 = vmatpush2.msra.mxu0 %v1483
  %1665 = vmatprep.subr.mxu0 %v1482
  %1666 = vmatpush2.msra.mxu0 %v1481
  %1667 = vmatprep.subr.mxu0 %v1480
  %1668 = vmatpush2.msra.mxu0 %v1479
  %1669 = vmatprep.subr.mxu0 %v1478
  %1670 = vmatpush2.msra.mxu0 %v1477
  %1671 = vmatprep.subr.mxu0 %v1476
  %1672 = vmatpush2.msra.mxu0 %v1475
  %1673 = vmatprep.subr.mxu0 %v1474
  %1674 = vmatpush2.msra.mxu0 %v1473
  %1675 = vmatprep.subr.mxu0 %v1472
  %1676 = vmatpush2.msra.mxu0 %v1471
  %1677 = vmatprep.subr.mxu0 %v1470
  %1678 = vmatpush2.msra.mxu0 %v1469
  %1679 = vmatprep.subr.mxu0 %v1468
  %1680 = vmatpush2.msra.mxu0 %v1467
  %1681 = vmatprep.subr.mxu0 %v1466
  %1682 = vmatpush2.msra.mxu0 %v1465
  %1683 = vmatprep.subr.mxu0 %v1464
  %1684 = vmatpush2.msra.mxu0 %v1463
  %1685 = vmatprep.subr.mxu0 %v1462
  %1686 = vmatpush2.msra.mxu0 %v1461
  %1687 = vmatprep.subr.mxu0 %v1460
  %1688 = vmatpush2.msra.mxu0 %v1459
  %1689 = vmatprep.subr.mxu0 %v1458
  %1690 = vmatpush2.msra.mxu0 %v1457
  %1691 = vmatprep.subr.mxu0 %v1456
  %1692 = vmatpush2.msra.mxu0 %v1455
  %1693 = vmatprep.mubr.f32.mxu0 %v258
  %1694 = vmatmul.mubr.f32.gmra.mxu0 %v257
  %v1695 = vpop.f32.mrf.mxu0
  %v1696 = vadd.f32 %v1625, %v1695
  %v1697 = vpop.f32.mrf.mxu0
  %v1698 = vadd.f32 %v1627, %v1697
  %1699 = vdwg.mxu0
  %v1700 = vmax.f32 %v1292, %v1696
  %v1701 = vmax.f32 %v1293, %v1698
  %v1702 = vld [vmem:[%s2] sm:$0x3]
  %v1704 = vlaneseq
  %v1705 = vshrl.u32 %v1704, 7
  %v1706 = vsub.s32 0, %v1705
  %v1707 = vrot.slane %v1702, %v1706
  %v1708 = vlaneseq
  %v1709 = vshrl.u32 %v1708, 7
  %v1710 = vsub.s32 1, %v1709
  %v1711 = vrot.slane %v1702, %v1710
  %v1714 = vadd.f32 %v1700, %v1707
  %v1715 = vadd.f32 %v1701, %v1711
  %v1716 = vmax.f32 %v1714, 0.0
  %v1717 = vmax.f32 %v1715, 0.0
  %v1718 = vld [vmem:[%s3] sm:$0xff]
  %v1719 = vld [vmem:[%s3 + $0x8] sm:$0xff]
  %v1720 = vld [vmem:[%s3 + $0x10] sm:$0xff]
  %v1721 = vld [vmem:[%s3 + $0x18] sm:$0xff]
  %v1722 = vld [vmem:[%s3 + $0x20] sm:$0xff]
  %v1723 = vld [vmem:[%s3 + $0x28] sm:$0xff]
  %v1724 = vld [vmem:[%s3 + $0x30] sm:$0xff]
  %v1725 = vld [vmem:[%s3 + $0x38] sm:$0xff]
  %v1726 = vld [vmem:[%s3 + $0x40] sm:$0xff]
  %v1727 = vld [vmem:[%s3 + $0x48] sm:$0xff]
  %v1728 = vld [vmem:[%s3 + $0x50] sm:$0xff]
  %v1729 = vld [vmem:[%s3 + $0x58] sm:$0xff]
  %v1730 = vld [vmem:[%s3 + $0x60] sm:$0xff]
  %v1731 = vld [vmem:[%s3 + $0x68] sm:$0xff]
  %v1732 = vld [vmem:[%s3 + $0x70] sm:$0xff]
  %v1733 = vld [vmem:[%s3 + $0x78] sm:$0xff]
  %v1734 = vld [vmem:[%s3 + $0x80] sm:$0xff]
  %v1735 = vld [vmem:[%s3 + $0x88] sm:$0xff]
  %v1736 = vld [vmem:[%s3 + $0x90] sm:$0xff]
  %v1737 = vld [vmem:[%s3 + $0x98] sm:$0xff]
  %v1738 = vld [vmem:[%s3 + $0xa0] sm:$0xff]
  %v1739 = vld [vmem:[%s3 + $0xa8] sm:$0xff]
  %v1740 = vld [vmem:[%s3 + $0xb0] sm:$0xff]
  %v1741 = vld [vmem:[%s3 + $0xb8] sm:$0xff]
  %v1742 = vld [vmem:[%s3 + $0xc0] sm:$0xff]
  %v1743 = vld [vmem:[%s3 + $0xc8] sm:$0xff]
  %v1744 = vld [vmem:[%s3 + $0xd0] sm:$0xff]
  %v1745 = vld [vmem:[%s3 + $0xd8] sm:$0xff]
  %v1746 = vld [vmem:[%s3 + $0xe0] sm:$0xff]
  %v1747 = vld [vmem:[%s3 + $0xe8] sm:$0xff]
  %v1748 = vld [vmem:[%s3 + $0xf0] sm:$0xff]
  %v1749 = vld [vmem:[%s3 + $0xf8] sm:$0xf]
  %vm1750 = vcmask 1014784
  %v1752 = vsel %vm1750, %v1717, 0
  %vm1754 = vcmask 1043456
  %v1756 = vsel %vm1754, %v1749, 0
  %1758 = vmatprep.subr.mxu0 0.0
  %1759 = vmatpush1.msra.mxu0 %v1733
  %1760 = vmatprep.subr.mxu0 0.0
  %1761 = vmatpush1.msra.mxu0 %v1732
  %1762 = vmatprep.subr.mxu0 0.0
  %1763 = vmatpush1.msra.mxu0 %v1731
  %1764 = vmatprep.subr.mxu0 0.0
  %1765 = vmatpush1.msra.mxu0 %v1730
  %1766 = vmatprep.subr.mxu0 0.0
  %1767 = vmatpush1.msra.mxu0 %v1729
  %1768 = vmatprep.subr.mxu0 0.0
  %1769 = vmatpush1.msra.mxu0 %v1728
  %1770 = vmatprep.subr.mxu0 0.0
  %1771 = vmatpush1.msra.mxu0 %v1727
  %1772 = vmatprep.subr.mxu0 0.0
  %1773 = vmatpush1.msra.mxu0 %v1726
  %1774 = vmatprep.subr.mxu0 0.0
  %1775 = vmatpush1.msra.mxu0 %v1725
  %1776 = vmatprep.subr.mxu0 0.0
  %1777 = vmatpush1.msra.mxu0 %v1724
  %1778 = vmatprep.subr.mxu0 0.0
  %1779 = vmatpush1.msra.mxu0 %v1723
  %1780 = vmatprep.subr.mxu0 0.0
  %1781 = vmatpush1.msra.mxu0 %v1722
  %1782 = vmatprep.subr.mxu0 0.0
  %1783 = vmatpush1.msra.mxu0 %v1721
  %1784 = vmatprep.subr.mxu0 0.0
  %1785 = vmatpush1.msra.mxu0 %v1720
  %1786 = vmatprep.subr.mxu0 0.0
  %1787 = vmatpush1.msra.mxu0 %v1719
  %1788 = vmatprep.subr.mxu0 0.0
  %1789 = vmatpush1.msra.mxu0 %v1718
  %1790 = vmatprep.subr.mxu0 0.0
  %1791 = vmatpush2.msra.mxu0 %v1756
  %1792 = vmatprep.subr.mxu0 0.0
  %1793 = vmatpush2.msra.mxu0 %v1748
  %1794 = vmatprep.subr.mxu0 0.0
  %1795 = vmatpush2.msra.mxu0 %v1747
  %1796 = vmatprep.subr.mxu0 0.0
  %1797 = vmatpush2.msra.mxu0 %v1746
  %1798 = vmatprep.subr.mxu0 0.0
  %1799 = vmatpush2.msra.mxu0 %v1745
  %1800 = vmatprep.subr.mxu0 0.0
  %1801 = vmatpush2.msra.mxu0 %v1744
  %1802 = vmatprep.subr.mxu0 0.0
  %1803 = vmatpush2.msra.mxu0 %v1743
  %1804 = vmatprep.subr.mxu0 0.0
  %1805 = vmatpush2.msra.mxu0 %v1742
  %1806 = vmatprep.subr.mxu0 0.0
  %1807 = vmatpush2.msra.mxu0 %v1741
  %1808 = vmatprep.subr.mxu0 0.0
  %1809 = vmatpush2.msra.mxu0 %v1740
  %1810 = vmatprep.subr.mxu0 0.0
  %1811 = vmatpush2.msra.mxu0 %v1739
  %1812 = vmatprep.subr.mxu0 0.0
  %1813 = vmatpush2.msra.mxu0 %v1738
  %1814 = vmatprep.subr.mxu0 0.0
  %1815 = vmatpush2.msra.mxu0 %v1737
  %1816 = vmatprep.subr.mxu0 0.0
  %1817 = vmatpush2.msra.mxu0 %v1736
  %1818 = vmatprep.subr.mxu0 0.0
  %1819 = vmatpush2.msra.mxu0 %v1735
  %1820 = vmatprep.subr.mxu0 0.0
  %1821 = vmatpush2.msra.mxu0 %v1734
  %1822 = vmatprep.mubr.f32.mxu0 %v1752
  %1823 = vmatmul.mubr.f32.gmra.mxu0 %v1716
  %v1824 = vpop.f32.mrf.mxu0
  %v1825 = vadd.f32 0.0, %v1824
  %v1826 = vpop.f32.mrf.mxu0
  %1827 = vdwg.mxu0
  %s1828 = scalar_lea.vmem %s3, 256
  %v1829 = vld [vmem:[%s1828] sm:$0xff]
  %v1830 = vld [vmem:[%s1828 + $0x8] sm:$0xff]
  %v1831 = vld [vmem:[%s1828 + $0x10] sm:$0xff]
  %v1832 = vld [vmem:[%s1828 + $0x18] sm:$0xff]
  %v1833 = vld [vmem:[%s1828 + $0x20] sm:$0xff]
  %v1834 = vld [vmem:[%s1828 + $0x28] sm:$0xff]
  %v1835 = vld [vmem:[%s1828 + $0x30] sm:$0xff]
  %v1836 = vld [vmem:[%s1828 + $0x38] sm:$0xff]
  %v1837 = vld [vmem:[%s1828 + $0x40] sm:$0xff]
  %v1838 = vld [vmem:[%s1828 + $0x48] sm:$0xff]
  %v1839 = vld [vmem:[%s1828 + $0x50] sm:$0xff]
  %v1840 = vld [vmem:[%s1828 + $0x58] sm:$0xff]
  %v1841 = vld [vmem:[%s1828 + $0x60] sm:$0xff]
  %v1842 = vld [vmem:[%s1828 + $0x68] sm:$0xff]
  %v1843 = vld [vmem:[%s1828 + $0x70] sm:$0xff]
  %v1844 = vld [vmem:[%s1828 + $0x78] sm:$0xff]
  %v1845 = vld [vmem:[%s1828 + $0x80] sm:$0xff]
  %v1846 = vld [vmem:[%s1828 + $0x88] sm:$0xff]
  %v1847 = vld [vmem:[%s1828 + $0x90] sm:$0xff]
  %v1848 = vld [vmem:[%s1828 + $0x98] sm:$0xff]
  %v1849 = vld [vmem:[%s1828 + $0xa0] sm:$0xff]
  %v1850 = vld [vmem:[%s1828 + $0xa8] sm:$0xff]
  %v1851 = vld [vmem:[%s1828 + $0xb0] sm:$0xff]
  %v1852 = vld [vmem:[%s1828 + $0xb8] sm:$0xff]
  %v1853 = vld [vmem:[%s1828 + $0xc0] sm:$0xff]
  %v1854 = vld [vmem:[%s1828 + $0xc8] sm:$0xff]
  %v1855 = vld [vmem:[%s1828 + $0xd0] sm:$0xff]
  %v1856 = vld [vmem:[%s1828 + $0xd8] sm:$0xff]
  %v1857 = vld [vmem:[%s1828 + $0xe0] sm:$0xff]
  %v1858 = vld [vmem:[%s1828 + $0xe8] sm:$0xff]
  %v1859 = vld [vmem:[%s1828 + $0xf0] sm:$0xff]
  %v1860 = vld [vmem:[%s1828 + $0xf8] sm:$0xf]
  %v1862 = vsel %vm1754, %v1860, 0
  %1864 = vmatprep.subr.mxu0 0.0
  %1865 = vmatpush1.msra.mxu0 %v1844
  %1866 = vmatprep.subr.mxu0 0.0
  %1867 = vmatpush1.msra.mxu0 %v1843
  %1868 = vmatprep.subr.mxu0 0.0
  %1869 = vmatpush1.msra.mxu0 %v1842
  %1870 = vmatprep.subr.mxu0 0.0
  %1871 = vmatpush1.msra.mxu0 %v1841
  %1872 = vmatprep.subr.mxu0 0.0
  %1873 = vmatpush1.msra.mxu0 %v1840
  %1874 = vmatprep.subr.mxu0 0.0
  %1875 = vmatpush1.msra.mxu0 %v1839
  %1876 = vmatprep.subr.mxu0 0.0
  %1877 = vmatpush1.msra.mxu0 %v1838
  %1878 = vmatprep.subr.mxu0 0.0
  %1879 = vmatpush1.msra.mxu0 %v1837
  %1880 = vmatprep.subr.mxu0 0.0
  %1881 = vmatpush1.msra.mxu0 %v1836
  %1882 = vmatprep.subr.mxu0 0.0
  %1883 = vmatpush1.msra.mxu0 %v1835
  %1884 = vmatprep.subr.mxu0 0.0
  %1885 = vmatpush1.msra.mxu0 %v1834
  %1886 = vmatprep.subr.mxu0 0.0
  %1887 = vmatpush1.msra.mxu0 %v1833
  %1888 = vmatprep.subr.mxu0 0.0
  %1889 = vmatpush1.msra.mxu0 %v1832
  %1890 = vmatprep.subr.mxu0 0.0
  %1891 = vmatpush1.msra.mxu0 %v1831
  %1892 = vmatprep.subr.mxu0 0.0
  %1893 = vmatpush1.msra.mxu0 %v1830
  %1894 = vmatprep.subr.mxu0 0.0
  %1895 = vmatpush1.msra.mxu0 %v1829
  %1896 = vmatprep.subr.mxu0 0.0
  %1897 = vmatpush2.msra.mxu0 %v1862
  %1898 = vmatprep.subr.mxu0 0.0
  %1899 = vmatpush2.msra.mxu0 %v1859
  %1900 = vmatprep.subr.mxu0 0.0
  %1901 = vmatpush2.msra.mxu0 %v1858
  %1902 = vmatprep.subr.mxu0 0.0
  %1903 = vmatpush2.msra.mxu0 %v1857
  %1904 = vmatprep.subr.mxu0 0.0
  %1905 = vmatpush2.msra.mxu0 %v1856
  %1906 = vmatprep.subr.mxu0 0.0
  %1907 = vmatpush2.msra.mxu0 %v1855
  %1908 = vmatprep.subr.mxu0 0.0
  %1909 = vmatpush2.msra.mxu0 %v1854
  %1910 = vmatprep.subr.mxu0 0.0
  %1911 = vmatpush2.msra.mxu0 %v1853
  %1912 = vmatprep.subr.mxu0 0.0
  %1913 = vmatpush2.msra.mxu0 %v1852
  %1914 = vmatprep.subr.mxu0 0.0
  %1915 = vmatpush2.msra.mxu0 %v1851
  %1916 = vmatprep.subr.mxu0 0.0
  %1917 = vmatpush2.msra.mxu0 %v1850
  %1918 = vmatprep.subr.mxu0 0.0
  %1919 = vmatpush2.msra.mxu0 %v1849
  %1920 = vmatprep.subr.mxu0 0.0
  %1921 = vmatpush2.msra.mxu0 %v1848
  %1922 = vmatprep.subr.mxu0 0.0
  %1923 = vmatpush2.msra.mxu0 %v1847
  %1924 = vmatprep.subr.mxu0 0.0
  %1925 = vmatpush2.msra.mxu0 %v1846
  %1926 = vmatprep.subr.mxu0 0.0
  %1927 = vmatpush2.msra.mxu0 %v1845
  %1928 = vmatprep.mubr.f32.mxu0 %v1752
  %1929 = vmatmul.mubr.f32.gmra.mxu0 %v1716
  %v1930 = vpop.f32.mrf.mxu0
  %v1931 = vadd.f32 0.0, %v1930
  %v1932 = vpop.f32.mrf.mxu0
  %1933 = vdwg.mxu0
  %v1934 = vmax.f32 %v1825, %v1931
  %s1935 = scalar_lea.vmem %s3, 512
  %v1936 = vld [vmem:[%s1935] sm:$0xff]
  %v1937 = vld [vmem:[%s1935 + $0x8] sm:$0xff]
  %v1938 = vld [vmem:[%s1935 + $0x10] sm:$0xff]
  %v1939 = vld [vmem:[%s1935 + $0x18] sm:$0xff]
  %v1940 = vld [vmem:[%s1935 + $0x20] sm:$0xff]
  %v1941 = vld [vmem:[%s1935 + $0x28] sm:$0xff]
  %v1942 = vld [vmem:[%s1935 + $0x30] sm:$0xff]
  %v1943 = vld [vmem:[%s1935 + $0x38] sm:$0xff]
  %v1944 = vld [vmem:[%s1935 + $0x40] sm:$0xff]
  %v1945 = vld [vmem:[%s1935 + $0x48] sm:$0xff]
  %v1946 = vld [vmem:[%s1935 + $0x50] sm:$0xff]
  %v1947 = vld [vmem:[%s1935 + $0x58] sm:$0xff]
  %v1948 = vld [vmem:[%s1935 + $0x60] sm:$0xff]
  %v1949 = vld [vmem:[%s1935 + $0x68] sm:$0xff]
  %v1950 = vld [vmem:[%s1935 + $0x70] sm:$0xff]
  %v1951 = vld [vmem:[%s1935 + $0x78] sm:$0xff]
  %v1952 = vld [vmem:[%s1935 + $0x80] sm:$0xff]
  %v1953 = vld [vmem:[%s1935 + $0x88] sm:$0xff]
  %v1954 = vld [vmem:[%s1935 + $0x90] sm:$0xff]
  %v1955 = vld [vmem:[%s1935 + $0x98] sm:$0xff]
  %v1956 = vld [vmem:[%s1935 + $0xa0] sm:$0xff]
  %v1957 = vld [vmem:[%s1935 + $0xa8] sm:$0xff]
  %v1958 = vld [vmem:[%s1935 + $0xb0] sm:$0xff]
  %v1959 = vld [vmem:[%s1935 + $0xb8] sm:$0xff]
  %v1960 = vld [vmem:[%s1935 + $0xc0] sm:$0xff]
  %v1961 = vld [vmem:[%s1935 + $0xc8] sm:$0xff]
  %v1962 = vld [vmem:[%s1935 + $0xd0] sm:$0xff]
  %v1963 = vld [vmem:[%s1935 + $0xd8] sm:$0xff]
  %v1964 = vld [vmem:[%s1935 + $0xe0] sm:$0xff]
  %v1965 = vld [vmem:[%s1935 + $0xe8] sm:$0xff]
  %v1966 = vld [vmem:[%s1935 + $0xf0] sm:$0xff]
  %v1967 = vld [vmem:[%s1935 + $0xf8] sm:$0xf]
  %v1969 = vsel %vm1754, %v1967, 0
  %1971 = vmatprep.subr.mxu0 0.0
  %1972 = vmatpush1.msra.mxu0 %v1951
  %1973 = vmatprep.subr.mxu0 0.0
  %1974 = vmatpush1.msra.mxu0 %v1950
  %1975 = vmatprep.subr.mxu0 0.0
  %1976 = vmatpush1.msra.mxu0 %v1949
  %1977 = vmatprep.subr.mxu0 0.0
  %1978 = vmatpush1.msra.mxu0 %v1948
  %1979 = vmatprep.subr.mxu0 0.0
  %1980 = vmatpush1.msra.mxu0 %v1947
  %1981 = vmatprep.subr.mxu0 0.0
  %1982 = vmatpush1.msra.mxu0 %v1946
  %1983 = vmatprep.subr.mxu0 0.0
  %1984 = vmatpush1.msra.mxu0 %v1945
  %1985 = vmatprep.subr.mxu0 0.0
  %1986 = vmatpush1.msra.mxu0 %v1944
  %1987 = vmatprep.subr.mxu0 0.0
  %1988 = vmatpush1.msra.mxu0 %v1943
  %1989 = vmatprep.subr.mxu0 0.0
  %1990 = vmatpush1.msra.mxu0 %v1942
  %1991 = vmatprep.subr.mxu0 0.0
  %1992 = vmatpush1.msra.mxu0 %v1941
  %1993 = vmatprep.subr.mxu0 0.0
  %1994 = vmatpush1.msra.mxu0 %v1940
  %1995 = vmatprep.subr.mxu0 0.0
  %1996 = vmatpush1.msra.mxu0 %v1939
  %1997 = vmatprep.subr.mxu0 0.0
  %1998 = vmatpush1.msra.mxu0 %v1938
  %1999 = vmatprep.subr.mxu0 0.0
  %2000 = vmatpush1.msra.mxu0 %v1937
  %2001 = vmatprep.subr.mxu0 0.0
  %2002 = vmatpush1.msra.mxu0 %v1936
  %2003 = vmatprep.subr.mxu0 0.0
  %2004 = vmatpush2.msra.mxu0 %v1969
  %2005 = vmatprep.subr.mxu0 0.0
  %2006 = vmatpush2.msra.mxu0 %v1966
  %2007 = vmatprep.subr.mxu0 0.0
  %2008 = vmatpush2.msra.mxu0 %v1965
  %2009 = vmatprep.subr.mxu0 0.0
  %2010 = vmatpush2.msra.mxu0 %v1964
  %2011 = vmatprep.subr.mxu0 0.0
  %2012 = vmatpush2.msra.mxu0 %v1963
  %2013 = vmatprep.subr.mxu0 0.0
  %2014 = vmatpush2.msra.mxu0 %v1962
  %2015 = vmatprep.subr.mxu0 0.0
  %2016 = vmatpush2.msra.mxu0 %v1961
  %2017 = vmatprep.subr.mxu0 0.0
  %2018 = vmatpush2.msra.mxu0 %v1960
  %2019 = vmatprep.subr.mxu0 0.0
  %2020 = vmatpush2.msra.mxu0 %v1959
  %2021 = vmatprep.subr.mxu0 0.0
  %2022 = vmatpush2.msra.mxu0 %v1958
  %2023 = vmatprep.subr.mxu0 0.0
  %2024 = vmatpush2.msra.mxu0 %v1957
  %2025 = vmatprep.subr.mxu0 0.0
  %2026 = vmatpush2.msra.mxu0 %v1956
  %2027 = vmatprep.subr.mxu0 0.0
  %2028 = vmatpush2.msra.mxu0 %v1955
  %2029 = vmatprep.subr.mxu0 0.0
  %2030 = vmatpush2.msra.mxu0 %v1954
  %2031 = vmatprep.subr.mxu0 0.0
  %2032 = vmatpush2.msra.mxu0 %v1953
  %2033 = vmatprep.subr.mxu0 0.0
  %2034 = vmatpush2.msra.mxu0 %v1952
  %2035 = vmatprep.mubr.f32.mxu0 %v1752
  %2036 = vmatmul.mubr.f32.gmra.mxu0 %v1716
  %v2037 = vpop.f32.mrf.mxu0
  %v2038 = vadd.f32 0.0, %v2037
  %v2039 = vpop.f32.mrf.mxu0
  %2040 = vdwg.mxu0
  %v2041 = vmax.f32 %v1934, %v2038
  %s2042 = scalar_lea.vmem %s3, 768
  %v2043 = vld [vmem:[%s2042] sm:$0xff]
  %v2044 = vld [vmem:[%s2042 + $0x8] sm:$0xff]
  %v2045 = vld [vmem:[%s2042 + $0x10] sm:$0xff]
  %v2046 = vld [vmem:[%s2042 + $0x18] sm:$0xff]
  %v2047 = vld [vmem:[%s2042 + $0x20] sm:$0xff]
  %v2048 = vld [vmem:[%s2042 + $0x28] sm:$0xff]
  %v2049 = vld [vmem:[%s2042 + $0x30] sm:$0xff]
  %v2050 = vld [vmem:[%s2042 + $0x38] sm:$0xff]
  %v2051 = vld [vmem:[%s2042 + $0x40] sm:$0xff]
  %v2052 = vld [vmem:[%s2042 + $0x48] sm:$0xff]
  %v2053 = vld [vmem:[%s2042 + $0x50] sm:$0xff]
  %v2054 = vld [vmem:[%s2042 + $0x58] sm:$0xff]
  %v2055 = vld [vmem:[%s2042 + $0x60] sm:$0xff]
  %v2056 = vld [vmem:[%s2042 + $0x68] sm:$0xff]
  %v2057 = vld [vmem:[%s2042 + $0x70] sm:$0xff]
  %v2058 = vld [vmem:[%s2042 + $0x78] sm:$0xff]
  %v2059 = vld [vmem:[%s2042 + $0x80] sm:$0xff]
  %v2060 = vld [vmem:[%s2042 + $0x88] sm:$0xff]
  %v2061 = vld [vmem:[%s2042 + $0x90] sm:$0xff]
  %v2062 = vld [vmem:[%s2042 + $0x98] sm:$0xff]
  %v2063 = vld [vmem:[%s2042 + $0xa0] sm:$0xff]
  %v2064 = vld [vmem:[%s2042 + $0xa8] sm:$0xff]
  %v2065 = vld [vmem:[%s2042 + $0xb0] sm:$0xff]
  %v2066 = vld [vmem:[%s2042 + $0xb8] sm:$0xff]
  %v2067 = vld [vmem:[%s2042 + $0xc0] sm:$0xff]
  %v2068 = vld [vmem:[%s2042 + $0xc8] sm:$0xff]
  %v2069 = vld [vmem:[%s2042 + $0xd0] sm:$0xff]
  %v2070 = vld [vmem:[%s2042 + $0xd8] sm:$0xff]
  %v2071 = vld [vmem:[%s2042 + $0xe0] sm:$0xff]
  %v2072 = vld [vmem:[%s2042 + $0xe8] sm:$0xff]
  %v2073 = vld [vmem:[%s2042 + $0xf0] sm:$0xff]
  %v2074 = vld [vmem:[%s2042 + $0xf8] sm:$0xf]
  %v2076 = vsel %vm1754, %v2074, 0
  %2078 = vmatprep.subr.mxu0 0.0
  %2079 = vmatpush1.msra.mxu0 %v2058
  %2080 = vmatprep.subr.mxu0 0.0
  %2081 = vmatpush1.msra.mxu0 %v2057
  %2082 = vmatprep.subr.mxu0 0.0
  %2083 = vmatpush1.msra.mxu0 %v2056
  %2084 = vmatprep.subr.mxu0 0.0
  %2085 = vmatpush1.msra.mxu0 %v2055
  %2086 = vmatprep.subr.mxu0 0.0
  %2087 = vmatpush1.msra.mxu0 %v2054
  %2088 = vmatprep.subr.mxu0 0.0
  %2089 = vmatpush1.msra.mxu0 %v2053
  %2090 = vmatprep.subr.mxu0 0.0
  %2091 = vmatpush1.msra.mxu0 %v2052
  %2092 = vmatprep.subr.mxu0 0.0
  %2093 = vmatpush1.msra.mxu0 %v2051
  %2094 = vmatprep.subr.mxu0 0.0
  %2095 = vmatpush1.msra.mxu0 %v2050
  %2096 = vmatprep.subr.mxu0 0.0
  %2097 = vmatpush1.msra.mxu0 %v2049
  %2098 = vmatprep.subr.mxu0 0.0
  %2099 = vmatpush1.msra.mxu0 %v2048
  %2100 = vmatprep.subr.mxu0 0.0
  %2101 = vmatpush1.msra.mxu0 %v2047
  %2102 = vmatprep.subr.mxu0 0.0
  %2103 = vmatpush1.msra.mxu0 %v2046
  %2104 = vmatprep.subr.mxu0 0.0
  %2105 = vmatpush1.msra.mxu0 %v2045
  %2106 = vmatprep.subr.mxu0 0.0
  %2107 = vmatpush1.msra.mxu0 %v2044
  %2108 = vmatprep.subr.mxu0 0.0
  %2109 = vmatpush1.msra.mxu0 %v2043
  %2110 = vmatprep.subr.mxu0 0.0
  %2111 = vmatpush2.msra.mxu0 %v2076
  %2112 = vmatprep.subr.mxu0 0.0
  %2113 = vmatpush2.msra.mxu0 %v2073
  %2114 = vmatprep.subr.mxu0 0.0
  %2115 = vmatpush2.msra.mxu0 %v2072
  %2116 = vmatprep.subr.mxu0 0.0
  %2117 = vmatpush2.msra.mxu0 %v2071
  %2118 = vmatprep.subr.mxu0 0.0
  %2119 = vmatpush2.msra.mxu0 %v2070
  %2120 = vmatprep.subr.mxu0 0.0
  %2121 = vmatpush2.msra.mxu0 %v2069
  %2122 = vmatprep.subr.mxu0 0.0
  %2123 = vmatpush2.msra.mxu0 %v2068
  %2124 = vmatprep.subr.mxu0 0.0
  %2125 = vmatpush2.msra.mxu0 %v2067
  %2126 = vmatprep.subr.mxu0 0.0
  %2127 = vmatpush2.msra.mxu0 %v2066
  %2128 = vmatprep.subr.mxu0 0.0
  %2129 = vmatpush2.msra.mxu0 %v2065
  %2130 = vmatprep.subr.mxu0 0.0
  %2131 = vmatpush2.msra.mxu0 %v2064
  %2132 = vmatprep.subr.mxu0 0.0
  %2133 = vmatpush2.msra.mxu0 %v2063
  %2134 = vmatprep.subr.mxu0 0.0
  %2135 = vmatpush2.msra.mxu0 %v2062
  %2136 = vmatprep.subr.mxu0 0.0
  %2137 = vmatpush2.msra.mxu0 %v2061
  %2138 = vmatprep.subr.mxu0 0.0
  %2139 = vmatpush2.msra.mxu0 %v2060
  %2140 = vmatprep.subr.mxu0 0.0
  %2141 = vmatpush2.msra.mxu0 %v2059
  %2142 = vmatprep.mubr.f32.mxu0 %v1752
  %2143 = vmatmul.mubr.f32.gmra.mxu0 %v1716
  %v2144 = vpop.f32.mrf.mxu0
  %v2145 = vadd.f32 0.0, %v2144
  %v2146 = vpop.f32.mrf.mxu0
  %2147 = vdwg.mxu0
  %v2148 = vmax.f32 %v2041, %v2145
  %v2149 = vld [vmem:[%s4] sm:$0x1]
  %v2151 = vlaneseq
  %v2152 = vshrl.u32 %v2151, 7
  %v2153 = vsub.s32 0, %v2152
  %v2154 = vrot.slane %v2149, %v2153
  %v2156 = vadd.f32 %v2148, %v2154
  %v2157 = vmax.f32 %v2156, 0.0
  %v2158 = vld [vmem:[%s5] sm:$0xff]
  %v2159 = vld [vmem:[%s5 + $0x8] sm:$0xff]
  %v2160 = vld [vmem:[%s5 + $0x10] sm:$0xff]
  %v2161 = vld [vmem:[%s5 + $0x18] sm:$0xff]
  %v2162 = vld [vmem:[%s5 + $0x20] sm:$0xff]
  %v2163 = vld [vmem:[%s5 + $0x28] sm:$0xff]
  %v2164 = vld [vmem:[%s5 + $0x30] sm:$0xff]
  %v2165 = vld [vmem:[%s5 + $0x38] sm:$0xff]
  %v2166 = vld [vmem:[%s6] sm:$0x1]
  %v2168 = vlaneseq
  %v2169 = vshrl.u32 %v2168, 7
  %v2170 = vsub.s32 0, %v2169
  %v2171 = vrot.slane %v2166, %v2170
  %vm2173 = vcmask 523264
  %v2175 = vsel %vm2173, %v2157, 0
  %2177 = vmatprep.subr.mxu0 0.0
  %2178 = vmatpush1.msra.mxu0 0.0
  %2179 = vmatprep.subr.mxu0 0.0
  %2180 = vmatpush1.msra.mxu0 0.0
  %2181 = vmatprep.subr.mxu0 0.0
  %2182 = vmatpush1.msra.mxu0 0.0
  %2183 = vmatprep.subr.mxu0 0.0
  %2184 = vmatpush1.msra.mxu0 0.0
  %2185 = vmatprep.subr.mxu0 0.0
  %2186 = vmatpush1.msra.mxu0 0.0
  %2187 = vmatprep.subr.mxu0 0.0
  %2188 = vmatpush1.msra.mxu0 0.0
  %2189 = vmatprep.subr.mxu0 0.0
  %2190 = vmatpush1.msra.mxu0 0.0
  %2191 = vmatprep.subr.mxu0 0.0
  %2192 = vmatpush1.msra.mxu0 0.0
  %2193 = vmatprep.subr.mxu0 0.0
  %2194 = vmatpush1.msra.mxu0 %v2165
  %2195 = vmatprep.subr.mxu0 0.0
  %2196 = vmatpush1.msra.mxu0 %v2164
  %2197 = vmatprep.subr.mxu0 0.0
  %2198 = vmatpush1.msra.mxu0 %v2163
  %2199 = vmatprep.subr.mxu0 0.0
  %2200 = vmatpush1.msra.mxu0 %v2162
  %2201 = vmatprep.subr.mxu0 0.0
  %2202 = vmatpush1.msra.mxu0 %v2161
  %2203 = vmatprep.subr.mxu0 0.0
  %2204 = vmatpush1.msra.mxu0 %v2160
  %2205 = vmatprep.subr.mxu0 0.0
  %2206 = vmatpush1.msra.mxu0 %v2159
  %2207 = vmatprep.subr.mxu0 0.0
  %2208 = vmatpush1.msra.mxu0 %v2158
  %2209 = vmatprep.subr.mxu0 0.0
  %2210 = vmatpush2.msra.mxu0 0.0
  %2211 = vmatprep.subr.mxu0 0.0
  %2212 = vmatpush2.msra.mxu0 0.0
  %2213 = vmatprep.subr.mxu0 0.0
  %2214 = vmatpush2.msra.mxu0 0.0
  %2215 = vmatprep.subr.mxu0 0.0
  %2216 = vmatpush2.msra.mxu0 0.0
  %2217 = vmatprep.subr.mxu0 0.0
  %2218 = vmatpush2.msra.mxu0 0.0
  %2219 = vmatprep.subr.mxu0 0.0
  %2220 = vmatpush2.msra.mxu0 0.0
  %2221 = vmatprep.subr.mxu0 0.0
  %2222 = vmatpush2.msra.mxu0 0.0
  %2223 = vmatprep.subr.mxu0 0.0
  %2224 = vmatpush2.msra.mxu0 0.0
  %2225 = vmatprep.subr.mxu0 0.0
  %2226 = vmatpush2.msra.mxu0 0.0
  %2227 = vmatprep.subr.mxu0 0.0
  %2228 = vmatpush2.msra.mxu0 0.0
  %2229 = vmatprep.subr.mxu0 0.0
  %2230 = vmatpush2.msra.mxu0 0.0
  %2231 = vmatprep.subr.mxu0 0.0
  %2232 = vmatpush2.msra.mxu0 0.0
  %2233 = vmatprep.subr.mxu0 0.0
  %2234 = vmatpush2.msra.mxu0 0.0
  %2235 = vmatprep.subr.mxu0 0.0
  %2236 = vmatpush2.msra.mxu0 0.0
  %2237 = vmatprep.subr.mxu0 0.0
  %2238 = vmatpush2.msra.mxu0 0.0
  %2239 = vmatprep.subr.mxu0 0.0
  %2240 = vmatpush2.msra.mxu0 0.0
  %2241 = vmatprep.mubr.f32.mxu0 0.0
  %2242 = vmatmul.mubr.f32.gmra.mxu0 %v2175
  %v2243 = vpop.f32.mrf.mxu0
  %v2244 = vadd.f32 %v2171, %v2243
  %v2245 = vpop.f32.mrf.mxu0
  %2246 = vdwg.mxu0
  %v2247 = vmax.f32 %v2244, 0.0
  %v2248 = vld [vmem:[%s7] sm:$0xff]
  %v2249 = vld [vmem:[%s7 + $0x8] sm:$0xff]
  %v2250 = vld [vmem:[%s7 + $0x10] sm:$0xff]
  %v2251 = vld [vmem:[%s7 + $0x18] sm:$0xff]
  %v2252 = vld [vmem:[%s7 + $0x20] sm:$0xff]
  %v2253 = vld [vmem:[%s7 + $0x28] sm:$0xff]
  %v2254 = vld [vmem:[%s7 + $0x30] sm:$0xff]
  %v2255 = vld [vmem:[%s7 + $0x38] sm:$0xff]
  %v2256 = vld [vmem:[%s7 + $0x40] sm:$0xff]
  %v2257 = vld [vmem:[%s7 + $0x48] sm:$0xff]
  %v2258 = vld [vmem:[%s7 + $0x50] sm:$0xff]
  %v2259 = vld [vmem:[%s7 + $0x58] sm:$0xff]
  %v2260 = vld [vmem:[%s7 + $0x60] sm:$0xff]
  %v2261 = vld [vmem:[%s7 + $0x68] sm:$0xff]
  %v2262 = vld [vmem:[%s7 + $0x70] sm:$0xff]
  %v2263 = vld [vmem:[%s8] sm:$0x1]
  %v2265 = vlaneseq
  %v2266 = vshrl.u32 %v2265, 7
  %v2267 = vsub.s32 0, %v2266
  %v2268 = vrot.slane %v2263, %v2267
  %vm2270 = vcmask 982016
  %v2272 = vsel %vm2270, %v2247, 0
  %2274 = vmatprep.subr.mxu0 0.0
  %2275 = vmatpush1.msra.mxu0 0.0
  %2276 = vmatprep.subr.mxu0 0.0
  %2277 = vmatpush1.msra.mxu0 %v2262
  %2278 = vmatprep.subr.mxu0 0.0
  %2279 = vmatpush1.msra.mxu0 %v2261
  %2280 = vmatprep.subr.mxu0 0.0
  %2281 = vmatpush1.msra.mxu0 %v2260
  %2282 = vmatprep.subr.mxu0 0.0
  %2283 = vmatpush1.msra.mxu0 %v2259
  %2284 = vmatprep.subr.mxu0 0.0
  %2285 = vmatpush1.msra.mxu0 %v2258
  %2286 = vmatprep.subr.mxu0 0.0
  %2287 = vmatpush1.msra.mxu0 %v2257
  %2288 = vmatprep.subr.mxu0 0.0
  %2289 = vmatpush1.msra.mxu0 %v2256
  %2290 = vmatprep.subr.mxu0 0.0
  %2291 = vmatpush1.msra.mxu0 %v2255
  %2292 = vmatprep.subr.mxu0 0.0
  %2293 = vmatpush1.msra.mxu0 %v2254
  %2294 = vmatprep.subr.mxu0 0.0
  %2295 = vmatpush1.msra.mxu0 %v2253
  %2296 = vmatprep.subr.mxu0 0.0
  %2297 = vmatpush1.msra.mxu0 %v2252
  %2298 = vmatprep.subr.mxu0 0.0
  %2299 = vmatpush1.msra.mxu0 %v2251
  %2300 = vmatprep.subr.mxu0 0.0
  %2301 = vmatpush1.msra.mxu0 %v2250
  %2302 = vmatprep.subr.mxu0 0.0
  %2303 = vmatpush1.msra.mxu0 %v2249
  %2304 = vmatprep.subr.mxu0 0.0
  %2305 = vmatpush1.msra.mxu0 %v2248
  %2306 = vmatprep.subr.mxu0 0.0
  %2307 = vmatpush2.msra.mxu0 0.0
  %2308 = vmatprep.subr.mxu0 0.0
  %2309 = vmatpush2.msra.mxu0 0.0
  %2310 = vmatprep.subr.mxu0 0.0
  %2311 = vmatpush2.msra.mxu0 0.0
  %2312 = vmatprep.subr.mxu0 0.0
  %2313 = vmatpush2.msra.mxu0 0.0
  %2314 = vmatprep.subr.mxu0 0.0
  %2315 = vmatpush2.msra.mxu0 0.0
  %2316 = vmatprep.subr.mxu0 0.0
  %2317 = vmatpush2.msra.mxu0 0.0
  %2318 = vmatprep.subr.mxu0 0.0
  %2319 = vmatpush2.msra.mxu0 0.0
  %2320 = vmatprep.subr.mxu0 0.0
  %2321 = vmatpush2.msra.mxu0 0.0
  %2322 = vmatprep.subr.mxu0 0.0
  %2323 = vmatpush2.msra.mxu0 0.0
  %2324 = vmatprep.subr.mxu0 0.0
  %2325 = vmatpush2.msra.mxu0 0.0
  %2326 = vmatprep.subr.mxu0 0.0
  %2327 = vmatpush2.msra.mxu0 0.0
  %2328 = vmatprep.subr.mxu0 0.0
  %2329 = vmatpush2.msra.mxu0 0.0
  %2330 = vmatprep.subr.mxu0 0.0
  %2331 = vmatpush2.msra.mxu0 0.0
  %2332 = vmatprep.subr.mxu0 0.0
  %2333 = vmatpush2.msra.mxu0 0.0
  %2334 = vmatprep.subr.mxu0 0.0
  %2335 = vmatpush2.msra.mxu0 0.0
  %2336 = vmatprep.subr.mxu0 0.0
  %2337 = vmatpush2.msra.mxu0 0.0
  %2338 = vmatprep.mubr.f32.mxu0 0.0
  %2339 = vmatmul.mubr.f32.gmra.mxu0 %v2272
  %v2340 = vpop.f32.mrf.mxu0
  %v2341 = vadd.f32 %v2268, %v2340
  %v2342 = vpop.f32.mrf.mxu0
  %2343 = vdwg.mxu0
  %v2344 = vmax.f32 %v2341, 0.0
  %v2345 = vld [vmem:[%s9] sm:$0xff]
  %v2346 = vld [vmem:[%s9 + $0x8] sm:$0xff]
  %v2347 = vld [vmem:[%s9 + $0x10] sm:$0xff]
  %v2348 = vld [vmem:[%s9 + $0x18] sm:$0xff]
  %v2349 = vld [vmem:[%s9 + $0x20] sm:$0xff]
  %v2350 = vld [vmem:[%s9 + $0x28] sm:$0xff]
  %v2351 = vld [vmem:[%s9 + $0x30] sm:$0xff]
  %v2352 = vld [vmem:[%s9 + $0x38] sm:$0xff]
  %v2353 = vld [vmem:[%s9 + $0x40] sm:$0xff]
  %v2354 = vld [vmem:[%s9 + $0x48] sm:$0xff]
  %v2355 = vld [vmem:[%s9 + $0x50] sm:$0xf]
  %s2356 = scalar_lea.vmem %s5, 64
  %v2357 = vld [vmem:[%s2356] sm:$0xff]
  %v2358 = vld [vmem:[%s2356 + $0x8] sm:$0xff]
  %v2359 = vld [vmem:[%s2356 + $0x10] sm:$0xff]
  %v2360 = vld [vmem:[%s2356 + $0x18] sm:$0xff]
  %v2361 = vld [vmem:[%s2356 + $0x20] sm:$0xff]
  %v2362 = vld [vmem:[%s2356 + $0x28] sm:$0xff]
  %v2363 = vld [vmem:[%s2356 + $0x30] sm:$0xff]
  %v2364 = vld [vmem:[%s2356 + $0x38] sm:$0xff]
  %2365 = vmatprep.subr.mxu0 0.0
  %2366 = vmatpush1.msra.mxu0 0.0
  %2367 = vmatprep.subr.mxu0 0.0
  %2368 = vmatpush1.msra.mxu0 0.0
  %2369 = vmatprep.subr.mxu0 0.0
  %2370 = vmatpush1.msra.mxu0 0.0
  %2371 = vmatprep.subr.mxu0 0.0
  %2372 = vmatpush1.msra.mxu0 0.0
  %2373 = vmatprep.subr.mxu0 0.0
  %2374 = vmatpush1.msra.mxu0 0.0
  %2375 = vmatprep.subr.mxu0 0.0
  %2376 = vmatpush1.msra.mxu0 0.0
  %2377 = vmatprep.subr.mxu0 0.0
  %2378 = vmatpush1.msra.mxu0 0.0
  %2379 = vmatprep.subr.mxu0 0.0
  %2380 = vmatpush1.msra.mxu0 0.0
  %2381 = vmatprep.subr.mxu0 0.0
  %2382 = vmatpush1.msra.mxu0 %v2364
  %2383 = vmatprep.subr.mxu0 0.0
  %2384 = vmatpush1.msra.mxu0 %v2363
  %2385 = vmatprep.subr.mxu0 0.0
  %2386 = vmatpush1.msra.mxu0 %v2362
  %2387 = vmatprep.subr.mxu0 0.0
  %2388 = vmatpush1.msra.mxu0 %v2361
  %2389 = vmatprep.subr.mxu0 0.0
  %2390 = vmatpush1.msra.mxu0 %v2360
  %2391 = vmatprep.subr.mxu0 0.0
  %2392 = vmatpush1.msra.mxu0 %v2359
  %2393 = vmatprep.subr.mxu0 0.0
  %2394 = vmatpush1.msra.mxu0 %v2358
  %2395 = vmatprep.subr.mxu0 0.0
  %2396 = vmatpush1.msra.mxu0 %v2357
  %2397 = vmatprep.subr.mxu0 0.0
  %2398 = vmatpush2.msra.mxu0 0.0
  %2399 = vmatprep.subr.mxu0 0.0
  %2400 = vmatpush2.msra.mxu0 0.0
  %2401 = vmatprep.subr.mxu0 0.0
  %2402 = vmatpush2.msra.mxu0 0.0
  %2403 = vmatprep.subr.mxu0 0.0
  %2404 = vmatpush2.msra.mxu0 0.0
  %2405 = vmatprep.subr.mxu0 0.0
  %2406 = vmatpush2.msra.mxu0 0.0
  %2407 = vmatprep.subr.mxu0 0.0
  %2408 = vmatpush2.msra.mxu0 0.0
  %2409 = vmatprep.subr.mxu0 0.0
  %2410 = vmatpush2.msra.mxu0 0.0
  %2411 = vmatprep.subr.mxu0 0.0
  %2412 = vmatpush2.msra.mxu0 0.0
  %2413 = vmatprep.subr.mxu0 0.0
  %2414 = vmatpush2.msra.mxu0 0.0
  %2415 = vmatprep.subr.mxu0 0.0
  %2416 = vmatpush2.msra.mxu0 0.0
  %2417 = vmatprep.subr.mxu0 0.0
  %2418 = vmatpush2.msra.mxu0 0.0
  %2419 = vmatprep.subr.mxu0 0.0
  %2420 = vmatpush2.msra.mxu0 0.0
  %2421 = vmatprep.subr.mxu0 0.0
  %2422 = vmatpush2.msra.mxu0 0.0
  %2423 = vmatprep.subr.mxu0 0.0
  %2424 = vmatpush2.msra.mxu0 0.0
  %2425 = vmatprep.subr.mxu0 0.0
  %2426 = vmatpush2.msra.mxu0 0.0
  %2427 = vmatprep.subr.mxu0 0.0
  %2428 = vmatpush2.msra.mxu0 0.0
  %2429 = vmatprep.mubr.f32.mxu0 0.0
  %2430 = vmatmul.mubr.f32.gmra.mxu0 %v2175
  %v2431 = vpop.f32.mrf.mxu0
  %v2432 = vadd.f32 %v2171, %v2431
  %v2433 = vpop.f32.mrf.mxu0
  %2434 = vdwg.mxu0
  %v2435 = vmax.f32 %v2432, 0.0
  %v2437 = vsel %vm2270, %v2435, 0
  %2439 = vmatprep.subr.mxu0 0.0
  %2440 = vmatpush1.msra.mxu0 0.0
  %2441 = vmatprep.subr.mxu0 0.0
  %2442 = vmatpush1.msra.mxu0 %v2262
  %2443 = vmatprep.subr.mxu0 0.0
  %2444 = vmatpush1.msra.mxu0 %v2261
  %2445 = vmatprep.subr.mxu0 0.0
  %2446 = vmatpush1.msra.mxu0 %v2260
  %2447 = vmatprep.subr.mxu0 0.0
  %2448 = vmatpush1.msra.mxu0 %v2259
  %2449 = vmatprep.subr.mxu0 0.0
  %2450 = vmatpush1.msra.mxu0 %v2258
  %2451 = vmatprep.subr.mxu0 0.0
  %2452 = vmatpush1.msra.mxu0 %v2257
  %2453 = vmatprep.subr.mxu0 0.0
  %2454 = vmatpush1.msra.mxu0 %v2256
  %2455 = vmatprep.subr.mxu0 0.0
  %2456 = vmatpush1.msra.mxu0 %v2255
  %2457 = vmatprep.subr.mxu0 0.0
  %2458 = vmatpush1.msra.mxu0 %v2254
  %2459 = vmatprep.subr.mxu0 0.0
  %2460 = vmatpush1.msra.mxu0 %v2253
  %2461 = vmatprep.subr.mxu0 0.0
  %2462 = vmatpush1.msra.mxu0 %v2252
  %2463 = vmatprep.subr.mxu0 0.0
  %2464 = vmatpush1.msra.mxu0 %v2251
  %2465 = vmatprep.subr.mxu0 0.0
  %2466 = vmatpush1.msra.mxu0 %v2250
  %2467 = vmatprep.subr.mxu0 0.0
  %2468 = vmatpush1.msra.mxu0 %v2249
  %2469 = vmatprep.subr.mxu0 0.0
  %2470 = vmatpush1.msra.mxu0 %v2248
  %2471 = vmatprep.subr.mxu0 0.0
  %2472 = vmatpush2.msra.mxu0 0.0
  %2473 = vmatprep.subr.mxu0 0.0
  %2474 = vmatpush2.msra.mxu0 0.0
  %2475 = vmatprep.subr.mxu0 0.0
  %2476 = vmatpush2.msra.mxu0 0.0
  %2477 = vmatprep.subr.mxu0 0.0
  %2478 = vmatpush2.msra.mxu0 0.0
  %2479 = vmatprep.subr.mxu0 0.0
  %2480 = vmatpush2.msra.mxu0 0.0
  %2481 = vmatprep.subr.mxu0 0.0
  %2482 = vmatpush2.msra.mxu0 0.0
  %2483 = vmatprep.subr.mxu0 0.0
  %2484 = vmatpush2.msra.mxu0 0.0
  %2485 = vmatprep.subr.mxu0 0.0
  %2486 = vmatpush2.msra.mxu0 0.0
  %2487 = vmatprep.subr.mxu0 0.0
  %2488 = vmatpush2.msra.mxu0 0.0
  %2489 = vmatprep.subr.mxu0 0.0
  %2490 = vmatpush2.msra.mxu0 0.0
  %2491 = vmatprep.subr.mxu0 0.0
  %2492 = vmatpush2.msra.mxu0 0.0
  %2493 = vmatprep.subr.mxu0 0.0
  %2494 = vmatpush2.msra.mxu0 0.0
  %2495 = vmatprep.subr.mxu0 0.0
  %2496 = vmatpush2.msra.mxu0 0.0
  %2497 = vmatprep.subr.mxu0 0.0
  %2498 = vmatpush2.msra.mxu0 0.0
  %2499 = vmatprep.subr.mxu0 0.0
  %2500 = vmatpush2.msra.mxu0 0.0
  %2501 = vmatprep.subr.mxu0 0.0
  %2502 = vmatpush2.msra.mxu0 0.0
  %2503 = vmatprep.mubr.f32.mxu0 0.0
  %2504 = vmatmul.mubr.f32.gmra.mxu0 %v2437
  %v2505 = vpop.f32.mrf.mxu0
  %v2506 = vadd.f32 %v2268, %v2505
  %v2507 = vpop.f32.mrf.mxu0
  %2508 = vdwg.mxu0
  %v2509 = vmax.f32 %v2506, 0.0
  %s2510 = scalar_lea.vmem %s9, 88
  %v2511 = vld [vmem:[%s2510] sm:$0xff]
  %v2512 = vld [vmem:[%s2510 + $0x8] sm:$0xff]
  %v2513 = vld [vmem:[%s2510 + $0x10] sm:$0xff]
  %v2514 = vld [vmem:[%s2510 + $0x18] sm:$0xff]
  %v2515 = vld [vmem:[%s2510 + $0x20] sm:$0xff]
  %v2516 = vld [vmem:[%s2510 + $0x28] sm:$0xff]
  %v2517 = vld [vmem:[%s2510 + $0x30] sm:$0xff]
  %v2518 = vld [vmem:[%s2510 + $0x38] sm:$0xff]
  %v2519 = vld [vmem:[%s2510 + $0x40] sm:$0xff]
  %v2520 = vld [vmem:[%s2510 + $0x48] sm:$0xff]
  %v2521 = vld [vmem:[%s2510 + $0x50] sm:$0xf]
  %vm2522 = vcmask 687104
  %v2524 = vsel %vm2522, %v2509, 0
  %v2527 = vsel %vm1754, %v2521, 0
  %2529 = vmatprep.subr.mxu0 0.0
  %2530 = vmatpush1.msra.mxu0 0.0
  %2531 = vmatprep.subr.mxu0 0.0
  %2532 = vmatpush1.msra.mxu0 0.0
  %2533 = vmatprep.subr.mxu0 0.0
  %2534 = vmatpush1.msra.mxu0 0.0
  %2535 = vmatprep.subr.mxu0 0.0
  %2536 = vmatpush1.msra.mxu0 0.0
  %2537 = vmatprep.subr.mxu0 0.0
  %2538 = vmatpush1.msra.mxu0 0.0
  %2539 = vmatprep.subr.mxu0 0.0
  %2540 = vmatpush1.msra.mxu0 %v2527
  %2541 = vmatprep.subr.mxu0 0.0
  %2542 = vmatpush1.msra.mxu0 %v2520
  %2543 = vmatprep.subr.mxu0 0.0
  %2544 = vmatpush1.msra.mxu0 %v2519
  %2545 = vmatprep.subr.mxu0 0.0
  %2546 = vmatpush1.msra.mxu0 %v2518
  %2547 = vmatprep.subr.mxu0 0.0
  %2548 = vmatpush1.msra.mxu0 %v2517
  %2549 = vmatprep.subr.mxu0 0.0
  %2550 = vmatpush1.msra.mxu0 %v2516
  %2551 = vmatprep.subr.mxu0 0.0
  %2552 = vmatpush1.msra.mxu0 %v2515
  %2553 = vmatprep.subr.mxu0 0.0
  %2554 = vmatpush1.msra.mxu0 %v2514
  %2555 = vmatprep.subr.mxu0 0.0
  %2556 = vmatpush1.msra.mxu0 %v2513
  %2557 = vmatprep.subr.mxu0 0.0
  %2558 = vmatpush1.msra.mxu0 %v2512
  %2559 = vmatprep.subr.mxu0 0.0
  %2560 = vmatpush1.msra.mxu0 %v2511
  %2561 = vmatprep.subr.mxu0 0.0
  %2562 = vmatpush2.msra.mxu0 0.0
  %2563 = vmatprep.subr.mxu0 0.0
  %2564 = vmatpush2.msra.mxu0 0.0
  %2565 = vmatprep.subr.mxu0 0.0
  %2566 = vmatpush2.msra.mxu0 0.0
  %2567 = vmatprep.subr.mxu0 0.0
  %2568 = vmatpush2.msra.mxu0 0.0
  %2569 = vmatprep.subr.mxu0 0.0
  %2570 = vmatpush2.msra.mxu0 0.0
  %2571 = vmatprep.subr.mxu0 0.0
  %2572 = vmatpush2.msra.mxu0 0.0
  %2573 = vmatprep.subr.mxu0 0.0
  %2574 = vmatpush2.msra.mxu0 0.0
  %2575 = vmatprep.subr.mxu0 0.0
  %2576 = vmatpush2.msra.mxu0 0.0
  %2577 = vmatprep.subr.mxu0 0.0
  %2578 = vmatpush2.msra.mxu0 0.0
  %2579 = vmatprep.subr.mxu0 0.0
  %2580 = vmatpush2.msra.mxu0 0.0
  %2581 = vmatprep.subr.mxu0 0.0
  %2582 = vmatpush2.msra.mxu0 0.0
  %2583 = vmatprep.subr.mxu0 0.0
  %2584 = vmatpush2.msra.mxu0 0.0
  %2585 = vmatprep.subr.mxu0 0.0
  %2586 = vmatpush2.msra.mxu0 0.0
  %2587 = vmatprep.subr.mxu0 0.0
  %2588 = vmatpush2.msra.mxu0 0.0
  %2589 = vmatprep.subr.mxu0 0.0
  %2590 = vmatpush2.msra.mxu0 0.0
  %2591 = vmatprep.subr.mxu0 0.0
  %2592 = vmatpush2.msra.mxu0 0.0
  %2593 = vmatprep.mubr.f32.mxu0 0.0
  %2594 = vmatmul.mubr.f32.gmra.mxu0 %v2524
  %v2595 = vpop.f32.mrf.mxu0
  %v2596 = vadd.f32 0.0, %v2595
  %v2597 = vpop.f32.mrf.mxu0
  %2598 = vdwg.mxu0
  %v2600 = vsel %vm2522, %v2344, 0
  %v2603 = vsel %vm1754, %v2355, 0
  %2605 = vmatprep.subr.mxu0 0.0
  %2606 = vmatpush1.msra.mxu0 0.0
  %2607 = vmatprep.subr.mxu0 0.0
  %2608 = vmatpush1.msra.mxu0 0.0
  %2609 = vmatprep.subr.mxu0 0.0
  %2610 = vmatpush1.msra.mxu0 0.0
  %2611 = vmatprep.subr.mxu0 0.0
  %2612 = vmatpush1.msra.mxu0 0.0
  %2613 = vmatprep.subr.mxu0 0.0
  %2614 = vmatpush1.msra.mxu0 0.0
  %2615 = vmatprep.subr.mxu0 0.0
  %2616 = vmatpush1.msra.mxu0 %v2603
  %2617 = vmatprep.subr.mxu0 0.0
  %2618 = vmatpush1.msra.mxu0 %v2354
  %2619 = vmatprep.subr.mxu0 0.0
  %2620 = vmatpush1.msra.mxu0 %v2353
  %2621 = vmatprep.subr.mxu0 0.0
  %2622 = vmatpush1.msra.mxu0 %v2352
  %2623 = vmatprep.subr.mxu0 0.0
  %2624 = vmatpush1.msra.mxu0 %v2351
  %2625 = vmatprep.subr.mxu0 0.0
  %2626 = vmatpush1.msra.mxu0 %v2350
  %2627 = vmatprep.subr.mxu0 0.0
  %2628 = vmatpush1.msra.mxu0 %v2349
  %2629 = vmatprep.subr.mxu0 0.0
  %2630 = vmatpush1.msra.mxu0 %v2348
  %2631 = vmatprep.subr.mxu0 0.0
  %2632 = vmatpush1.msra.mxu0 %v2347
  %2633 = vmatprep.subr.mxu0 0.0
  %2634 = vmatpush1.msra.mxu0 %v2346
  %2635 = vmatprep.subr.mxu0 0.0
  %2636 = vmatpush1.msra.mxu0 %v2345
  %2637 = vmatprep.subr.mxu0 0.0
  %2638 = vmatpush2.msra.mxu0 0.0
  %2639 = vmatprep.subr.mxu0 0.0
  %2640 = vmatpush2.msra.mxu0 0.0
  %2641 = vmatprep.subr.mxu0 0.0
  %2642 = vmatpush2.msra.mxu0 0.0
  %2643 = vmatprep.subr.mxu0 0.0
  %2644 = vmatpush2.msra.mxu0 0.0
  %2645 = vmatprep.subr.mxu0 0.0
  %2646 = vmatpush2.msra.mxu0 0.0
  %2647 = vmatprep.subr.mxu0 0.0
  %2648 = vmatpush2.msra.mxu0 0.0
  %2649 = vmatprep.subr.mxu0 0.0
  %2650 = vmatpush2.msra.mxu0 0.0
  %2651 = vmatprep.subr.mxu0 0.0
  %2652 = vmatpush2.msra.mxu0 0.0
  %2653 = vmatprep.subr.mxu0 0.0
  %2654 = vmatpush2.msra.mxu0 0.0
  %2655 = vmatprep.subr.mxu0 0.0
  %2656 = vmatpush2.msra.mxu0 0.0
  %2657 = vmatprep.subr.mxu0 0.0
  %2658 = vmatpush2.msra.mxu0 0.0
  %2659 = vmatprep.subr.mxu0 0.0
  %2660 = vmatpush2.msra.mxu0 0.0
  %2661 = vmatprep.subr.mxu0 0.0
  %2662 = vmatpush2.msra.mxu0 0.0
  %2663 = vmatprep.subr.mxu0 0.0
  %2664 = vmatpush2.msra.mxu0 0.0
  %2665 = vmatprep.subr.mxu0 0.0
  %2666 = vmatpush2.msra.mxu0 0.0
  %2667 = vmatprep.subr.mxu0 0.0
  %2668 = vmatpush2.msra.mxu0 0.0
  %2669 = vmatprep.mubr.f32.mxu0 0.0
  %2670 = vmatmul.mubr.f32.gmra.mxu0 %v2600
  %v2671 = vpop.f32.mrf.mxu0
  %v2672 = vadd.f32 %v2596, %v2671
  %v2673 = vpop.f32.mrf.mxu0
  %2674 = vdwg.mxu0
  %s2675 = scalar_lea.vmem %s5, 128
  %v2676 = vld [vmem:[%s2675] sm:$0xff]
  %v2677 = vld [vmem:[%s2675 + $0x8] sm:$0xff]
  %v2678 = vld [vmem:[%s2675 + $0x10] sm:$0xff]
  %v2679 = vld [vmem:[%s2675 + $0x18] sm:$0xff]
  %v2680 = vld [vmem:[%s2675 + $0x20] sm:$0xff]
  %v2681 = vld [vmem:[%s2675 + $0x28] sm:$0xff]
  %v2682 = vld [vmem:[%s2675 + $0x30] sm:$0xff]
  %v2683 = vld [vmem:[%s2675 + $0x38] sm:$0xff]
  %2684 = vmatprep.subr.mxu0 0.0
  %2685 = vmatpush1.msra.mxu0 0.0
  %2686 = vmatprep.subr.mxu0 0.0
  %2687 = vmatpush1.msra.mxu0 0.0
  %2688 = vmatprep.subr.mxu0 0.0
  %2689 = vmatpush1.msra.mxu0 0.0
  %2690 = vmatprep.subr.mxu0 0.0
  %2691 = vmatpush1.msra.mxu0 0.0
  %2692 = vmatprep.subr.mxu0 0.0
  %2693 = vmatpush1.msra.mxu0 0.0
  %2694 = vmatprep.subr.mxu0 0.0
  %2695 = vmatpush1.msra.mxu0 0.0
  %2696 = vmatprep.subr.mxu0 0.0
  %2697 = vmatpush1.msra.mxu0 0.0
  %2698 = vmatprep.subr.mxu0 0.0
  %2699 = vmatpush1.msra.mxu0 0.0
  %2700 = vmatprep.subr.mxu0 0.0
  %2701 = vmatpush1.msra.mxu0 %v2683
  %2702 = vmatprep.subr.mxu0 0.0
  %2703 = vmatpush1.msra.mxu0 %v2682
  %2704 = vmatprep.subr.mxu0 0.0
  %2705 = vmatpush1.msra.mxu0 %v2681
  %2706 = vmatprep.subr.mxu0 0.0
  %2707 = vmatpush1.msra.mxu0 %v2680
  %2708 = vmatprep.subr.mxu0 0.0
  %2709 = vmatpush1.msra.mxu0 %v2679
  %2710 = vmatprep.subr.mxu0 0.0
  %2711 = vmatpush1.msra.mxu0 %v2678
  %2712 = vmatprep.subr.mxu0 0.0
  %2713 = vmatpush1.msra.mxu0 %v2677
  %2714 = vmatprep.subr.mxu0 0.0
  %2715 = vmatpush1.msra.mxu0 %v2676
  %2716 = vmatprep.subr.mxu0 0.0
  %2717 = vmatpush2.msra.mxu0 0.0
  %2718 = vmatprep.subr.mxu0 0.0
  %2719 = vmatpush2.msra.mxu0 0.0
  %2720 = vmatprep.subr.mxu0 0.0
  %2721 = vmatpush2.msra.mxu0 0.0
  %2722 = vmatprep.subr.mxu0 0.0
  %2723 = vmatpush2.msra.mxu0 0.0
  %2724 = vmatprep.subr.mxu0 0.0
  %2725 = vmatpush2.msra.mxu0 0.0
  %2726 = vmatprep.subr.mxu0 0.0
  %2727 = vmatpush2.msra.mxu0 0.0
  %2728 = vmatprep.subr.mxu0 0.0
  %2729 = vmatpush2.msra.mxu0 0.0
  %2730 = vmatprep.subr.mxu0 0.0
  %2731 = vmatpush2.msra.mxu0 0.0
  %2732 = vmatprep.subr.mxu0 0.0
  %2733 = vmatpush2.msra.mxu0 0.0
  %2734 = vmatprep.subr.mxu0 0.0
  %2735 = vmatpush2.msra.mxu0 0.0
  %2736 = vmatprep.subr.mxu0 0.0
  %2737 = vmatpush2.msra.mxu0 0.0
  %2738 = vmatprep.subr.mxu0 0.0
  %2739 = vmatpush2.msra.mxu0 0.0
  %2740 = vmatprep.subr.mxu0 0.0
  %2741 = vmatpush2.msra.mxu0 0.0
  %2742 = vmatprep.subr.mxu0 0.0
  %2743 = vmatpush2.msra.mxu0 0.0
  %2744 = vmatprep.subr.mxu0 0.0
  %2745 = vmatpush2.msra.mxu0 0.0
  %2746 = vmatprep.subr.mxu0 0.0
  %2747 = vmatpush2.msra.mxu0 0.0
  %2748 = vmatprep.mubr.f32.mxu0 0.0
  %2749 = vmatmul.mubr.f32.gmra.mxu0 %v2175
  %v2750 = vpop.f32.mrf.mxu0
  %v2751 = vadd.f32 %v2171, %v2750
  %v2752 = vpop.f32.mrf.mxu0
  %2753 = vdwg.mxu0
  %v2754 = vmax.f32 %v2751, 0.0
  %v2756 = vsel %vm2270, %v2754, 0
  %2758 = vmatprep.subr.mxu0 0.0
  %2759 = vmatpush1.msra.mxu0 0.0
  %2760 = vmatprep.subr.mxu0 0.0
  %2761 = vmatpush1.msra.mxu0 %v2262
  %2762 = vmatprep.subr.mxu0 0.0
  %2763 = vmatpush1.msra.mxu0 %v2261
  %2764 = vmatprep.subr.mxu0 0.0
  %2765 = vmatpush1.msra.mxu0 %v2260
  %2766 = vmatprep.subr.mxu0 0.0
  %2767 = vmatpush1.msra.mxu0 %v2259
  %2768 = vmatprep.subr.mxu0 0.0
  %2769 = vmatpush1.msra.mxu0 %v2258
  %2770 = vmatprep.subr.mxu0 0.0
  %2771 = vmatpush1.msra.mxu0 %v2257
  %2772 = vmatprep.subr.mxu0 0.0
  %2773 = vmatpush1.msra.mxu0 %v2256
  %2774 = vmatprep.subr.mxu0 0.0
  %2775 = vmatpush1.msra.mxu0 %v2255
  %2776 = vmatprep.subr.mxu0 0.0
  %2777 = vmatpush1.msra.mxu0 %v2254
  %2778 = vmatprep.subr.mxu0 0.0
  %2779 = vmatpush1.msra.mxu0 %v2253
  %2780 = vmatprep.subr.mxu0 0.0
  %2781 = vmatpush1.msra.mxu0 %v2252
  %2782 = vmatprep.subr.mxu0 0.0
  %2783 = vmatpush1.msra.mxu0 %v2251
  %2784 = vmatprep.subr.mxu0 0.0
  %2785 = vmatpush1.msra.mxu0 %v2250
  %2786 = vmatprep.subr.mxu0 0.0
  %2787 = vmatpush1.msra.mxu0 %v2249
  %2788 = vmatprep.subr.mxu0 0.0
  %2789 = vmatpush1.msra.mxu0 %v2248
  %2790 = vmatprep.subr.mxu0 0.0
  %2791 = vmatpush2.msra.mxu0 0.0
  %2792 = vmatprep.subr.mxu0 0.0
  %2793 = vmatpush2.msra.mxu0 0.0
  %2794 = vmatprep.subr.mxu0 0.0
  %2795 = vmatpush2.msra.mxu0 0.0
  %2796 = vmatprep.subr.mxu0 0.0
  %2797 = vmatpush2.msra.mxu0 0.0
  %2798 = vmatprep.subr.mxu0 0.0
  %2799 = vmatpush2.msra.mxu0 0.0
  %2800 = vmatprep.subr.mxu0 0.0
  %2801 = vmatpush2.msra.mxu0 0.0
  %2802 = vmatprep.subr.mxu0 0.0
  %2803 = vmatpush2.msra.mxu0 0.0
  %2804 = vmatprep.subr.mxu0 0.0
  %2805 = vmatpush2.msra.mxu0 0.0
  %2806 = vmatprep.subr.mxu0 0.0
  %2807 = vmatpush2.msra.mxu0 0.0
  %2808 = vmatprep.subr.mxu0 0.0
  %2809 = vmatpush2.msra.mxu0 0.0
  %2810 = vmatprep.subr.mxu0 0.0
  %2811 = vmatpush2.msra.mxu0 0.0
  %2812 = vmatprep.subr.mxu0 0.0
  %2813 = vmatpush2.msra.mxu0 0.0
  %2814 = vmatprep.subr.mxu0 0.0
  %2815 = vmatpush2.msra.mxu0 0.0
  %2816 = vmatprep.subr.mxu0 0.0
  %2817 = vmatpush2.msra.mxu0 0.0
  %2818 = vmatprep.subr.mxu0 0.0
  %2819 = vmatpush2.msra.mxu0 0.0
  %2820 = vmatprep.subr.mxu0 0.0
  %2821 = vmatpush2.msra.mxu0 0.0
  %2822 = vmatprep.mubr.f32.mxu0 0.0
  %2823 = vmatmul.mubr.f32.gmra.mxu0 %v2756
  %v2824 = vpop.f32.mrf.mxu0
  %v2825 = vadd.f32 %v2268, %v2824
  %v2826 = vpop.f32.mrf.mxu0
  %2827 = vdwg.mxu0
  %v2828 = vmax.f32 %v2825, 0.0
  %s2829 = scalar_lea.vmem %s9, 176
  %v2830 = vld [vmem:[%s2829] sm:$0xff]
  %v2831 = vld [vmem:[%s2829 + $0x8] sm:$0xff]
  %v2832 = vld [vmem:[%s2829 + $0x10] sm:$0xff]
  %v2833 = vld [vmem:[%s2829 + $0x18] sm:$0xff]
  %v2834 = vld [vmem:[%s2829 + $0x20] sm:$0xff]
  %v2835 = vld [vmem:[%s2829 + $0x28] sm:$0xff]
  %v2836 = vld [vmem:[%s2829 + $0x30] sm:$0xff]
  %v2837 = vld [vmem:[%s2829 + $0x38] sm:$0xff]
  %v2838 = vld [vmem:[%s2829 + $0x40] sm:$0xff]
  %v2839 = vld [vmem:[%s2829 + $0x48] sm:$0xff]
  %v2840 = vld [vmem:[%s2829 + $0x50] sm:$0xf]
  %v2842 = vsel %vm2522, %v2828, 0
  %v2845 = vsel %vm1754, %v2840, 0
  %2847 = vmatprep.subr.mxu0 0.0
  %2848 = vmatpush1.msra.mxu0 0.0
  %2849 = vmatprep.subr.mxu0 0.0
  %2850 = vmatpush1.msra.mxu0 0.0
  %2851 = vmatprep.subr.mxu0 0.0
  %2852 = vmatpush1.msra.mxu0 0.0
  %2853 = vmatprep.subr.mxu0 0.0
  %2854 = vmatpush1.msra.mxu0 0.0
  %2855 = vmatprep.subr.mxu0 0.0
  %2856 = vmatpush1.msra.mxu0 0.0
  %2857 = vmatprep.subr.mxu0 0.0
  %2858 = vmatpush1.msra.mxu0 %v2845
  %2859 = vmatprep.subr.mxu0 0.0
  %2860 = vmatpush1.msra.mxu0 %v2839
  %2861 = vmatprep.subr.mxu0 0.0
  %2862 = vmatpush1.msra.mxu0 %v2838
  %2863 = vmatprep.subr.mxu0 0.0
  %2864 = vmatpush1.msra.mxu0 %v2837
  %2865 = vmatprep.subr.mxu0 0.0
  %2866 = vmatpush1.msra.mxu0 %v2836
  %2867 = vmatprep.subr.mxu0 0.0
  %2868 = vmatpush1.msra.mxu0 %v2835
  %2869 = vmatprep.subr.mxu0 0.0
  %2870 = vmatpush1.msra.mxu0 %v2834
  %2871 = vmatprep.subr.mxu0 0.0
  %2872 = vmatpush1.msra.mxu0 %v2833
  %2873 = vmatprep.subr.mxu0 0.0
  %2874 = vmatpush1.msra.mxu0 %v2832
  %2875 = vmatprep.subr.mxu0 0.0
  %2876 = vmatpush1.msra.mxu0 %v2831
  %2877 = vmatprep.subr.mxu0 0.0
  %2878 = vmatpush1.msra.mxu0 %v2830
  %2879 = vmatprep.subr.mxu0 0.0
  %2880 = vmatpush2.msra.mxu0 0.0
  %2881 = vmatprep.subr.mxu0 0.0
  %2882 = vmatpush2.msra.mxu0 0.0
  %2883 = vmatprep.subr.mxu0 0.0
  %2884 = vmatpush2.msra.mxu0 0.0
  %2885 = vmatprep.subr.mxu0 0.0
  %2886 = vmatpush2.msra.mxu0 0.0
  %2887 = vmatprep.subr.mxu0 0.0
  %2888 = vmatpush2.msra.mxu0 0.0
  %2889 = vmatprep.subr.mxu0 0.0
  %2890 = vmatpush2.msra.mxu0 0.0
  %2891 = vmatprep.subr.mxu0 0.0
  %2892 = vmatpush2.msra.mxu0 0.0
  %2893 = vmatprep.subr.mxu0 0.0
  %2894 = vmatpush2.msra.mxu0 0.0
  %2895 = vmatprep.subr.mxu0 0.0
  %2896 = vmatpush2.msra.mxu0 0.0
  %2897 = vmatprep.subr.mxu0 0.0
  %2898 = vmatpush2.msra.mxu0 0.0
  %2899 = vmatprep.subr.mxu0 0.0
  %2900 = vmatpush2.msra.mxu0 0.0
  %2901 = vmatprep.subr.mxu0 0.0
  %2902 = vmatpush2.msra.mxu0 0.0
  %2903 = vmatprep.subr.mxu0 0.0
  %2904 = vmatpush2.msra.mxu0 0.0
  %2905 = vmatprep.subr.mxu0 0.0
  %2906 = vmatpush2.msra.mxu0 0.0
  %2907 = vmatprep.subr.mxu0 0.0
  %2908 = vmatpush2.msra.mxu0 0.0
  %2909 = vmatprep.subr.mxu0 0.0
  %2910 = vmatpush2.msra.mxu0 0.0
  %2911 = vmatprep.mubr.f32.mxu0 0.0
  %2912 = vmatmul.mubr.f32.gmra.mxu0 %v2842
  %v2913 = vpop.f32.mrf.mxu0
  %v2914 = vadd.f32 0.0, %v2913
  %v2915 = vpop.f32.mrf.mxu0
  %2916 = vdwg.mxu0
  %v2917 = vadd.f32 %v2672, %v2914
  %s2918 = scalar_lea.vmem %s5, 192
  %v2919 = vld [vmem:[%s2918] sm:$0xff]
  %v2920 = vld [vmem:[%s2918 + $0x8] sm:$0xff]
  %v2921 = vld [vmem:[%s2918 + $0x10] sm:$0xff]
  %v2922 = vld [vmem:[%s2918 + $0x18] sm:$0xff]
  %v2923 = vld [vmem:[%s2918 + $0x20] sm:$0xff]
  %v2924 = vld [vmem:[%s2918 + $0x28] sm:$0xff]
  %v2925 = vld [vmem:[%s2918 + $0x30] sm:$0xff]
  %v2926 = vld [vmem:[%s2918 + $0x38] sm:$0xff]
  %2927 = vmatprep.subr.mxu0 0.0
  %2928 = vmatpush1.msra.mxu0 0.0
  %2929 = vmatprep.subr.mxu0 0.0
  %2930 = vmatpush1.msra.mxu0 0.0
  %2931 = vmatprep.subr.mxu0 0.0
  %2932 = vmatpush1.msra.mxu0 0.0
  %2933 = vmatprep.subr.mxu0 0.0
  %2934 = vmatpush1.msra.mxu0 0.0
  %2935 = vmatprep.subr.mxu0 0.0
  %2936 = vmatpush1.msra.mxu0 0.0
  %2937 = vmatprep.subr.mxu0 0.0
  %2938 = vmatpush1.msra.mxu0 0.0
  %2939 = vmatprep.subr.mxu0 0.0
  %2940 = vmatpush1.msra.mxu0 0.0
  %2941 = vmatprep.subr.mxu0 0.0
  %2942 = vmatpush1.msra.mxu0 0.0
  %2943 = vmatprep.subr.mxu0 0.0
  %2944 = vmatpush1.msra.mxu0 %v2926
  %2945 = vmatprep.subr.mxu0 0.0
  %2946 = vmatpush1.msra.mxu0 %v2925
  %2947 = vmatprep.subr.mxu0 0.0
  %2948 = vmatpush1.msra.mxu0 %v2924
  %2949 = vmatprep.subr.mxu0 0.0
  %2950 = vmatpush1.msra.mxu0 %v2923
  %2951 = vmatprep.subr.mxu0 0.0
  %2952 = vmatpush1.msra.mxu0 %v2922
  %2953 = vmatprep.subr.mxu0 0.0
  %2954 = vmatpush1.msra.mxu0 %v2921
  %2955 = vmatprep.subr.mxu0 0.0
  %2956 = vmatpush1.msra.mxu0 %v2920
  %2957 = vmatprep.subr.mxu0 0.0
  %2958 = vmatpush1.msra.mxu0 %v2919
  %2959 = vmatprep.subr.mxu0 0.0
  %2960 = vmatpush2.msra.mxu0 0.0
  %2961 = vmatprep.subr.mxu0 0.0
  %2962 = vmatpush2.msra.mxu0 0.0
  %2963 = vmatprep.subr.mxu0 0.0
  %2964 = vmatpush2.msra.mxu0 0.0
  %2965 = vmatprep.subr.mxu0 0.0
  %2966 = vmatpush2.msra.mxu0 0.0
  %2967 = vmatprep.subr.mxu0 0.0
  %2968 = vmatpush2.msra.mxu0 0.0
  %2969 = vmatprep.subr.mxu0 0.0
  %2970 = vmatpush2.msra.mxu0 0.0
  %2971 = vmatprep.subr.mxu0 0.0
  %2972 = vmatpush2.msra.mxu0 0.0
  %2973 = vmatprep.subr.mxu0 0.0
  %2974 = vmatpush2.msra.mxu0 0.0
  %2975 = vmatprep.subr.mxu0 0.0
  %2976 = vmatpush2.msra.mxu0 0.0
  %2977 = vmatprep.subr.mxu0 0.0
  %2978 = vmatpush2.msra.mxu0 0.0
  %2979 = vmatprep.subr.mxu0 0.0
  %2980 = vmatpush2.msra.mxu0 0.0
  %2981 = vmatprep.subr.mxu0 0.0
  %2982 = vmatpush2.msra.mxu0 0.0
  %2983 = vmatprep.subr.mxu0 0.0
  %2984 = vmatpush2.msra.mxu0 0.0
  %2985 = vmatprep.subr.mxu0 0.0
  %2986 = vmatpush2.msra.mxu0 0.0
  %2987 = vmatprep.subr.mxu0 0.0
  %2988 = vmatpush2.msra.mxu0 0.0
  %2989 = vmatprep.subr.mxu0 0.0
  %2990 = vmatpush2.msra.mxu0 0.0
  %2991 = vmatprep.mubr.f32.mxu0 0.0
  %2992 = vmatmul.mubr.f32.gmra.mxu0 %v2175
  %v2993 = vpop.f32.mrf.mxu0
  %v2994 = vadd.f32 %v2171, %v2993
  %v2995 = vpop.f32.mrf.mxu0
  %2996 = vdwg.mxu0
  %v2997 = vmax.f32 %v2994, 0.0
  %v2999 = vsel %vm2270, %v2997, 0
  %3001 = vmatprep.subr.mxu0 0.0
  %3002 = vmatpush1.msra.mxu0 0.0
  %3003 = vmatprep.subr.mxu0 0.0
  %3004 = vmatpush1.msra.mxu0 %v2262
  %3005 = vmatprep.subr.mxu0 0.0
  %3006 = vmatpush1.msra.mxu0 %v2261
  %3007 = vmatprep.subr.mxu0 0.0
  %3008 = vmatpush1.msra.mxu0 %v2260
  %3009 = vmatprep.subr.mxu0 0.0
  %3010 = vmatpush1.msra.mxu0 %v2259
  %3011 = vmatprep.subr.mxu0 0.0
  %3012 = vmatpush1.msra.mxu0 %v2258
  %3013 = vmatprep.subr.mxu0 0.0
  %3014 = vmatpush1.msra.mxu0 %v2257
  %3015 = vmatprep.subr.mxu0 0.0
  %3016 = vmatpush1.msra.mxu0 %v2256
  %3017 = vmatprep.subr.mxu0 0.0
  %3018 = vmatpush1.msra.mxu0 %v2255
  %3019 = vmatprep.subr.mxu0 0.0
  %3020 = vmatpush1.msra.mxu0 %v2254
  %3021 = vmatprep.subr.mxu0 0.0
  %3022 = vmatpush1.msra.mxu0 %v2253
  %3023 = vmatprep.subr.mxu0 0.0
  %3024 = vmatpush1.msra.mxu0 %v2252
  %3025 = vmatprep.subr.mxu0 0.0
  %3026 = vmatpush1.msra.mxu0 %v2251
  %3027 = vmatprep.subr.mxu0 0.0
  %3028 = vmatpush1.msra.mxu0 %v2250
  %3029 = vmatprep.subr.mxu0 0.0
  %3030 = vmatpush1.msra.mxu0 %v2249
  %3031 = vmatprep.subr.mxu0 0.0
  %3032 = vmatpush1.msra.mxu0 %v2248
  %3033 = vmatprep.subr.mxu0 0.0
  %3034 = vmatpush2.msra.mxu0 0.0
  %3035 = vmatprep.subr.mxu0 0.0
  %3036 = vmatpush2.msra.mxu0 0.0
  %3037 = vmatprep.subr.mxu0 0.0
  %3038 = vmatpush2.msra.mxu0 0.0
  %3039 = vmatprep.subr.mxu0 0.0
  %3040 = vmatpush2.msra.mxu0 0.0
  %3041 = vmatprep.subr.mxu0 0.0
  %3042 = vmatpush2.msra.mxu0 0.0
  %3043 = vmatprep.subr.mxu0 0.0
  %3044 = vmatpush2.msra.mxu0 0.0
  %3045 = vmatprep.subr.mxu0 0.0
  %3046 = vmatpush2.msra.mxu0 0.0
  %3047 = vmatprep.subr.mxu0 0.0
  %3048 = vmatpush2.msra.mxu0 0.0
  %3049 = vmatprep.subr.mxu0 0.0
  %3050 = vmatpush2.msra.mxu0 0.0
  %3051 = vmatprep.subr.mxu0 0.0
  %3052 = vmatpush2.msra.mxu0 0.0
  %3053 = vmatprep.subr.mxu0 0.0
  %3054 = vmatpush2.msra.mxu0 0.0
  %3055 = vmatprep.subr.mxu0 0.0
  %3056 = vmatpush2.msra.mxu0 0.0
  %3057 = vmatprep.subr.mxu0 0.0
  %3058 = vmatpush2.msra.mxu0 0.0
  %3059 = vmatprep.subr.mxu0 0.0
  %3060 = vmatpush2.msra.mxu0 0.0
  %3061 = vmatprep.subr.mxu0 0.0
  %3062 = vmatpush2.msra.mxu0 0.0
  %3063 = vmatprep.subr.mxu0 0.0
  %3064 = vmatpush2.msra.mxu0 0.0
  %3065 = vmatprep.mubr.f32.mxu0 0.0
  %3066 = vmatmul.mubr.f32.gmra.mxu0 %v2999
  %v3067 = vpop.f32.mrf.mxu0
  %v3068 = vadd.f32 %v2268, %v3067
  %v3069 = vpop.f32.mrf.mxu0
  %3070 = vdwg.mxu0
  %v3071 = vmax.f32 %v3068, 0.0
  %s3072 = scalar_lea.vmem %s9, 264
  %v3073 = vld [vmem:[%s3072] sm:$0xff]
  %v3074 = vld [vmem:[%s3072 + $0x8] sm:$0xff]
  %v3075 = vld [vmem:[%s3072 + $0x10] sm:$0xff]
  %v3076 = vld [vmem:[%s3072 + $0x18] sm:$0xff]
  %v3077 = vld [vmem:[%s3072 + $0x20] sm:$0xff]
  %v3078 = vld [vmem:[%s3072 + $0x28] sm:$0xff]
  %v3079 = vld [vmem:[%s3072 + $0x30] sm:$0xff]
  %v3080 = vld [vmem:[%s3072 + $0x38] sm:$0xff]
  %v3081 = vld [vmem:[%s3072 + $0x40] sm:$0xff]
  %v3082 = vld [vmem:[%s3072 + $0x48] sm:$0xff]
  %v3083 = vld [vmem:[%s3072 + $0x50] sm:$0xf]
  %v3085 = vsel %vm2522, %v3071, 0
  %v3088 = vsel %vm1754, %v3083, 0
  %3090 = vmatprep.subr.mxu0 0.0
  %3091 = vmatpush1.msra.mxu0 0.0
  %3092 = vmatprep.subr.mxu0 0.0
  %3093 = vmatpush1.msra.mxu0 0.0
  %3094 = vmatprep.subr.mxu0 0.0
  %3095 = vmatpush1.msra.mxu0 0.0
  %3096 = vmatprep.subr.mxu0 0.0
  %3097 = vmatpush1.msra.mxu0 0.0
  %3098 = vmatprep.subr.mxu0 0.0
  %3099 = vmatpush1.msra.mxu0 0.0
  %3100 = vmatprep.subr.mxu0 0.0
  %3101 = vmatpush1.msra.mxu0 %v3088
  %3102 = vmatprep.subr.mxu0 0.0
  %3103 = vmatpush1.msra.mxu0 %v3082
  %3104 = vmatprep.subr.mxu0 0.0
  %3105 = vmatpush1.msra.mxu0 %v3081
  %3106 = vmatprep.subr.mxu0 0.0
  %3107 = vmatpush1.msra.mxu0 %v3080
  %3108 = vmatprep.subr.mxu0 0.0
  %3109 = vmatpush1.msra.mxu0 %v3079
  %3110 = vmatprep.subr.mxu0 0.0
  %3111 = vmatpush1.msra.mxu0 %v3078
  %3112 = vmatprep.subr.mxu0 0.0
  %3113 = vmatpush1.msra.mxu0 %v3077
  %3114 = vmatprep.subr.mxu0 0.0
  %3115 = vmatpush1.msra.mxu0 %v3076
  %3116 = vmatprep.subr.mxu0 0.0
  %3117 = vmatpush1.msra.mxu0 %v3075
  %3118 = vmatprep.subr.mxu0 0.0
  %3119 = vmatpush1.msra.mxu0 %v3074
  %3120 = vmatprep.subr.mxu0 0.0
  %3121 = vmatpush1.msra.mxu0 %v3073
  %3122 = vmatprep.subr.mxu0 0.0
  %3123 = vmatpush2.msra.mxu0 0.0
  %3124 = vmatprep.subr.mxu0 0.0
  %3125 = vmatpush2.msra.mxu0 0.0
  %3126 = vmatprep.subr.mxu0 0.0
  %3127 = vmatpush2.msra.mxu0 0.0
  %3128 = vmatprep.subr.mxu0 0.0
  %3129 = vmatpush2.msra.mxu0 0.0
  %3130 = vmatprep.subr.mxu0 0.0
  %3131 = vmatpush2.msra.mxu0 0.0
  %3132 = vmatprep.subr.mxu0 0.0
  %3133 = vmatpush2.msra.mxu0 0.0
  %3134 = vmatprep.subr.mxu0 0.0
  %3135 = vmatpush2.msra.mxu0 0.0
  %3136 = vmatprep.subr.mxu0 0.0
  %3137 = vmatpush2.msra.mxu0 0.0
  %3138 = vmatprep.subr.mxu0 0.0
  %3139 = vmatpush2.msra.mxu0 0.0
  %3140 = vmatprep.subr.mxu0 0.0
  %3141 = vmatpush2.msra.mxu0 0.0
  %3142 = vmatprep.subr.mxu0 0.0
  %3143 = vmatpush2.msra.mxu0 0.0
  %3144 = vmatprep.subr.mxu0 0.0
  %3145 = vmatpush2.msra.mxu0 0.0
  %3146 = vmatprep.subr.mxu0 0.0
  %3147 = vmatpush2.msra.mxu0 0.0
  %3148 = vmatprep.subr.mxu0 0.0
  %3149 = vmatpush2.msra.mxu0 0.0
  %3150 = vmatprep.subr.mxu0 0.0
  %3151 = vmatpush2.msra.mxu0 0.0
  %3152 = vmatprep.subr.mxu0 0.0
  %3153 = vmatpush2.msra.mxu0 0.0
  %3154 = vmatprep.mubr.f32.mxu0 0.0
  %3155 = vmatmul.mubr.f32.gmra.mxu0 %v3085
  %v3156 = vpop.f32.mrf.mxu0
  %v3157 = vadd.f32 0.0, %v3156
  %v3158 = vpop.f32.mrf.mxu0
  %3159 = vdwg.mxu0
  %v3160 = vadd.f32 %v2917, %v3157
  %v3161 = vld [vmem:[%s10] sm:$0x1]
  %v3163 = vlaneseq
  %v3164 = vshrl.u32 %v3163, 7
  %v3165 = vsub.s32 0, %v3164
  %v3166 = vrot.slane %v3161, %v3165
  %v3168 = vadd.f32 %v3160, %v3166
  %3169 = vst [vmem:[%s11] sm:$0x3] %v3168
  // Predicated region
  $region46: #{cnn_forward.1} parent=0 // pred_check
    _
  $region47: #{cnn_forward.1} parent=0 // pred_check_branch
    %3171 = sbr.rel (0) target = $region49
  $region48: #{cnn_forward.1} parent=0 // pred_region
    _
  $region49: #{cnn_forward.1} parent=0 // pred_fallthru
    _
  // Predicated region
  $region50: #{cnn_forward.1} parent=0 // pred_check
    _
  $region51: #{cnn_forward.1} parent=0 // pred_check_branch
    %3173 = sbr.rel (0) target = $region53
  $region52: #{cnn_forward.1} parent=0 // pred_region
    _
  $region53: #{cnn_forward.1} parent=0 // pred_fallthru
    _

</llo_original>
